<compile_context>
chip_gen: v5e
topology: v5e:2x2
jax: 0.10.0
libtpu: 0.0.40
codegen_flags: <defaults>
</compile_context>

<pallas_src>
import math

import jax
import jax.numpy as jnp
from jax.experimental import pallas as pl
from jax.experimental.pallas import tpu as pltpu

# ----- model hyper-parameters (consistent with the module defaults) ----------
B = 2                       # batch
F = 16                      # input_size (x.view(B, -1))
H = 128                     # hidden_size
H2, H4, H8 = H // 2, H // 4, H // 8          # 64, 32, 16
E, E2, E4 = H8, H8 // 2, H8 // 4             # attention dim 16, metric dims 8, 4
C = 3                       # num_classes
T = 8                       # time_steps
BP = 8                      # batch padded to one full (8,128) sublane tile
LANES = 128
LIF_RHO = 0.9               # adaptation-trace decay (constant)
SQRT_2 = math.sqrt(2.0)
BIG = 1e30                  # threshold padding -> padded lanes never spike

# ----- vector-slab row indices ------------------------------------------------
(FE1_B, FE_LN1_G, FE_LN1_B,
 RB_B1, RB_LN_G, RB_LN_B, RB_B2,
 FE2_B, FE_LN2_G, FE_LN2_B,
 L1_BETA, L1_THR, L1_AD,
 S1_B, S1_LN_G, S1_LN_B,
 L2_BETA, L2_THR, L2_AD,
 S2_B, S2_LN_G, S2_LN_B,
 ATT_BV, ATT_BO,
 M1_B, M_LN_G, M_LN_B,
 M2_B, CLS_B) = range(29)
NV = 32                      # rows, padded to a multiple of 8

# ----- weight-slab indices ----------------------------------------------------
(W_FE1, W_RB1, W_RB2, W_FE2, W_S1, W_S2,
 W_ATTV, W_ATTO, W_M1, W_M2, W_CLS) = range(11)
NW = 11


# ----------------------------- in-kernel helpers ------------------------------
def _erf(z):
    # Abramowitz & Stegun 7.1.26 (|err| < 1.5e-7): reproduces nn.GELU()'s exact-erf
    # formulation to f32 precision using only VPU ops + one exp. After the
    # feature-extractor hoist the GELU work is tiny, so this costs ~nothing.
    a1, a2, a3, a4, a5 = 0.254829592, -0.284496736, 1.421413741, -1.453152027, 1.061405429
    p = 0.3275911
    sgn = jnp.where(z >= 0.0, 1.0, -1.0)
    az = jnp.abs(z)
    t = 1.0 / (1.0 + p * az)
    poly = ((((a5 * t + a4) * t + a3) * t + a2) * t + a1) * t
    return sgn * (1.0 - poly * jnp.exp(-az * az))


def _gelu(x):
    # PyTorch nn.GELU() default = exact erf formulation.
    return 0.5 * x * (1.0 + _erf(x / SQRT_2))


# --------------------------------- kernel -------------------------------------
def snn_kernel(x_ref, vec_ref, w_ref, out_ref):
    x = x_ref[...]                                   # (BP,128); rows>=B / lanes>=F are zero

    def vrow(i):                                     # one packed (1,128) parameter row
        return vec_ref[i:i + 1, :]

    def linear(h, wi, bi):                           # h @ W + b on zero-padded tiles
        return jnp.dot(h, w_ref[wi], preferred_element_type=jnp.float32) + vrow(bi)

    # lane masks for the sub-128-wide LayerNorms (hoisted: built once, reused)
    lane = jax.lax.broadcasted_iota(jnp.int32, (1, LANES), 1)
    mask64 = (lane < H2).astype(jnp.float32)
    mask32 = (lane < H4).astype(jnp.float32)
    mask16 = (lane < H8).astype(jnp.float32)
    mask8 = (lane < E2).astype(jnp.float32)

    def layernorm(h, d, gi, bi, mask=None, eps=1e-5):
        # h is zero outside lanes [0, d); gamma/beta rows are zero-padded, so the
        # output stays zero-padded too.
        mu = jnp.sum(h, axis=-1, keepdims=True) * (1.0 / d)
        diff = h - mu
        if mask is not None:
            diff = diff * mask
        var = jnp.sum(diff * diff, axis=-1, keepdims=True) * (1.0 / d)
        return diff * jax.lax.rsqrt(var + eps) * vrow(gi) + vrow(bi)

    # ---- feature_extractor: Linear->LN->GELU->ResidualBlock->Linear->LN->GELU.
    # TemporalEncoder is assumed to be direct/repeat coding (same input every
    # step), so this stage is time-invariant and runs exactly once.
    # TODO(synk): revisit if the real TemporalEncoder is not a repeat encoder.
    h1 = _gelu(layernorm(linear(x, W_FE1, FE1_B), H, FE_LN1_G, FE_LN1_B))
    r = _gelu(layernorm(linear(h1, W_RB1, RB_B1), H, RB_LN_G, RB_LN_B))
    h2 = h1 + linear(r, W_RB2, RB_B2)                # Dropout(0.1) is identity in eval
    feats = _gelu(layernorm(linear(h2, W_FE2, FE2_B), H2, FE_LN2_G, FE_LN2_B, mask64))

    # ---- snn_layers: (AdaptiveLIF -> Linear -> LayerNorm) x 2, fused with the
    # time-mean into a single unrolled loop. State lives in registers; no
    # time-sliced arrays / concatenates are ever materialized.
    # TODO(synk): AdaptiveLIFLayer source not provided; standard adaptive-threshold
    # LIF (leaky integration, soft reset, adaptation trace raising the threshold).
    beta1, thr1, ad1 = vrow(L1_BETA), vrow(L1_THR), vrow(L1_AD)
    beta2, thr2, ad2 = vrow(L2_BETA), vrow(L2_THR), vrow(L2_AD)

    zero = jnp.zeros((BP, LANES), jnp.float32)
    v1, a1, v2, a2, acc = zero, zero, zero, zero, zero
    for _ in range(T):                               # static unroll (T = 8)
        # adaptive-LIF step, layer 1 (input = feats every step: repeat coding)
        v1 = beta1 * v1 + feats
        th1 = thr1 + ad1 * a1
        s1 = (v1 >= th1).astype(jnp.float32)
        v1 = v1 - s1 * th1
        a1 = LIF_RHO * a1 + s1
        # Linear(H2 -> H4) + LayerNorm
        y1 = layernorm(linear(s1, W_S1, S1_B), H4, S1_LN_G, S1_LN_B, mask32)
        # adaptive-LIF step, layer 2
        v2 = beta2 * v2 + y1
        th2 = thr2 + ad2 * a2
        s2 = (v2 >= th2).astype(jnp.float32)
        v2 = v2 - s2 * th2
        a2 = LIF_RHO * a2 + s2
        # Linear(H4 -> H8) + LayerNorm, accumulated straight into the time mean
        acc = acc + layernorm(linear(s2, W_S2, S2_B), H8, S2_LN_G, S2_LN_B, mask16)
    spike_mean = acc * (1.0 / T)                     # spikes.mean(dim=1), (BP,128) real 16

    # ---- nn.MultiheadAttention with a single token: softmax over one key is 1,
    # so q/k projections cancel and attn_output = out_proj(v_proj(x)) (eval mode).
    attn = linear(linear(spike_mean, W_ATTV, ATT_BV), W_ATTO, ATT_BO)

    # ---- metric_layer + classifier
    m = _gelu(layernorm(linear(attn, W_M1, M1_B), E2, M_LN_G, M_LN_B, mask8))
    emb = linear(m, W_M2, M2_B)                      # real width 4
    logits = linear(emb, W_CLS, CLS_B)               # real width 3

    # single lane-dense output slab: [0]=spike_mean, [1]=embeddings, [2]=logits
    out_ref[0] = spike_mean
    out_ref[1] = emb
    out_ref[2] = logits


# ------------------------------ parameter init --------------------------------
def init_params(key):
    """PyTorch-default-like init, returned pre-packed into the two VMEM slabs."""
    keys = iter(jax.random.split(key, 16))

    def linear(k, fi, fo):
        kw, kb = jax.random.split(k)
        bound = 1.0 / math.sqrt(fi)
        w = jax.random.uniform(kw, (fi, fo), jnp.float32, -bound, bound)
        b = jax.random.uniform(kb, (fo,), jnp.float32, -bound, bound)
        return w, b

    fe1_w, fe1_b = linear(next(keys), F, H)
    rb_w1, rb_b1 = linear(next(keys), H, H)
    rb_w2, rb_b2 = linear(next(keys), H, H)
    fe2_w, fe2_b = linear(next(keys), H, H2)
    s1_w, s1_b = linear(next(keys), H2, H4)
    s2_w, s2_b = linear(next(keys), H4, H8)
    attn_wv, attn_bv = linear(next(keys), E, E)
    attn_wo, attn_bo = linear(next(keys), E, E)
    m1_w, m1_b = linear(next(keys), E, E2)
    m2_w, m2_b = linear(next(keys), E2, E4)
    cls_w, cls_b = linear(next(keys), E4, C)

    ones = lambda d: jnp.ones((d,), jnp.float32)
    zeros = lambda d: jnp.zeros((d,), jnp.float32)
    full = lambda d, v: jnp.full((d,), v, jnp.float32)

    vec_rows = {
        FE1_B: fe1_b, FE_LN1_G: ones(H), FE_LN1_B: zeros(H),
        RB_B1: rb_b1, RB_LN_G: ones(H), RB_LN_B: zeros(H), RB_B2: rb_b2,
        FE2_B: fe2_b, FE_LN2_G: ones(H2), FE_LN2_B: zeros(H2),
        L1_BETA: full(H2, 0.9), L1_THR: full(H2, 0.5), L1_AD: full(H2, 0.1),
        S1_B: s1_b, S1_LN_G: ones(H4), S1_LN_B: zeros(H4),
        L2_BETA: full(H4, 0.9), L2_THR: full(H4, 0.5), L2_AD: full(H4, 0.1),
        S2_B: s2_b, S2_LN_G: ones(H8), S2_LN_B: zeros(H8),
        ATT_BV: attn_bv, ATT_BO: attn_bo,
        M1_B: m1_b, M_LN_G: ones(E2), M_LN_B: zeros(E2),
        M2_B: m2_b, CLS_B: cls_b,
    }
    vec = jnp.zeros((NV, LANES), jnp.float32)
    # LIF thresholds: padded lanes get a huge threshold so they can never spike.
    vec = vec.at[L1_THR, :].set(BIG)
    vec = vec.at[L2_THR, :].set(BIG)
    for row, val in vec_rows.items():
        vec = vec.at[row, : val.shape[0]].set(val)

    w_map = {
        W_FE1: fe1_w, W_RB1: rb_w1, W_RB2: rb_w2, W_FE2: fe2_w,
        W_S1: s1_w, W_S2: s2_w, W_ATTV: attn_wv, W_ATTO: attn_wo,
        W_M1: m1_w, W_M2: m2_w, W_CLS: cls_w,
    }
    wslab = jnp.zeros((NW, LANES, LANES), jnp.float32)
    for idx, w in w_map.items():
        fi, fo = w.shape
        wslab = wslab.at[idx, :fi, :fo].set(w)

    return vec, wslab


# --------------------------------- wrapper -------------------------------------
@jax.jit
def snn_forward(x, vec_slab, w_slab):
    # Pad the flattened input to one full (8,128) tile; only x itself crosses the
    # kernel boundary (no materialized (T*B,F) temporal replication).
    x_pad = jnp.zeros((BP, LANES), jnp.float32).at[:B, :F].set(x.astype(jnp.float32))

    vmem = pl.BlockSpec(memory_space=pltpu.MemorySpace.VMEM)
    out = pl.pallas_call(
        snn_kernel,
        out_shape=jax.ShapeDtypeStruct((3, BP, LANES), jnp.float32),
        in_specs=[vmem, vmem, vmem],
        out_specs=vmem,
    )(x_pad, vec_slab, w_slab)

    spike_out = out[0, :B, :E]
    embeddings = out[1, :B, :E4]
    logits = out[2, :B, :C]
    return embeddings, logits, spike_out


if __name__ == "__main__":
    key = jax.random.PRNGKey(0)
    kx, kp = jax.random.split(key)
    x = jax.random.normal(kx, (B, F), dtype=jnp.float32)   # x1 -> view(B, -1) = (2, 16)
    vec_slab, w_slab = init_params(kp)

    embeddings, logits, spike_out = snn_forward(x, vec_slab, w_slab)
    jax.block_until_ready((embeddings, logits, spike_out))

    assert embeddings.shape == (B, E4)
    assert logits.shape == (B, C)
    assert spike_out.shape == (B, E)
    print("KERNEL_OK")
</pallas_src>

<mosaic_0001>
module attributes {stable_mosaic.version = 11 : i64} {
  func.func @snn_kernel(%arg0: memref<8x128xf32, #tpu.memory_space<vmem>>, %arg1: memref<32x128xf32, #tpu.memory_space<vmem>>, %arg2: memref<11x128x128xf32, #tpu.memory_space<vmem>>, %arg3: memref<3x8x128xf32, #tpu.memory_space<vmem>>) attributes {dimension_semantics = [], scalar_prefetch = 0 : i64, scratch_operands = 0 : i64, tpu.core_type = #tpu.core_type<tc>} {
    %c0 = arith.constant 0 : index
    %c0_0 = arith.constant 0 : index
    %0 = vector.load %arg0[%c0, %c0_0] : memref<8x128xf32, #tpu.memory_space<vmem>>, vector<8x128xf32>
    %1 = tpu.iota {dimensions = array<i32: 1>} : vector<1x128xi32>
    %c64_i32 = arith.constant 64 : i32
    %2 = vector.broadcast %c64_i32 : i32 to vector<1x128xi32>
    %3 = arith.cmpi slt, %1, %2 : vector<1x128xi32>
    %4 = arith.extui %3 : vector<1x128xi1> to vector<1x128xi32>
    %5 = arith.sitofp %4 : vector<1x128xi32> to vector<1x128xf32>
    %c32_i32 = arith.constant 32 : i32
    %6 = vector.broadcast %c32_i32 : i32 to vector<1x128xi32>
    %7 = arith.cmpi slt, %1, %6 : vector<1x128xi32>
    %8 = arith.extui %7 : vector<1x128xi1> to vector<1x128xi32>
    %9 = arith.sitofp %8 : vector<1x128xi32> to vector<1x128xf32>
    %c16_i32 = arith.constant 16 : i32
    %10 = vector.broadcast %c16_i32 : i32 to vector<1x128xi32>
    %11 = arith.cmpi slt, %1, %10 : vector<1x128xi32>
    %12 = arith.extui %11 : vector<1x128xi1> to vector<1x128xi32>
    %13 = arith.sitofp %12 : vector<1x128xi32> to vector<1x128xf32>
    %c8_i32 = arith.constant 8 : i32
    %14 = vector.broadcast %c8_i32 : i32 to vector<1x128xi32>
    %15 = arith.cmpi slt, %1, %14 : vector<1x128xi32>
    %16 = arith.extui %15 : vector<1x128xi1> to vector<1x128xi32>
    %17 = arith.sitofp %16 : vector<1x128xi32> to vector<1x128xf32>
    %c0_1 = arith.constant 0 : index
    %c0_2 = arith.constant 0 : index
    %c0_3 = arith.constant 0 : index
    %18 = vector.load %arg2[%c0_1, %c0_2, %c0_3] : memref<11x128x128xf32, #tpu.memory_space<vmem>>, vector<1x128x128xf32>
    %19 = vector.shape_cast %18 : vector<1x128x128xf32> to vector<128x128xf32>
    %cst = arith.constant dense<0.000000e+00> : vector<8x128xf32>
    %20 = tpu.matmul %0, %19, %cst {dimension_numbers = #tpu.dot_dimension_numbers<[1], [0], [0], [1], [0, 0, 1, 1], [], []>} : vector<8x128xf32>, vector<128x128xf32>, vector<8x128xf32> -> vector<8x128xf32>
    %c0_4 = arith.constant 0 : index
    %c0_5 = arith.constant 0 : index
    %21 = vector.load %arg1[%c0_4, %c0_5] : memref<32x128xf32, #tpu.memory_space<vmem>>, vector<1x128xf32>
    %22 = vector.broadcast %21 : vector<1x128xf32> to vector<8x128xf32>
    %23 = arith.addf %20, %22 : vector<8x128xf32>
    %cst_6 = arith.constant dense<0.000000e+00> : vector<8xf32>
    %24 = vector.multi_reduction <add>, %23, %cst_6 [1] : vector<8x128xf32> to vector<8xf32>
    %25 = vector.shape_cast %24 : vector<8xf32> to vector<8x1xf32>
    %cst_7 = arith.constant 7.812500e-03 : f32
    %26 = vector.broadcast %cst_7 : f32 to vector<8x1xf32>
    %27 = arith.mulf %25, %26 : vector<8x1xf32>
    %28 = vector.broadcast %27 : vector<8x1xf32> to vector<8x128xf32>
    %29 = arith.subf %23, %28 : vector<8x128xf32>
    %30 = arith.mulf %29, %29 : vector<8x128xf32>
    %cst_8 = arith.constant dense<0.000000e+00> : vector<8xf32>
    %31 = vector.multi_reduction <add>, %30, %cst_8 [1] : vector<8x128xf32> to vector<8xf32>
    %32 = vector.shape_cast %31 : vector<8xf32> to vector<8x1xf32>
    %cst_9 = arith.constant 7.812500e-03 : f32
    %33 = vector.broadcast %cst_9 : f32 to vector<8x1xf32>
    %34 = arith.mulf %32, %33 : vector<8x1xf32>
    %cst_10 = arith.constant 9.99999974E-6 : f32
    %35 = vector.broadcast %cst_10 : f32 to vector<8x1xf32>
    %36 = arith.addf %34, %35 : vector<8x1xf32>
    %37 = math.rsqrt %36 : vector<8x1xf32>
    %38 = vector.broadcast %37 : vector<8x1xf32> to vector<8x128xf32>
    %39 = arith.mulf %29, %38 : vector<8x128xf32>
    %c1 = arith.constant 1 : index
    %c0_11 = arith.constant 0 : index
    %40 = vector.load %arg1[%c1, %c0_11] : memref<32x128xf32, #tpu.memory_space<vmem>>, vector<1x128xf32>
    %41 = vector.broadcast %40 : vector<1x128xf32> to vector<8x128xf32>
    %42 = arith.mulf %39, %41 : vector<8x128xf32>
    %c2 = arith.constant 2 : index
    %c0_12 = arith.constant 0 : index
    %43 = vector.load %arg1[%c2, %c0_12] : memref<32x128xf32, #tpu.memory_space<vmem>>, vector<1x128xf32>
    %44 = vector.broadcast %43 : vector<1x128xf32> to vector<8x128xf32>
    %45 = arith.addf %42, %44 : vector<8x128xf32>
    %cst_13 = arith.constant 5.000000e-01 : f32
    %46 = vector.broadcast %cst_13 : f32 to vector<8x128xf32>
    %47 = arith.mulf %46, %45 : vector<8x128xf32>
    %cst_14 = arith.constant 1.41421354 : f32
    %48 = vector.broadcast %cst_14 : f32 to vector<8x128xf32>
    %49 = arith.divf %45, %48 : vector<8x128xf32>
    %cst_15 = arith.constant 0.000000e+00 : f32
    %50 = vector.broadcast %cst_15 : f32 to vector<8x128xf32>
    %51 = arith.cmpf oge, %49, %50 : vector<8x128xf32>
    %cst_16 = arith.constant 1.000000e+00 : f32
    %cst_17 = arith.constant -1.000000e+00 : f32
    %52 = vector.broadcast %cst_16 : f32 to vector<8x128xf32>
    %53 = vector.broadcast %cst_17 : f32 to vector<8x128xf32>
    %54 = arith.select %51, %52, %53 : vector<8x128xi1>, vector<8x128xf32>
    %55 = math.absf %49 : vector<8x128xf32>
    %cst_18 = arith.constant 0.327591091 : f32
    %56 = vector.broadcast %cst_18 : f32 to vector<8x128xf32>
    %57 = arith.mulf %56, %55 : vector<8x128xf32>
    %cst_19 = arith.constant 1.000000e+00 : f32
    %58 = vector.broadcast %cst_19 : f32 to vector<8x128xf32>
    %59 = arith.addf %58, %57 : vector<8x128xf32>
    %cst_20 = arith.constant 1.000000e+00 : f32
    %60 = vector.broadcast %cst_20 : f32 to vector<8x128xf32>
    %61 = arith.divf %60, %59 : vector<8x128xf32>
    %cst_21 = arith.constant 1.06140542 : f32
    %62 = vector.broadcast %cst_21 : f32 to vector<8x128xf32>
    %63 = arith.mulf %62, %61 : vector<8x128xf32>
    %cst_22 = arith.constant -1.45315206 : f32
    %64 = vector.broadcast %cst_22 : f32 to vector<8x128xf32>
    %65 = arith.addf %63, %64 : vector<8x128xf32>
    %66 = arith.mulf %65, %61 : vector<8x128xf32>
    %cst_23 = arith.constant 1.42141378 : f32
    %67 = vector.broadcast %cst_23 : f32 to vector<8x128xf32>
    %68 = arith.addf %66, %67 : vector<8x128xf32>
    %69 = arith.mulf %68, %61 : vector<8x128xf32>
    %cst_24 = arith.constant -0.284496725 : f32
    %70 = vector.broadcast %cst_24 : f32 to vector<8x128xf32>
    %71 = arith.addf %69, %70 : vector<8x128xf32>
    %72 = arith.mulf %71, %61 : vector<8x128xf32>
    %cst_25 = arith.constant 0.254829586 : f32
    %73 = vector.broadcast %cst_25 : f32 to vector<8x128xf32>
    %74 = arith.addf %72, %73 : vector<8x128xf32>
    %75 = arith.mulf %74, %61 : vector<8x128xf32>
    %cst_26 = arith.constant 0.000000e+00 : f32
    %76 = vector.broadcast %cst_26 : f32 to vector<8x128xf32>
    %77 = arith.subf %76, %55 : vector<8x128xf32>
    %78 = arith.mulf %77, %55 : vector<8x128xf32>
    %79 = math.exp %78 : vector<8x128xf32>
    %80 = arith.mulf %75, %79 : vector<8x128xf32>
    %cst_27 = arith.constant 1.000000e+00 : f32
    %81 = vector.broadcast %cst_27 : f32 to vector<8x128xf32>
    %82 = arith.subf %81, %80 : vector<8x128xf32>
    %83 = arith.mulf %54, %82 : vector<8x128xf32>
    %cst_28 = arith.constant 1.000000e+00 : f32
    %84 = vector.broadcast %cst_28 : f32 to vector<8x128xf32>
    %85 = arith.addf %84, %83 : vector<8x128xf32>
    %86 = arith.mulf %47, %85 : vector<8x128xf32>
    %c1_29 = arith.constant 1 : index
    %c0_30 = arith.constant 0 : index
    %c0_31 = arith.constant 0 : index
    %87 = vector.load %arg2[%c1_29, %c0_30, %c0_31] : memref<11x128x128xf32, #tpu.memory_space<vmem>>, vector<1x128x128xf32>
    %88 = vector.shape_cast %87 : vector<1x128x128xf32> to vector<128x128xf32>
    %cst_32 = arith.constant dense<0.000000e+00> : vector<8x128xf32>
    %89 = tpu.matmul %86, %88, %cst_32 {dimension_numbers = #tpu.dot_dimension_numbers<[1], [0], [0], [1], [0, 0, 1, 1], [], []>} : vector<8x128xf32>, vector<128x128xf32>, vector<8x128xf32> -> vector<8x128xf32>
    %c3 = arith.constant 3 : index
    %c0_33 = arith.constant 0 : index
    %90 = vector.load %arg1[%c3, %c0_33] : memref<32x128xf32, #tpu.memory_space<vmem>>, vector<1x128xf32>
    %91 = vector.broadcast %90 : vector<1x128xf32> to vector<8x128xf32>
    %92 = arith.addf %89, %91 : vector<8x128xf32>
    %cst_34 = arith.constant dense<0.000000e+00> : vector<8xf32>
    %93 = vector.multi_reduction <add>, %92, %cst_34 [1] : vector<8x128xf32> to vector<8xf32>
    %94 = vector.shape_cast %93 : vector<8xf32> to vector<8x1xf32>
    %cst_35 = arith.constant 7.812500e-03 : f32
    %95 = vector.broadcast %cst_35 : f32 to vector<8x1xf32>
    %96 = arith.mulf %94, %95 : vector<8x1xf32>
    %97 = vector.broadcast %96 : vector<8x1xf32> to vector<8x128xf32>
    %98 = arith.subf %92, %97 : vector<8x128xf32>
    %99 = arith.mulf %98, %98 : vector<8x128xf32>
    %cst_36 = arith.constant dense<0.000000e+00> : vector<8xf32>
    %100 = vector.multi_reduction <add>, %99, %cst_36 [1] : vector<8x128xf32> to vector<8xf32>
    %101 = vector.shape_cast %100 : vector<8xf32> to vector<8x1xf32>
    %cst_37 = arith.constant 7.812500e-03 : f32
    %102 = vector.broadcast %cst_37 : f32 to vector<8x1xf32>
    %103 = arith.mulf %101, %102 : vector<8x1xf32>
    %cst_38 = arith.constant 9.99999974E-6 : f32
    %104 = vector.broadcast %cst_38 : f32 to vector<8x1xf32>
    %105 = arith.addf %103, %104 : vector<8x1xf32>
    %106 = math.rsqrt %105 : vector<8x1xf32>
    %107 = vector.broadcast %106 : vector<8x1xf32> to vector<8x128xf32>
    %108 = arith.mulf %98, %107 : vector<8x128xf32>
    %c4 = arith.constant 4 : index
    %c0_39 = arith.constant 0 : index
    %109 = vector.load %arg1[%c4, %c0_39] : memref<32x128xf32, #tpu.memory_space<vmem>>, vector<1x128xf32>
    %110 = vector.broadcast %109 : vector<1x128xf32> to vector<8x128xf32>
    %111 = arith.mulf %108, %110 : vector<8x128xf32>
    %c5 = arith.constant 5 : index
    %c0_40 = arith.constant 0 : index
    %112 = vector.load %arg1[%c5, %c0_40] : memref<32x128xf32, #tpu.memory_space<vmem>>, vector<1x128xf32>
    %113 = vector.broadcast %112 : vector<1x128xf32> to vector<8x128xf32>
    %114 = arith.addf %111, %113 : vector<8x128xf32>
    %cst_41 = arith.constant 5.000000e-01 : f32
    %115 = vector.broadcast %cst_41 : f32 to vector<8x128xf32>
    %116 = arith.mulf %115, %114 : vector<8x128xf32>
    %cst_42 = arith.constant 1.41421354 : f32
    %117 = vector.broadcast %cst_42 : f32 to vector<8x128xf32>
    %118 = arith.divf %114, %117 : vector<8x128xf32>
    %cst_43 = arith.constant 0.000000e+00 : f32
    %119 = vector.broadcast %cst_43 : f32 to vector<8x128xf32>
    %120 = arith.cmpf oge, %118, %119 : vector<8x128xf32>
    %cst_44 = arith.constant 1.000000e+00 : f32
    %cst_45 = arith.constant -1.000000e+00 : f32
    %121 = vector.broadcast %cst_44 : f32 to vector<8x128xf32>
    %122 = vector.broadcast %cst_45 : f32 to vector<8x128xf32>
    %123 = arith.select %120, %121, %122 : vector<8x128xi1>, vector<8x128xf32>
    %124 = math.absf %118 : vector<8x128xf32>
    %cst_46 = arith.constant 0.327591091 : f32
    %125 = vector.broadcast %cst_46 : f32 to vector<8x128xf32>
    %126 = arith.mulf %125, %124 : vector<8x128xf32>
    %cst_47 = arith.constant 1.000000e+00 : f32
    %127 = vector.broadcast %cst_47 : f32 to vector<8x128xf32>
    %128 = arith.addf %127, %126 : vector<8x128xf32>
    %cst_48 = arith.constant 1.000000e+00 : f32
    %129 = vector.broadcast %cst_48 : f32 to vector<8x128xf32>
    %130 = arith.divf %129, %128 : vector<8x128xf32>
    %cst_49 = arith.constant 1.06140542 : f32
    %131 = vector.broadcast %cst_49 : f32 to vector<8x128xf32>
    %132 = arith.mulf %131, %130 : vector<8x128xf32>
    %cst_50 = arith.constant -1.45315206 : f32
    %133 = vector.broadcast %cst_50 : f32 to vector<8x128xf32>
    %134 = arith.addf %132, %133 : vector<8x128xf32>
    %135 = arith.mulf %134, %130 : vector<8x128xf32>
    %cst_51 = arith.constant 1.42141378 : f32
    %136 = vector.broadcast %cst_51 : f32 to vector<8x128xf32>
    %137 = arith.addf %135, %136 : vector<8x128xf32>
    %138 = arith.mulf %137, %130 : vector<8x128xf32>
    %cst_52 = arith.constant -0.284496725 : f32
    %139 = vector.broadcast %cst_52 : f32 to vector<8x128xf32>
    %140 = arith.addf %138, %139 : vector<8x128xf32>
    %141 = arith.mulf %140, %130 : vector<8x128xf32>
    %cst_53 = arith.constant 0.254829586 : f32
    %142 = vector.broadcast %cst_53 : f32 to vector<8x128xf32>
    %143 = arith.addf %141, %142 : vector<8x128xf32>
    %144 = arith.mulf %143, %130 : vector<8x128xf32>
    %cst_54 = arith.constant 0.000000e+00 : f32
    %145 = vector.broadcast %cst_54 : f32 to vector<8x128xf32>
    %146 = arith.subf %145, %124 : vector<8x128xf32>
    %147 = arith.mulf %146, %124 : vector<8x128xf32>
    %148 = math.exp %147 : vector<8x128xf32>
    %149 = arith.mulf %144, %148 : vector<8x128xf32>
    %cst_55 = arith.constant 1.000000e+00 : f32
    %150 = vector.broadcast %cst_55 : f32 to vector<8x128xf32>
    %151 = arith.subf %150, %149 : vector<8x128xf32>
    %152 = arith.mulf %123, %151 : vector<8x128xf32>
    %cst_56 = arith.constant 1.000000e+00 : f32
    %153 = vector.broadcast %cst_56 : f32 to vector<8x128xf32>
    %154 = arith.addf %153, %152 : vector<8x128xf32>
    %155 = arith.mulf %116, %154 : vector<8x128xf32>
    %c2_57 = arith.constant 2 : index
    %c0_58 = arith.constant 0 : index
    %c0_59 = arith.constant 0 : index
    %156 = vector.load %arg2[%c2_57, %c0_58, %c0_59] : memref<11x128x128xf32, #tpu.memory_space<vmem>>, vector<1x128x128xf32>
    %157 = vector.shape_cast %156 : vector<1x128x128xf32> to vector<128x128xf32>
    %cst_60 = arith.constant dense<0.000000e+00> : vector<8x128xf32>
    %158 = tpu.matmul %155, %157, %cst_60 {dimension_numbers = #tpu.dot_dimension_numbers<[1], [0], [0], [1], [0, 0, 1, 1], [], []>} : vector<8x128xf32>, vector<128x128xf32>, vector<8x128xf32> -> vector<8x128xf32>
    %c6 = arith.constant 6 : index
    %c0_61 = arith.constant 0 : index
    %159 = vector.load %arg1[%c6, %c0_61] : memref<32x128xf32, #tpu.memory_space<vmem>>, vector<1x128xf32>
    %160 = vector.broadcast %159 : vector<1x128xf32> to vector<8x128xf32>
    %161 = arith.addf %158, %160 : vector<8x128xf32>
    %162 = arith.addf %86, %161 : vector<8x128xf32>
    %c3_62 = arith.constant 3 : index
    %c0_63 = arith.constant 0 : index
    %c0_64 = arith.constant 0 : index
    %163 = vector.load %arg2[%c3_62, %c0_63, %c0_64] : memref<11x128x128xf32, #tpu.memory_space<vmem>>, vector<1x128x128xf32>
    %164 = vector.shape_cast %163 : vector<1x128x128xf32> to vector<128x128xf32>
    %cst_65 = arith.constant dense<0.000000e+00> : vector<8x128xf32>
    %165 = tpu.matmul %162, %164, %cst_65 {dimension_numbers = #tpu.dot_dimension_numbers<[1], [0], [0], [1], [0, 0, 1, 1], [], []>} : vector<8x128xf32>, vector<128x128xf32>, vector<8x128xf32> -> vector<8x128xf32>
    %c7 = arith.constant 7 : index
    %c0_66 = arith.constant 0 : index
    %166 = vector.load %arg1[%c7, %c0_66] : memref<32x128xf32, #tpu.memory_space<vmem>>, vector<1x128xf32>
    %167 = vector.broadcast %166 : vector<1x128xf32> to vector<8x128xf32>
    %168 = arith.addf %165, %167 : vector<8x128xf32>
    %cst_67 = arith.constant dense<0.000000e+00> : vector<8xf32>
    %169 = vector.multi_reduction <add>, %168, %cst_67 [1] : vector<8x128xf32> to vector<8xf32>
    %170 = vector.shape_cast %169 : vector<8xf32> to vector<8x1xf32>
    %cst_68 = arith.constant 1.562500e-02 : f32
    %171 = vector.broadcast %cst_68 : f32 to vector<8x1xf32>
    %172 = arith.mulf %170, %171 : vector<8x1xf32>
    %173 = vector.broadcast %172 : vector<8x1xf32> to vector<8x128xf32>
    %174 = arith.subf %168, %173 : vector<8x128xf32>
    %175 = vector.broadcast %5 : vector<1x128xf32> to vector<8x128xf32>
    %176 = arith.mulf %174, %175 : vector<8x128xf32>
    %177 = arith.mulf %176, %176 : vector<8x128xf32>
    %cst_69 = arith.constant dense<0.000000e+00> : vector<8xf32>
    %178 = vector.multi_reduction <add>, %177, %cst_69 [1] : vector<8x128xf32> to vector<8xf32>
    %179 = vector.shape_cast %178 : vector<8xf32> to vector<8x1xf32>
    %cst_70 = arith.constant 1.562500e-02 : f32
    %180 = vector.broadcast %cst_70 : f32 to vector<8x1xf32>
    %181 = arith.mulf %179, %180 : vector<8x1xf32>
    %cst_71 = arith.constant 9.99999974E-6 : f32
    %182 = vector.broadcast %cst_71 : f32 to vector<8x1xf32>
    %183 = arith.addf %181, %182 : vector<8x1xf32>
    %184 = math.rsqrt %183 : vector<8x1xf32>
    %185 = vector.broadcast %184 : vector<8x1xf32> to vector<8x128xf32>
    %186 = arith.mulf %176, %185 : vector<8x128xf32>
    %c8 = arith.constant 8 : index
    %c0_72 = arith.constant 0 : index
    %187 = vector.load %arg1[%c8, %c0_72] : memref<32x128xf32, #tpu.memory_space<vmem>>, vector<1x128xf32>
    %188 = vector.broadcast %187 : vector<1x128xf32> to vector<8x128xf32>
    %189 = arith.mulf %186, %188 : vector<8x128xf32>
    %c9 = arith.constant 9 : index
    %c0_73 = arith.constant 0 : index
    %190 = vector.load %arg1[%c9, %c0_73] : memref<32x128xf32, #tpu.memory_space<vmem>>, vector<1x128xf32>
    %191 = vector.broadcast %190 : vector<1x128xf32> to vector<8x128xf32>
    %192 = arith.addf %189, %191 : vector<8x128xf32>
    %cst_74 = arith.constant 5.000000e-01 : f32
    %193 = vector.broadcast %cst_74 : f32 to vector<8x128xf32>
    %194 = arith.mulf %193, %192 : vector<8x128xf32>
    %cst_75 = arith.constant 1.41421354 : f32
    %195 = vector.broadcast %cst_75 : f32 to vector<8x128xf32>
    %196 = arith.divf %192, %195 : vector<8x128xf32>
    %cst_76 = arith.constant 0.000000e+00 : f32
    %197 = vector.broadcast %cst_76 : f32 to vector<8x128xf32>
    %198 = arith.cmpf oge, %196, %197 : vector<8x128xf32>
    %cst_77 = arith.constant 1.000000e+00 : f32
    %cst_78 = arith.constant -1.000000e+00 : f32
    %199 = vector.broadcast %cst_77 : f32 to vector<8x128xf32>
    %200 = vector.broadcast %cst_78 : f32 to vector<8x128xf32>
    %201 = arith.select %198, %199, %200 : vector<8x128xi1>, vector<8x128xf32>
    %202 = math.absf %196 : vector<8x128xf32>
    %cst_79 = arith.constant 0.327591091 : f32
    %203 = vector.broadcast %cst_79 : f32 to vector<8x128xf32>
    %204 = arith.mulf %203, %202 : vector<8x128xf32>
    %cst_80 = arith.constant 1.000000e+00 : f32
    %205 = vector.broadcast %cst_80 : f32 to vector<8x128xf32>
    %206 = arith.addf %205, %204 : vector<8x128xf32>
    %cst_81 = arith.constant 1.000000e+00 : f32
    %207 = vector.broadcast %cst_81 : f32 to vector<8x128xf32>
    %208 = arith.divf %207, %206 : vector<8x128xf32>
    %cst_82 = arith.constant 1.06140542 : f32
    %209 = vector.broadcast %cst_82 : f32 to vector<8x128xf32>
    %210 = arith.mulf %209, %208 : vector<8x128xf32>
    %cst_83 = arith.constant -1.45315206 : f32
    %211 = vector.broadcast %cst_83 : f32 to vector<8x128xf32>
    %212 = arith.addf %210, %211 : vector<8x128xf32>
    %213 = arith.mulf %212, %208 : vector<8x128xf32>
    %cst_84 = arith.constant 1.42141378 : f32
    %214 = vector.broadcast %cst_84 : f32 to vector<8x128xf32>
    %215 = arith.addf %213, %214 : vector<8x128xf32>
    %216 = arith.mulf %215, %208 : vector<8x128xf32>
    %cst_85 = arith.constant -0.284496725 : f32
    %217 = vector.broadcast %cst_85 : f32 to vector<8x128xf32>
    %218 = arith.addf %216, %217 : vector<8x128xf32>
    %219 = arith.mulf %218, %208 : vector<8x128xf32>
    %cst_86 = arith.constant 0.254829586 : f32
    %220 = vector.broadcast %cst_86 : f32 to vector<8x128xf32>
    %221 = arith.addf %219, %220 : vector<8x128xf32>
    %222 = arith.mulf %221, %208 : vector<8x128xf32>
    %cst_87 = arith.constant 0.000000e+00 : f32
    %223 = vector.broadcast %cst_87 : f32 to vector<8x128xf32>
    %224 = arith.subf %223, %202 : vector<8x128xf32>
    %225 = arith.mulf %224, %202 : vector<8x128xf32>
    %226 = math.exp %225 : vector<8x128xf32>
    %227 = arith.mulf %222, %226 : vector<8x128xf32>
    %cst_88 = arith.constant 1.000000e+00 : f32
    %228 = vector.broadcast %cst_88 : f32 to vector<8x128xf32>
    %229 = arith.subf %228, %227 : vector<8x128xf32>
    %230 = arith.mulf %201, %229 : vector<8x128xf32>
    %cst_89 = arith.constant 1.000000e+00 : f32
    %231 = vector.broadcast %cst_89 : f32 to vector<8x128xf32>
    %232 = arith.addf %231, %230 : vector<8x128xf32>
    %233 = arith.mulf %194, %232 : vector<8x128xf32>
    %c10 = arith.constant 10 : index
    %c0_90 = arith.constant 0 : index
    %234 = vector.load %arg1[%c10, %c0_90] : memref<32x128xf32, #tpu.memory_space<vmem>>, vector<1x128xf32>
    %c11 = arith.constant 11 : index
    %c0_91 = arith.constant 0 : index
    %235 = vector.load %arg1[%c11, %c0_91] : memref<32x128xf32, #tpu.memory_space<vmem>>, vector<1x128xf32>
    %c12 = arith.constant 12 : index
    %c0_92 = arith.constant 0 : index
    %236 = vector.load %arg1[%c12, %c0_92] : memref<32x128xf32, #tpu.memory_space<vmem>>, vector<1x128xf32>
    %c16 = arith.constant 16 : index
    %c0_93 = arith.constant 0 : index
    %237 = vector.load %arg1[%c16, %c0_93] : memref<32x128xf32, #tpu.memory_space<vmem>>, vector<1x128xf32>
    %c17 = arith.constant 17 : index
    %c0_94 = arith.constant 0 : index
    %238 = vector.load %arg1[%c17, %c0_94] : memref<32x128xf32, #tpu.memory_space<vmem>>, vector<1x128xf32>
    %c18 = arith.constant 18 : index
    %c0_95 = arith.constant 0 : index
    %239 = vector.load %arg1[%c18, %c0_95] : memref<32x128xf32, #tpu.memory_space<vmem>>, vector<1x128xf32>
    %cst_96 = arith.constant 0.000000e+00 : f32
    %240 = vector.broadcast %cst_96 : f32 to vector<8x128xf32>
    %241 = vector.broadcast %234 : vector<1x128xf32> to vector<8x128xf32>
    %242 = arith.mulf %241, %240 : vector<8x128xf32>
    %243 = arith.addf %242, %233 : vector<8x128xf32>
    %244 = vector.broadcast %236 : vector<1x128xf32> to vector<8x128xf32>
    %245 = arith.mulf %244, %240 : vector<8x128xf32>
    %246 = vector.broadcast %235 : vector<1x128xf32> to vector<8x128xf32>
    %247 = arith.addf %246, %245 : vector<8x128xf32>
    %248 = arith.cmpf oge, %243, %247 : vector<8x128xf32>
    %249 = arith.extui %248 : vector<8x128xi1> to vector<8x128xi32>
    %250 = arith.sitofp %249 : vector<8x128xi32> to vector<8x128xf32>
    %251 = arith.mulf %250, %247 : vector<8x128xf32>
    %252 = arith.subf %243, %251 : vector<8x128xf32>
    %cst_97 = arith.constant 0.899999976 : f32
    %253 = vector.broadcast %cst_97 : f32 to vector<8x128xf32>
    %254 = arith.mulf %253, %240 : vector<8x128xf32>
    %255 = arith.addf %254, %250 : vector<8x128xf32>
    %c4_98 = arith.constant 4 : index
    %c0_99 = arith.constant 0 : index
    %c0_100 = arith.constant 0 : index
    %256 = vector.load %arg2[%c4_98, %c0_99, %c0_100] : memref<11x128x128xf32, #tpu.memory_space<vmem>>, vector<1x128x128xf32>
    %257 = vector.shape_cast %256 : vector<1x128x128xf32> to vector<128x128xf32>
    %cst_101 = arith.constant dense<0.000000e+00> : vector<8x128xf32>
    %258 = tpu.matmul %250, %257, %cst_101 {dimension_numbers = #tpu.dot_dimension_numbers<[1], [0], [0], [1], [0, 0, 1, 1], [], []>} : vector<8x128xf32>, vector<128x128xf32>, vector<8x128xf32> -> vector<8x128xf32>
    %c13 = arith.constant 13 : index
    %c0_102 = arith.constant 0 : index
    %259 = vector.load %arg1[%c13, %c0_102] : memref<32x128xf32, #tpu.memory_space<vmem>>, vector<1x128xf32>
    %260 = vector.broadcast %259 : vector<1x128xf32> to vector<8x128xf32>
    %261 = arith.addf %258, %260 : vector<8x128xf32>
    %cst_103 = arith.constant dense<0.000000e+00> : vector<8xf32>
    %262 = vector.multi_reduction <add>, %261, %cst_103 [1] : vector<8x128xf32> to vector<8xf32>
    %263 = vector.shape_cast %262 : vector<8xf32> to vector<8x1xf32>
    %cst_104 = arith.constant 3.125000e-02 : f32
    %264 = vector.broadcast %cst_104 : f32 to vector<8x1xf32>
    %265 = arith.mulf %263, %264 : vector<8x1xf32>
    %266 = vector.broadcast %265 : vector<8x1xf32> to vector<8x128xf32>
    %267 = arith.subf %261, %266 : vector<8x128xf32>
    %268 = vector.broadcast %9 : vector<1x128xf32> to vector<8x128xf32>
    %269 = arith.mulf %267, %268 : vector<8x128xf32>
    %270 = arith.mulf %269, %269 : vector<8x128xf32>
    %cst_105 = arith.constant dense<0.000000e+00> : vector<8xf32>
    %271 = vector.multi_reduction <add>, %270, %cst_105 [1] : vector<8x128xf32> to vector<8xf32>
    %272 = vector.shape_cast %271 : vector<8xf32> to vector<8x1xf32>
    %cst_106 = arith.constant 3.125000e-02 : f32
    %273 = vector.broadcast %cst_106 : f32 to vector<8x1xf32>
    %274 = arith.mulf %272, %273 : vector<8x1xf32>
    %cst_107 = arith.constant 9.99999974E-6 : f32
    %275 = vector.broadcast %cst_107 : f32 to vector<8x1xf32>
    %276 = arith.addf %274, %275 : vector<8x1xf32>
    %277 = math.rsqrt %276 : vector<8x1xf32>
    %278 = vector.broadcast %277 : vector<8x1xf32> to vector<8x128xf32>
    %279 = arith.mulf %269, %278 : vector<8x128xf32>
    %c14 = arith.constant 14 : index
    %c0_108 = arith.constant 0 : index
    %280 = vector.load %arg1[%c14, %c0_108] : memref<32x128xf32, #tpu.memory_space<vmem>>, vector<1x128xf32>
    %281 = vector.broadcast %280 : vector<1x128xf32> to vector<8x128xf32>
    %282 = arith.mulf %279, %281 : vector<8x128xf32>
    %c15 = arith.constant 15 : index
    %c0_109 = arith.constant 0 : index
    %283 = vector.load %arg1[%c15, %c0_109] : memref<32x128xf32, #tpu.memory_space<vmem>>, vector<1x128xf32>
    %284 = vector.broadcast %283 : vector<1x128xf32> to vector<8x128xf32>
    %285 = arith.addf %282, %284 : vector<8x128xf32>
    %286 = vector.broadcast %237 : vector<1x128xf32> to vector<8x128xf32>
    %287 = arith.mulf %286, %240 : vector<8x128xf32>
    %288 = arith.addf %287, %285 : vector<8x128xf32>
    %289 = vector.broadcast %239 : vector<1x128xf32> to vector<8x128xf32>
    %290 = arith.mulf %289, %240 : vector<8x128xf32>
    %291 = vector.broadcast %238 : vector<1x128xf32> to vector<8x128xf32>
    %292 = arith.addf %291, %290 : vector<8x128xf32>
    %293 = arith.cmpf oge, %288, %292 : vector<8x128xf32>
    %294 = arith.extui %293 : vector<8x128xi1> to vector<8x128xi32>
    %295 = arith.sitofp %294 : vector<8x128xi32> to vector<8x128xf32>
    %296 = arith.mulf %295, %292 : vector<8x128xf32>
    %297 = arith.subf %288, %296 : vector<8x128xf32>
    %cst_110 = arith.constant 0.899999976 : f32
    %298 = vector.broadcast %cst_110 : f32 to vector<8x128xf32>
    %299 = arith.mulf %298, %240 : vector<8x128xf32>
    %300 = arith.addf %299, %295 : vector<8x128xf32>
    %c5_111 = arith.constant 5 : index
    %c0_112 = arith.constant 0 : index
    %c0_113 = arith.constant 0 : index
    %301 = vector.load %arg2[%c5_111, %c0_112, %c0_113] : memref<11x128x128xf32, #tpu.memory_space<vmem>>, vector<1x128x128xf32>
    %302 = vector.shape_cast %301 : vector<1x128x128xf32> to vector<128x128xf32>
    %cst_114 = arith.constant dense<0.000000e+00> : vector<8x128xf32>
    %303 = tpu.matmul %295, %302, %cst_114 {dimension_numbers = #tpu.dot_dimension_numbers<[1], [0], [0], [1], [0, 0, 1, 1], [], []>} : vector<8x128xf32>, vector<128x128xf32>, vector<8x128xf32> -> vector<8x128xf32>
    %c19 = arith.constant 19 : index
    %c0_115 = arith.constant 0 : index
    %304 = vector.load %arg1[%c19, %c0_115] : memref<32x128xf32, #tpu.memory_space<vmem>>, vector<1x128xf32>
    %305 = vector.broadcast %304 : vector<1x128xf32> to vector<8x128xf32>
    %306 = arith.addf %303, %305 : vector<8x128xf32>
    %cst_116 = arith.constant dense<0.000000e+00> : vector<8xf32>
    %307 = vector.multi_reduction <add>, %306, %cst_116 [1] : vector<8x128xf32> to vector<8xf32>
    %308 = vector.shape_cast %307 : vector<8xf32> to vector<8x1xf32>
    %cst_117 = arith.constant 6.250000e-02 : f32
    %309 = vector.broadcast %cst_117 : f32 to vector<8x1xf32>
    %310 = arith.mulf %308, %309 : vector<8x1xf32>
    %311 = vector.broadcast %310 : vector<8x1xf32> to vector<8x128xf32>
    %312 = arith.subf %306, %311 : vector<8x128xf32>
    %313 = vector.broadcast %13 : vector<1x128xf32> to vector<8x128xf32>
    %314 = arith.mulf %312, %313 : vector<8x128xf32>
    %315 = arith.mulf %314, %314 : vector<8x128xf32>
    %cst_118 = arith.constant dense<0.000000e+00> : vector<8xf32>
    %316 = vector.multi_reduction <add>, %315, %cst_118 [1] : vector<8x128xf32> to vector<8xf32>
    %317 = vector.shape_cast %316 : vector<8xf32> to vector<8x1xf32>
    %cst_119 = arith.constant 6.250000e-02 : f32
    %318 = vector.broadcast %cst_119 : f32 to vector<8x1xf32>
    %319 = arith.mulf %317, %318 : vector<8x1xf32>
    %cst_120 = arith.constant 9.99999974E-6 : f32
    %320 = vector.broadcast %cst_120 : f32 to vector<8x1xf32>
    %321 = arith.addf %319, %320 : vector<8x1xf32>
    %322 = math.rsqrt %321 : vector<8x1xf32>
    %323 = vector.broadcast %322 : vector<8x1xf32> to vector<8x128xf32>
    %324 = arith.mulf %314, %323 : vector<8x128xf32>
    %c20 = arith.constant 20 : index
    %c0_121 = arith.constant 0 : index
    %325 = vector.load %arg1[%c20, %c0_121] : memref<32x128xf32, #tpu.memory_space<vmem>>, vector<1x128xf32>
    %326 = vector.broadcast %325 : vector<1x128xf32> to vector<8x128xf32>
    %327 = arith.mulf %324, %326 : vector<8x128xf32>
    %c21 = arith.constant 21 : index
    %c0_122 = arith.constant 0 : index
    %328 = vector.load %arg1[%c21, %c0_122] : memref<32x128xf32, #tpu.memory_space<vmem>>, vector<1x128xf32>
    %329 = vector.broadcast %328 : vector<1x128xf32> to vector<8x128xf32>
    %330 = arith.addf %327, %329 : vector<8x128xf32>
    %331 = arith.addf %240, %330 : vector<8x128xf32>
    %332 = vector.broadcast %234 : vector<1x128xf32> to vector<8x128xf32>
    %333 = arith.mulf %332, %252 : vector<8x128xf32>
    %334 = arith.addf %333, %233 : vector<8x128xf32>
    %335 = vector.broadcast %236 : vector<1x128xf32> to vector<8x128xf32>
    %336 = arith.mulf %335, %255 : vector<8x128xf32>
    %337 = vector.broadcast %235 : vector<1x128xf32> to vector<8x128xf32>
    %338 = arith.addf %337, %336 : vector<8x128xf32>
    %339 = arith.cmpf oge, %334, %338 : vector<8x128xf32>
    %340 = arith.extui %339 : vector<8x128xi1> to vector<8x128xi32>
    %341 = arith.sitofp %340 : vector<8x128xi32> to vector<8x128xf32>
    %342 = arith.mulf %341, %338 : vector<8x128xf32>
    %343 = arith.subf %334, %342 : vector<8x128xf32>
    %cst_123 = arith.constant 0.899999976 : f32
    %344 = vector.broadcast %cst_123 : f32 to vector<8x128xf32>
    %345 = arith.mulf %344, %255 : vector<8x128xf32>
    %346 = arith.addf %345, %341 : vector<8x128xf32>
    %c4_124 = arith.constant 4 : index
    %c0_125 = arith.constant 0 : index
    %c0_126 = arith.constant 0 : index
    %347 = vector.load %arg2[%c4_124, %c0_125, %c0_126] : memref<11x128x128xf32, #tpu.memory_space<vmem>>, vector<1x128x128xf32>
    %348 = vector.shape_cast %347 : vector<1x128x128xf32> to vector<128x128xf32>
    %cst_127 = arith.constant dense<0.000000e+00> : vector<8x128xf32>
    %349 = tpu.matmul %341, %348, %cst_127 {dimension_numbers = #tpu.dot_dimension_numbers<[1], [0], [0], [1], [0, 0, 1, 1], [], []>} : vector<8x128xf32>, vector<128x128xf32>, vector<8x128xf32> -> vector<8x128xf32>
    %c13_128 = arith.constant 13 : index
    %c0_129 = arith.constant 0 : index
    %350 = vector.load %arg1[%c13_128, %c0_129] : memref<32x128xf32, #tpu.memory_space<vmem>>, vector<1x128xf32>
    %351 = vector.broadcast %350 : vector<1x128xf32> to vector<8x128xf32>
    %352 = arith.addf %349, %351 : vector<8x128xf32>
    %cst_130 = arith.constant dense<0.000000e+00> : vector<8xf32>
    %353 = vector.multi_reduction <add>, %352, %cst_130 [1] : vector<8x128xf32> to vector<8xf32>
    %354 = vector.shape_cast %353 : vector<8xf32> to vector<8x1xf32>
    %cst_131 = arith.constant 3.125000e-02 : f32
    %355 = vector.broadcast %cst_131 : f32 to vector<8x1xf32>
    %356 = arith.mulf %354, %355 : vector<8x1xf32>
    %357 = vector.broadcast %356 : vector<8x1xf32> to vector<8x128xf32>
    %358 = arith.subf %352, %357 : vector<8x128xf32>
    %359 = vector.broadcast %9 : vector<1x128xf32> to vector<8x128xf32>
    %360 = arith.mulf %358, %359 : vector<8x128xf32>
    %361 = arith.mulf %360, %360 : vector<8x128xf32>
    %cst_132 = arith.constant dense<0.000000e+00> : vector<8xf32>
    %362 = vector.multi_reduction <add>, %361, %cst_132 [1] : vector<8x128xf32> to vector<8xf32>
    %363 = vector.shape_cast %362 : vector<8xf32> to vector<8x1xf32>
    %cst_133 = arith.constant 3.125000e-02 : f32
    %364 = vector.broadcast %cst_133 : f32 to vector<8x1xf32>
    %365 = arith.mulf %363, %364 : vector<8x1xf32>
    %cst_134 = arith.constant 9.99999974E-6 : f32
    %366 = vector.broadcast %cst_134 : f32 to vector<8x1xf32>
    %367 = arith.addf %365, %366 : vector<8x1xf32>
    %368 = math.rsqrt %367 : vector<8x1xf32>
    %369 = vector.broadcast %368 : vector<8x1xf32> to vector<8x128xf32>
    %370 = arith.mulf %360, %369 : vector<8x128xf32>
    %c14_135 = arith.constant 14 : index
    %c0_136 = arith.constant 0 : index
    %371 = vector.load %arg1[%c14_135, %c0_136] : memref<32x128xf32, #tpu.memory_space<vmem>>, vector<1x128xf32>
    %372 = vector.broadcast %371 : vector<1x128xf32> to vector<8x128xf32>
    %373 = arith.mulf %370, %372 : vector<8x128xf32>
    %c15_137 = arith.constant 15 : index
    %c0_138 = arith.constant 0 : index
    %374 = vector.load %arg1[%c15_137, %c0_138] : memref<32x128xf32, #tpu.memory_space<vmem>>, vector<1x128xf32>
    %375 = vector.broadcast %374 : vector<1x128xf32> to vector<8x128xf32>
    %376 = arith.addf %373, %375 : vector<8x128xf32>
    %377 = vector.broadcast %237 : vector<1x128xf32> to vector<8x128xf32>
    %378 = arith.mulf %377, %297 : vector<8x128xf32>
    %379 = arith.addf %378, %376 : vector<8x128xf32>
    %380 = vector.broadcast %239 : vector<1x128xf32> to vector<8x128xf32>
    %381 = arith.mulf %380, %300 : vector<8x128xf32>
    %382 = vector.broadcast %238 : vector<1x128xf32> to vector<8x128xf32>
    %383 = arith.addf %382, %381 : vector<8x128xf32>
    %384 = arith.cmpf oge, %379, %383 : vector<8x128xf32>
    %385 = arith.extui %384 : vector<8x128xi1> to vector<8x128xi32>
    %386 = arith.sitofp %385 : vector<8x128xi32> to vector<8x128xf32>
    %387 = arith.mulf %386, %383 : vector<8x128xf32>
    %388 = arith.subf %379, %387 : vector<8x128xf32>
    %cst_139 = arith.constant 0.899999976 : f32
    %389 = vector.broadcast %cst_139 : f32 to vector<8x128xf32>
    %390 = arith.mulf %389, %300 : vector<8x128xf32>
    %391 = arith.addf %390, %386 : vector<8x128xf32>
    %c5_140 = arith.constant 5 : index
    %c0_141 = arith.constant 0 : index
    %c0_142 = arith.constant 0 : index
    %392 = vector.load %arg2[%c5_140, %c0_141, %c0_142] : memref<11x128x128xf32, #tpu.memory_space<vmem>>, vector<1x128x128xf32>
    %393 = vector.shape_cast %392 : vector<1x128x128xf32> to vector<128x128xf32>
    %cst_143 = arith.constant dense<0.000000e+00> : vector<8x128xf32>
    %394 = tpu.matmul %386, %393, %cst_143 {dimension_numbers = #tpu.dot_dimension_numbers<[1], [0], [0], [1], [0, 0, 1, 1], [], []>} : vector<8x128xf32>, vector<128x128xf32>, vector<8x128xf32> -> vector<8x128xf32>
    %c19_144 = arith.constant 19 : index
    %c0_145 = arith.constant 0 : index
    %395 = vector.load %arg1[%c19_144, %c0_145] : memref<32x128xf32, #tpu.memory_space<vmem>>, vector<1x128xf32>
    %396 = vector.broadcast %395 : vector<1x128xf32> to vector<8x128xf32>
    %397 = arith.addf %394, %396 : vector<8x128xf32>
    %cst_146 = arith.constant dense<0.000000e+00> : vector<8xf32>
    %398 = vector.multi_reduction <add>, %397, %cst_146 [1] : vector<8x128xf32> to vector<8xf32>
    %399 = vector.shape_cast %398 : vector<8xf32> to vector<8x1xf32>
    %cst_147 = arith.constant 6.250000e-02 : f32
    %400 = vector.broadcast %cst_147 : f32 to vector<8x1xf32>
    %401 = arith.mulf %399, %400 : vector<8x1xf32>
    %402 = vector.broadcast %401 : vector<8x1xf32> to vector<8x128xf32>
    %403 = arith.subf %397, %402 : vector<8x128xf32>
    %404 = vector.broadcast %13 : vector<1x128xf32> to vector<8x128xf32>
    %405 = arith.mulf %403, %404 : vector<8x128xf32>
    %406 = arith.mulf %405, %405 : vector<8x128xf32>
    %cst_148 = arith.constant dense<0.000000e+00> : vector<8xf32>
    %407 = vector.multi_reduction <add>, %406, %cst_148 [1] : vector<8x128xf32> to vector<8xf32>
    %408 = vector.shape_cast %407 : vector<8xf32> to vector<8x1xf32>
    %cst_149 = arith.constant 6.250000e-02 : f32
    %409 = vector.broadcast %cst_149 : f32 to vector<8x1xf32>
    %410 = arith.mulf %408, %409 : vector<8x1xf32>
    %cst_150 = arith.constant 9.99999974E-6 : f32
    %411 = vector.broadcast %cst_150 : f32 to vector<8x1xf32>
    %412 = arith.addf %410, %411 : vector<8x1xf32>
    %413 = math.rsqrt %412 : vector<8x1xf32>
    %414 = vector.broadcast %413 : vector<8x1xf32> to vector<8x128xf32>
    %415 = arith.mulf %405, %414 : vector<8x128xf32>
    %c20_151 = arith.constant 20 : index
    %c0_152 = arith.constant 0 : index
    %416 = vector.load %arg1[%c20_151, %c0_152] : memref<32x128xf32, #tpu.memory_space<vmem>>, vector<1x128xf32>
    %417 = vector.broadcast %416 : vector<1x128xf32> to vector<8x128xf32>
    %418 = arith.mulf %415, %417 : vector<8x128xf32>
    %c21_153 = arith.constant 21 : index
    %c0_154 = arith.constant 0 : index
    %419 = vector.load %arg1[%c21_153, %c0_154] : memref<32x128xf32, #tpu.memory_space<vmem>>, vector<1x128xf32>
    %420 = vector.broadcast %419 : vector<1x128xf32> to vector<8x128xf32>
    %421 = arith.addf %418, %420 : vector<8x128xf32>
    %422 = arith.addf %331, %421 : vector<8x128xf32>
    %423 = vector.broadcast %234 : vector<1x128xf32> to vector<8x128xf32>
    %424 = arith.mulf %423, %343 : vector<8x128xf32>
    %425 = arith.addf %424, %233 : vector<8x128xf32>
    %426 = vector.broadcast %236 : vector<1x128xf32> to vector<8x128xf32>
    %427 = arith.mulf %426, %346 : vector<8x128xf32>
    %428 = vector.broadcast %235 : vector<1x128xf32> to vector<8x128xf32>
    %429 = arith.addf %428, %427 : vector<8x128xf32>
    %430 = arith.cmpf oge, %425, %429 : vector<8x128xf32>
    %431 = arith.extui %430 : vector<8x128xi1> to vector<8x128xi32>
    %432 = arith.sitofp %431 : vector<8x128xi32> to vector<8x128xf32>
    %433 = arith.mulf %432, %429 : vector<8x128xf32>
    %434 = arith.subf %425, %433 : vector<8x128xf32>
    %cst_155 = arith.constant 0.899999976 : f32
    %435 = vector.broadcast %cst_155 : f32 to vector<8x128xf32>
    %436 = arith.mulf %435, %346 : vector<8x128xf32>
    %437 = arith.addf %436, %432 : vector<8x128xf32>
    %c4_156 = arith.constant 4 : index
    %c0_157 = arith.constant 0 : index
    %c0_158 = arith.constant 0 : index
    %438 = vector.load %arg2[%c4_156, %c0_157, %c0_158] : memref<11x128x128xf32, #tpu.memory_space<vmem>>, vector<1x128x128xf32>
    %439 = vector.shape_cast %438 : vector<1x128x128xf32> to vector<128x128xf32>
    %cst_159 = arith.constant dense<0.000000e+00> : vector<8x128xf32>
    %440 = tpu.matmul %432, %439, %cst_159 {dimension_numbers = #tpu.dot_dimension_numbers<[1], [0], [0], [1], [0, 0, 1, 1], [], []>} : vector<8x128xf32>, vector<128x128xf32>, vector<8x128xf32> -> vector<8x128xf32>
    %c13_160 = arith.constant 13 : index
    %c0_161 = arith.constant 0 : index
    %441 = vector.load %arg1[%c13_160, %c0_161] : memref<32x128xf32, #tpu.memory_space<vmem>>, vector<1x128xf32>
    %442 = vector.broadcast %441 : vector<1x128xf32> to vector<8x128xf32>
    %443 = arith.addf %440, %442 : vector<8x128xf32>
    %cst_162 = arith.constant dense<0.000000e+00> : vector<8xf32>
    %444 = vector.multi_reduction <add>, %443, %cst_162 [1] : vector<8x128xf32> to vector<8xf32>
    %445 = vector.shape_cast %444 : vector<8xf32> to vector<8x1xf32>
    %cst_163 = arith.constant 3.125000e-02 : f32
    %446 = vector.broadcast %cst_163 : f32 to vector<8x1xf32>
    %447 = arith.mulf %445, %446 : vector<8x1xf32>
    %448 = vector.broadcast %447 : vector<8x1xf32> to vector<8x128xf32>
    %449 = arith.subf %443, %448 : vector<8x128xf32>
    %450 = vector.broadcast %9 : vector<1x128xf32> to vector<8x128xf32>
    %451 = arith.mulf %449, %450 : vector<8x128xf32>
    %452 = arith.mulf %451, %451 : vector<8x128xf32>
    %cst_164 = arith.constant dense<0.000000e+00> : vector<8xf32>
    %453 = vector.multi_reduction <add>, %452, %cst_164 [1] : vector<8x128xf32> to vector<8xf32>
    %454 = vector.shape_cast %453 : vector<8xf32> to vector<8x1xf32>
    %cst_165 = arith.constant 3.125000e-02 : f32
    %455 = vector.broadcast %cst_165 : f32 to vector<8x1xf32>
    %456 = arith.mulf %454, %455 : vector<8x1xf32>
    %cst_166 = arith.constant 9.99999974E-6 : f32
    %457 = vector.broadcast %cst_166 : f32 to vector<8x1xf32>
    %458 = arith.addf %456, %457 : vector<8x1xf32>
    %459 = math.rsqrt %458 : vector<8x1xf32>
    %460 = vector.broadcast %459 : vector<8x1xf32> to vector<8x128xf32>
    %461 = arith.mulf %451, %460 : vector<8x128xf32>
    %c14_167 = arith.constant 14 : index
    %c0_168 = arith.constant 0 : index
    %462 = vector.load %arg1[%c14_167, %c0_168] : memref<32x128xf32, #tpu.memory_space<vmem>>, vector<1x128xf32>
    %463 = vector.broadcast %462 : vector<1x128xf32> to vector<8x128xf32>
    %464 = arith.mulf %461, %463 : vector<8x128xf32>
    %c15_169 = arith.constant 15 : index
    %c0_170 = arith.constant 0 : index
    %465 = vector.load %arg1[%c15_169, %c0_170] : memref<32x128xf32, #tpu.memory_space<vmem>>, vector<1x128xf32>
    %466 = vector.broadcast %465 : vector<1x128xf32> to vector<8x128xf32>
    %467 = arith.addf %464, %466 : vector<8x128xf32>
    %468 = vector.broadcast %237 : vector<1x128xf32> to vector<8x128xf32>
    %469 = arith.mulf %468, %388 : vector<8x128xf32>
    %470 = arith.addf %469, %467 : vector<8x128xf32>
    %471 = vector.broadcast %239 : vector<1x128xf32> to vector<8x128xf32>
    %472 = arith.mulf %471, %391 : vector<8x128xf32>
    %473 = vector.broadcast %238 : vector<1x128xf32> to vector<8x128xf32>
    %474 = arith.addf %473, %472 : vector<8x128xf32>
    %475 = arith.cmpf oge, %470, %474 : vector<8x128xf32>
    %476 = arith.extui %475 : vector<8x128xi1> to vector<8x128xi32>
    %477 = arith.sitofp %476 : vector<8x128xi32> to vector<8x128xf32>
    %478 = arith.mulf %477, %474 : vector<8x128xf32>
    %479 = arith.subf %470, %478 : vector<8x128xf32>
    %cst_171 = arith.constant 0.899999976 : f32
    %480 = vector.broadcast %cst_171 : f32 to vector<8x128xf32>
    %481 = arith.mulf %480, %391 : vector<8x128xf32>
    %482 = arith.addf %481, %477 : vector<8x128xf32>
    %c5_172 = arith.constant 5 : index
    %c0_173 = arith.constant 0 : index
    %c0_174 = arith.constant 0 : index
    %483 = vector.load %arg2[%c5_172, %c0_173, %c0_174] : memref<11x128x128xf32, #tpu.memory_space<vmem>>, vector<1x128x128xf32>
    %484 = vector.shape_cast %483 : vector<1x128x128xf32> to vector<128x128xf32>
    %cst_175 = arith.constant dense<0.000000e+00> : vector<8x128xf32>
    %485 = tpu.matmul %477, %484, %cst_175 {dimension_numbers = #tpu.dot_dimension_numbers<[1], [0], [0], [1], [0, 0, 1, 1], [], []>} : vector<8x128xf32>, vector<128x128xf32>, vector<8x128xf32> -> vector<8x128xf32>
    %c19_176 = arith.constant 19 : index
    %c0_177 = arith.constant 0 : index
    %486 = vector.load %arg1[%c19_176, %c0_177] : memref<32x128xf32, #tpu.memory_space<vmem>>, vector<1x128xf32>
    %487 = vector.broadcast %486 : vector<1x128xf32> to vector<8x128xf32>
    %488 = arith.addf %485, %487 : vector<8x128xf32>
    %cst_178 = arith.constant dense<0.000000e+00> : vector<8xf32>
    %489 = vector.multi_reduction <add>, %488, %cst_178 [1] : vector<8x128xf32> to vector<8xf32>
    %490 = vector.shape_cast %489 : vector<8xf32> to vector<8x1xf32>
    %cst_179 = arith.constant 6.250000e-02 : f32
    %491 = vector.broadcast %cst_179 : f32 to vector<8x1xf32>
    %492 = arith.mulf %490, %491 : vector<8x1xf32>
    %493 = vector.broadcast %492 : vector<8x1xf32> to vector<8x128xf32>
    %494 = arith.subf %488, %493 : vector<8x128xf32>
    %495 = vector.broadcast %13 : vector<1x128xf32> to vector<8x128xf32>
    %496 = arith.mulf %494, %495 : vector<8x128xf32>
    %497 = arith.mulf %496, %496 : vector<8x128xf32>
    %cst_180 = arith.constant dense<0.000000e+00> : vector<8xf32>
    %498 = vector.multi_reduction <add>, %497, %cst_180 [1] : vector<8x128xf32> to vector<8xf32>
    %499 = vector.shape_cast %498 : vector<8xf32> to vector<8x1xf32>
    %cst_181 = arith.constant 6.250000e-02 : f32
    %500 = vector.broadcast %cst_181 : f32 to vector<8x1xf32>
    %501 = arith.mulf %499, %500 : vector<8x1xf32>
    %cst_182 = arith.constant 9.99999974E-6 : f32
    %502 = vector.broadcast %cst_182 : f32 to vector<8x1xf32>
    %503 = arith.addf %501, %502 : vector<8x1xf32>
    %504 = math.rsqrt %503 : vector<8x1xf32>
    %505 = vector.broadcast %504 : vector<8x1xf32> to vector<8x128xf32>
    %506 = arith.mulf %496, %505 : vector<8x128xf32>
    %c20_183 = arith.constant 20 : index
    %c0_184 = arith.constant 0 : index
    %507 = vector.load %arg1[%c20_183, %c0_184] : memref<32x128xf32, #tpu.memory_space<vmem>>, vector<1x128xf32>
    %508 = vector.broadcast %507 : vector<1x128xf32> to vector<8x128xf32>
    %509 = arith.mulf %506, %508 : vector<8x128xf32>
    %c21_185 = arith.constant 21 : index
    %c0_186 = arith.constant 0 : index
    %510 = vector.load %arg1[%c21_185, %c0_186] : memref<32x128xf32, #tpu.memory_space<vmem>>, vector<1x128xf32>
    %511 = vector.broadcast %510 : vector<1x128xf32> to vector<8x128xf32>
    %512 = arith.addf %509, %511 : vector<8x128xf32>
    %513 = arith.addf %422, %512 : vector<8x128xf32>
    %514 = vector.broadcast %234 : vector<1x128xf32> to vector<8x128xf32>
    %515 = arith.mulf %514, %434 : vector<8x128xf32>
    %516 = arith.addf %515, %233 : vector<8x128xf32>
    %517 = vector.broadcast %236 : vector<1x128xf32> to vector<8x128xf32>
    %518 = arith.mulf %517, %437 : vector<8x128xf32>
    %519 = vector.broadcast %235 : vector<1x128xf32> to vector<8x128xf32>
    %520 = arith.addf %519, %518 : vector<8x128xf32>
    %521 = arith.cmpf oge, %516, %520 : vector<8x128xf32>
    %522 = arith.extui %521 : vector<8x128xi1> to vector<8x128xi32>
    %523 = arith.sitofp %522 : vector<8x128xi32> to vector<8x128xf32>
    %524 = arith.mulf %523, %520 : vector<8x128xf32>
    %525 = arith.subf %516, %524 : vector<8x128xf32>
    %cst_187 = arith.constant 0.899999976 : f32
    %526 = vector.broadcast %cst_187 : f32 to vector<8x128xf32>
    %527 = arith.mulf %526, %437 : vector<8x128xf32>
    %528 = arith.addf %527, %523 : vector<8x128xf32>
    %c4_188 = arith.constant 4 : index
    %c0_189 = arith.constant 0 : index
    %c0_190 = arith.constant 0 : index
    %529 = vector.load %arg2[%c4_188, %c0_189, %c0_190] : memref<11x128x128xf32, #tpu.memory_space<vmem>>, vector<1x128x128xf32>
    %530 = vector.shape_cast %529 : vector<1x128x128xf32> to vector<128x128xf32>
    %cst_191 = arith.constant dense<0.000000e+00> : vector<8x128xf32>
    %531 = tpu.matmul %523, %530, %cst_191 {dimension_numbers = #tpu.dot_dimension_numbers<[1], [0], [0], [1], [0, 0, 1, 1], [], []>} : vector<8x128xf32>, vector<128x128xf32>, vector<8x128xf32> -> vector<8x128xf32>
    %c13_192 = arith.constant 13 : index
    %c0_193 = arith.constant 0 : index
    %532 = vector.load %arg1[%c13_192, %c0_193] : memref<32x128xf32, #tpu.memory_space<vmem>>, vector<1x128xf32>
    %533 = vector.broadcast %532 : vector<1x128xf32> to vector<8x128xf32>
    %534 = arith.addf %531, %533 : vector<8x128xf32>
    %cst_194 = arith.constant dense<0.000000e+00> : vector<8xf32>
    %535 = vector.multi_reduction <add>, %534, %cst_194 [1] : vector<8x128xf32> to vector<8xf32>
    %536 = vector.shape_cast %535 : vector<8xf32> to vector<8x1xf32>
    %cst_195 = arith.constant 3.125000e-02 : f32
    %537 = vector.broadcast %cst_195 : f32 to vector<8x1xf32>
    %538 = arith.mulf %536, %537 : vector<8x1xf32>
    %539 = vector.broadcast %538 : vector<8x1xf32> to vector<8x128xf32>
    %540 = arith.subf %534, %539 : vector<8x128xf32>
    %541 = vector.broadcast %9 : vector<1x128xf32> to vector<8x128xf32>
    %542 = arith.mulf %540, %541 : vector<8x128xf32>
    %543 = arith.mulf %542, %542 : vector<8x128xf32>
    %cst_196 = arith.constant dense<0.000000e+00> : vector<8xf32>
    %544 = vector.multi_reduction <add>, %543, %cst_196 [1] : vector<8x128xf32> to vector<8xf32>
    %545 = vector.shape_cast %544 : vector<8xf32> to vector<8x1xf32>
    %cst_197 = arith.constant 3.125000e-02 : f32
    %546 = vector.broadcast %cst_197 : f32 to vector<8x1xf32>
    %547 = arith.mulf %545, %546 : vector<8x1xf32>
    %cst_198 = arith.constant 9.99999974E-6 : f32
    %548 = vector.broadcast %cst_198 : f32 to vector<8x1xf32>
    %549 = arith.addf %547, %548 : vector<8x1xf32>
    %550 = math.rsqrt %549 : vector<8x1xf32>
    %551 = vector.broadcast %550 : vector<8x1xf32> to vector<8x128xf32>
    %552 = arith.mulf %542, %551 : vector<8x128xf32>
    %c14_199 = arith.constant 14 : index
    %c0_200 = arith.constant 0 : index
    %553 = vector.load %arg1[%c14_199, %c0_200] : memref<32x128xf32, #tpu.memory_space<vmem>>, vector<1x128xf32>
    %554 = vector.broadcast %553 : vector<1x128xf32> to vector<8x128xf32>
    %555 = arith.mulf %552, %554 : vector<8x128xf32>
    %c15_201 = arith.constant 15 : index
    %c0_202 = arith.constant 0 : index
    %556 = vector.load %arg1[%c15_201, %c0_202] : memref<32x128xf32, #tpu.memory_space<vmem>>, vector<1x128xf32>
    %557 = vector.broadcast %556 : vector<1x128xf32> to vector<8x128xf32>
    %558 = arith.addf %555, %557 : vector<8x128xf32>
    %559 = vector.broadcast %237 : vector<1x128xf32> to vector<8x128xf32>
    %560 = arith.mulf %559, %479 : vector<8x128xf32>
    %561 = arith.addf %560, %558 : vector<8x128xf32>
    %562 = vector.broadcast %239 : vector<1x128xf32> to vector<8x128xf32>
    %563 = arith.mulf %562, %482 : vector<8x128xf32>
    %564 = vector.broadcast %238 : vector<1x128xf32> to vector<8x128xf32>
    %565 = arith.addf %564, %563 : vector<8x128xf32>
    %566 = arith.cmpf oge, %561, %565 : vector<8x128xf32>
    %567 = arith.extui %566 : vector<8x128xi1> to vector<8x128xi32>
    %568 = arith.sitofp %567 : vector<8x128xi32> to vector<8x128xf32>
    %569 = arith.mulf %568, %565 : vector<8x128xf32>
    %570 = arith.subf %561, %569 : vector<8x128xf32>
    %cst_203 = arith.constant 0.899999976 : f32
    %571 = vector.broadcast %cst_203 : f32 to vector<8x128xf32>
    %572 = arith.mulf %571, %482 : vector<8x128xf32>
    %573 = arith.addf %572, %568 : vector<8x128xf32>
    %c5_204 = arith.constant 5 : index
    %c0_205 = arith.constant 0 : index
    %c0_206 = arith.constant 0 : index
    %574 = vector.load %arg2[%c5_204, %c0_205, %c0_206] : memref<11x128x128xf32, #tpu.memory_space<vmem>>, vector<1x128x128xf32>
    %575 = vector.shape_cast %574 : vector<1x128x128xf32> to vector<128x128xf32>
    %cst_207 = arith.constant dense<0.000000e+00> : vector<8x128xf32>
    %576 = tpu.matmul %568, %575, %cst_207 {dimension_numbers = #tpu.dot_dimension_numbers<[1], [0], [0], [1], [0, 0, 1, 1], [], []>} : vector<8x128xf32>, vector<128x128xf32>, vector<8x128xf32> -> vector<8x128xf32>
    %c19_208 = arith.constant 19 : index
    %c0_209 = arith.constant 0 : index
    %577 = vector.load %arg1[%c19_208, %c0_209] : memref<32x128xf32, #tpu.memory_space<vmem>>, vector<1x128xf32>
    %578 = vector.broadcast %577 : vector<1x128xf32> to vector<8x128xf32>
    %579 = arith.addf %576, %578 : vector<8x128xf32>
    %cst_210 = arith.constant dense<0.000000e+00> : vector<8xf32>
    %580 = vector.multi_reduction <add>, %579, %cst_210 [1] : vector<8x128xf32> to vector<8xf32>
    %581 = vector.shape_cast %580 : vector<8xf32> to vector<8x1xf32>
    %cst_211 = arith.constant 6.250000e-02 : f32
    %582 = vector.broadcast %cst_211 : f32 to vector<8x1xf32>
    %583 = arith.mulf %581, %582 : vector<8x1xf32>
    %584 = vector.broadcast %583 : vector<8x1xf32> to vector<8x128xf32>
    %585 = arith.subf %579, %584 : vector<8x128xf32>
    %586 = vector.broadcast %13 : vector<1x128xf32> to vector<8x128xf32>
    %587 = arith.mulf %585, %586 : vector<8x128xf32>
    %588 = arith.mulf %587, %587 : vector<8x128xf32>
    %cst_212 = arith.constant dense<0.000000e+00> : vector<8xf32>
    %589 = vector.multi_reduction <add>, %588, %cst_212 [1] : vector<8x128xf32> to vector<8xf32>
    %590 = vector.shape_cast %589 : vector<8xf32> to vector<8x1xf32>
    %cst_213 = arith.constant 6.250000e-02 : f32
    %591 = vector.broadcast %cst_213 : f32 to vector<8x1xf32>
    %592 = arith.mulf %590, %591 : vector<8x1xf32>
    %cst_214 = arith.constant 9.99999974E-6 : f32
    %593 = vector.broadcast %cst_214 : f32 to vector<8x1xf32>
    %594 = arith.addf %592, %593 : vector<8x1xf32>
    %595 = math.rsqrt %594 : vector<8x1xf32>
    %596 = vector.broadcast %595 : vector<8x1xf32> to vector<8x128xf32>
    %597 = arith.mulf %587, %596 : vector<8x128xf32>
    %c20_215 = arith.constant 20 : index
    %c0_216 = arith.constant 0 : index
    %598 = vector.load %arg1[%c20_215, %c0_216] : memref<32x128xf32, #tpu.memory_space<vmem>>, vector<1x128xf32>
    %599 = vector.broadcast %598 : vector<1x128xf32> to vector<8x128xf32>
    %600 = arith.mulf %597, %599 : vector<8x128xf32>
    %c21_217 = arith.constant 21 : index
    %c0_218 = arith.constant 0 : index
    %601 = vector.load %arg1[%c21_217, %c0_218] : memref<32x128xf32, #tpu.memory_space<vmem>>, vector<1x128xf32>
    %602 = vector.broadcast %601 : vector<1x128xf32> to vector<8x128xf32>
    %603 = arith.addf %600, %602 : vector<8x128xf32>
    %604 = arith.addf %513, %603 : vector<8x128xf32>
    %605 = vector.broadcast %234 : vector<1x128xf32> to vector<8x128xf32>
    %606 = arith.mulf %605, %525 : vector<8x128xf32>
    %607 = arith.addf %606, %233 : vector<8x128xf32>
    %608 = vector.broadcast %236 : vector<1x128xf32> to vector<8x128xf32>
    %609 = arith.mulf %608, %528 : vector<8x128xf32>
    %610 = vector.broadcast %235 : vector<1x128xf32> to vector<8x128xf32>
    %611 = arith.addf %610, %609 : vector<8x128xf32>
    %612 = arith.cmpf oge, %607, %611 : vector<8x128xf32>
    %613 = arith.extui %612 : vector<8x128xi1> to vector<8x128xi32>
    %614 = arith.sitofp %613 : vector<8x128xi32> to vector<8x128xf32>
    %615 = arith.mulf %614, %611 : vector<8x128xf32>
    %616 = arith.subf %607, %615 : vector<8x128xf32>
    %cst_219 = arith.constant 0.899999976 : f32
    %617 = vector.broadcast %cst_219 : f32 to vector<8x128xf32>
    %618 = arith.mulf %617, %528 : vector<8x128xf32>
    %619 = arith.addf %618, %614 : vector<8x128xf32>
    %c4_220 = arith.constant 4 : index
    %c0_221 = arith.constant 0 : index
    %c0_222 = arith.constant 0 : index
    %620 = vector.load %arg2[%c4_220, %c0_221, %c0_222] : memref<11x128x128xf32, #tpu.memory_space<vmem>>, vector<1x128x128xf32>
    %621 = vector.shape_cast %620 : vector<1x128x128xf32> to vector<128x128xf32>
    %cst_223 = arith.constant dense<0.000000e+00> : vector<8x128xf32>
    %622 = tpu.matmul %614, %621, %cst_223 {dimension_numbers = #tpu.dot_dimension_numbers<[1], [0], [0], [1], [0, 0, 1, 1], [], []>} : vector<8x128xf32>, vector<128x128xf32>, vector<8x128xf32> -> vector<8x128xf32>
    %c13_224 = arith.constant 13 : index
    %c0_225 = arith.constant 0 : index
    %623 = vector.load %arg1[%c13_224, %c0_225] : memref<32x128xf32, #tpu.memory_space<vmem>>, vector<1x128xf32>
    %624 = vector.broadcast %623 : vector<1x128xf32> to vector<8x128xf32>
    %625 = arith.addf %622, %624 : vector<8x128xf32>
    %cst_226 = arith.constant dense<0.000000e+00> : vector<8xf32>
    %626 = vector.multi_reduction <add>, %625, %cst_226 [1] : vector<8x128xf32> to vector<8xf32>
    %627 = vector.shape_cast %626 : vector<8xf32> to vector<8x1xf32>
    %cst_227 = arith.constant 3.125000e-02 : f32
    %628 = vector.broadcast %cst_227 : f32 to vector<8x1xf32>
    %629 = arith.mulf %627, %628 : vector<8x1xf32>
    %630 = vector.broadcast %629 : vector<8x1xf32> to vector<8x128xf32>
    %631 = arith.subf %625, %630 : vector<8x128xf32>
    %632 = vector.broadcast %9 : vector<1x128xf32> to vector<8x128xf32>
    %633 = arith.mulf %631, %632 : vector<8x128xf32>
    %634 = arith.mulf %633, %633 : vector<8x128xf32>
    %cst_228 = arith.constant dense<0.000000e+00> : vector<8xf32>
    %635 = vector.multi_reduction <add>, %634, %cst_228 [1] : vector<8x128xf32> to vector<8xf32>
    %636 = vector.shape_cast %635 : vector<8xf32> to vector<8x1xf32>
    %cst_229 = arith.constant 3.125000e-02 : f32
    %637 = vector.broadcast %cst_229 : f32 to vector<8x1xf32>
    %638 = arith.mulf %636, %637 : vector<8x1xf32>
    %cst_230 = arith.constant 9.99999974E-6 : f32
    %639 = vector.broadcast %cst_230 : f32 to vector<8x1xf32>
    %640 = arith.addf %638, %639 : vector<8x1xf32>
    %641 = math.rsqrt %640 : vector<8x1xf32>
    %642 = vector.broadcast %641 : vector<8x1xf32> to vector<8x128xf32>
    %643 = arith.mulf %633, %642 : vector<8x128xf32>
    %c14_231 = arith.constant 14 : index
    %c0_232 = arith.constant 0 : index
    %644 = vector.load %arg1[%c14_231, %c0_232] : memref<32x128xf32, #tpu.memory_space<vmem>>, vector<1x128xf32>
    %645 = vector.broadcast %644 : vector<1x128xf32> to vector<8x128xf32>
    %646 = arith.mulf %643, %645 : vector<8x128xf32>
    %c15_233 = arith.constant 15 : index
    %c0_234 = arith.constant 0 : index
    %647 = vector.load %arg1[%c15_233, %c0_234] : memref<32x128xf32, #tpu.memory_space<vmem>>, vector<1x128xf32>
    %648 = vector.broadcast %647 : vector<1x128xf32> to vector<8x128xf32>
    %649 = arith.addf %646, %648 : vector<8x128xf32>
    %650 = vector.broadcast %237 : vector<1x128xf32> to vector<8x128xf32>
    %651 = arith.mulf %650, %570 : vector<8x128xf32>
    %652 = arith.addf %651, %649 : vector<8x128xf32>
    %653 = vector.broadcast %239 : vector<1x128xf32> to vector<8x128xf32>
    %654 = arith.mulf %653, %573 : vector<8x128xf32>
    %655 = vector.broadcast %238 : vector<1x128xf32> to vector<8x128xf32>
    %656 = arith.addf %655, %654 : vector<8x128xf32>
    %657 = arith.cmpf oge, %652, %656 : vector<8x128xf32>
    %658 = arith.extui %657 : vector<8x128xi1> to vector<8x128xi32>
    %659 = arith.sitofp %658 : vector<8x128xi32> to vector<8x128xf32>
    %660 = arith.mulf %659, %656 : vector<8x128xf32>
    %661 = arith.subf %652, %660 : vector<8x128xf32>
    %cst_235 = arith.constant 0.899999976 : f32
    %662 = vector.broadcast %cst_235 : f32 to vector<8x128xf32>
    %663 = arith.mulf %662, %573 : vector<8x128xf32>
    %664 = arith.addf %663, %659 : vector<8x128xf32>
    %c5_236 = arith.constant 5 : index
    %c0_237 = arith.constant 0 : index
    %c0_238 = arith.constant 0 : index
    %665 = vector.load %arg2[%c5_236, %c0_237, %c0_238] : memref<11x128x128xf32, #tpu.memory_space<vmem>>, vector<1x128x128xf32>
    %666 = vector.shape_cast %665 : vector<1x128x128xf32> to vector<128x128xf32>
    %cst_239 = arith.constant dense<0.000000e+00> : vector<8x128xf32>
    %667 = tpu.matmul %659, %666, %cst_239 {dimension_numbers = #tpu.dot_dimension_numbers<[1], [0], [0], [1], [0, 0, 1, 1], [], []>} : vector<8x128xf32>, vector<128x128xf32>, vector<8x128xf32> -> vector<8x128xf32>
    %c19_240 = arith.constant 19 : index
    %c0_241 = arith.constant 0 : index
    %668 = vector.load %arg1[%c19_240, %c0_241] : memref<32x128xf32, #tpu.memory_space<vmem>>, vector<1x128xf32>
    %669 = vector.broadcast %668 : vector<1x128xf32> to vector<8x128xf32>
    %670 = arith.addf %667, %669 : vector<8x128xf32>
    %cst_242 = arith.constant dense<0.000000e+00> : vector<8xf32>
    %671 = vector.multi_reduction <add>, %670, %cst_242 [1] : vector<8x128xf32> to vector<8xf32>
    %672 = vector.shape_cast %671 : vector<8xf32> to vector<8x1xf32>
    %cst_243 = arith.constant 6.250000e-02 : f32
    %673 = vector.broadcast %cst_243 : f32 to vector<8x1xf32>
    %674 = arith.mulf %672, %673 : vector<8x1xf32>
    %675 = vector.broadcast %674 : vector<8x1xf32> to vector<8x128xf32>
    %676 = arith.subf %670, %675 : vector<8x128xf32>
    %677 = vector.broadcast %13 : vector<1x128xf32> to vector<8x128xf32>
    %678 = arith.mulf %676, %677 : vector<8x128xf32>
    %679 = arith.mulf %678, %678 : vector<8x128xf32>
    %cst_244 = arith.constant dense<0.000000e+00> : vector<8xf32>
    %680 = vector.multi_reduction <add>, %679, %cst_244 [1] : vector<8x128xf32> to vector<8xf32>
    %681 = vector.shape_cast %680 : vector<8xf32> to vector<8x1xf32>
    %cst_245 = arith.constant 6.250000e-02 : f32
    %682 = vector.broadcast %cst_245 : f32 to vector<8x1xf32>
    %683 = arith.mulf %681, %682 : vector<8x1xf32>
    %cst_246 = arith.constant 9.99999974E-6 : f32
    %684 = vector.broadcast %cst_246 : f32 to vector<8x1xf32>
    %685 = arith.addf %683, %684 : vector<8x1xf32>
    %686 = math.rsqrt %685 : vector<8x1xf32>
    %687 = vector.broadcast %686 : vector<8x1xf32> to vector<8x128xf32>
    %688 = arith.mulf %678, %687 : vector<8x128xf32>
    %c20_247 = arith.constant 20 : index
    %c0_248 = arith.constant 0 : index
    %689 = vector.load %arg1[%c20_247, %c0_248] : memref<32x128xf32, #tpu.memory_space<vmem>>, vector<1x128xf32>
    %690 = vector.broadcast %689 : vector<1x128xf32> to vector<8x128xf32>
    %691 = arith.mulf %688, %690 : vector<8x128xf32>
    %c21_249 = arith.constant 21 : index
    %c0_250 = arith.constant 0 : index
    %692 = vector.load %arg1[%c21_249, %c0_250] : memref<32x128xf32, #tpu.memory_space<vmem>>, vector<1x128xf32>
    %693 = vector.broadcast %692 : vector<1x128xf32> to vector<8x128xf32>
    %694 = arith.addf %691, %693 : vector<8x128xf32>
    %695 = arith.addf %604, %694 : vector<8x128xf32>
    %696 = vector.broadcast %234 : vector<1x128xf32> to vector<8x128xf32>
    %697 = arith.mulf %696, %616 : vector<8x128xf32>
    %698 = arith.addf %697, %233 : vector<8x128xf32>
    %699 = vector.broadcast %236 : vector<1x128xf32> to vector<8x128xf32>
    %700 = arith.mulf %699, %619 : vector<8x128xf32>
    %701 = vector.broadcast %235 : vector<1x128xf32> to vector<8x128xf32>
    %702 = arith.addf %701, %700 : vector<8x128xf32>
    %703 = arith.cmpf oge, %698, %702 : vector<8x128xf32>
    %704 = arith.extui %703 : vector<8x128xi1> to vector<8x128xi32>
    %705 = arith.sitofp %704 : vector<8x128xi32> to vector<8x128xf32>
    %706 = arith.mulf %705, %702 : vector<8x128xf32>
    %707 = arith.subf %698, %706 : vector<8x128xf32>
    %cst_251 = arith.constant 0.899999976 : f32
    %708 = vector.broadcast %cst_251 : f32 to vector<8x128xf32>
    %709 = arith.mulf %708, %619 : vector<8x128xf32>
    %710 = arith.addf %709, %705 : vector<8x128xf32>
    %c4_252 = arith.constant 4 : index
    %c0_253 = arith.constant 0 : index
    %c0_254 = arith.constant 0 : index
    %711 = vector.load %arg2[%c4_252, %c0_253, %c0_254] : memref<11x128x128xf32, #tpu.memory_space<vmem>>, vector<1x128x128xf32>
    %712 = vector.shape_cast %711 : vector<1x128x128xf32> to vector<128x128xf32>
    %cst_255 = arith.constant dense<0.000000e+00> : vector<8x128xf32>
    %713 = tpu.matmul %705, %712, %cst_255 {dimension_numbers = #tpu.dot_dimension_numbers<[1], [0], [0], [1], [0, 0, 1, 1], [], []>} : vector<8x128xf32>, vector<128x128xf32>, vector<8x128xf32> -> vector<8x128xf32>
    %c13_256 = arith.constant 13 : index
    %c0_257 = arith.constant 0 : index
    %714 = vector.load %arg1[%c13_256, %c0_257] : memref<32x128xf32, #tpu.memory_space<vmem>>, vector<1x128xf32>
    %715 = vector.broadcast %714 : vector<1x128xf32> to vector<8x128xf32>
    %716 = arith.addf %713, %715 : vector<8x128xf32>
    %cst_258 = arith.constant dense<0.000000e+00> : vector<8xf32>
    %717 = vector.multi_reduction <add>, %716, %cst_258 [1] : vector<8x128xf32> to vector<8xf32>
    %718 = vector.shape_cast %717 : vector<8xf32> to vector<8x1xf32>
    %cst_259 = arith.constant 3.125000e-02 : f32
    %719 = vector.broadcast %cst_259 : f32 to vector<8x1xf32>
    %720 = arith.mulf %718, %719 : vector<8x1xf32>
    %721 = vector.broadcast %720 : vector<8x1xf32> to vector<8x128xf32>
    %722 = arith.subf %716, %721 : vector<8x128xf32>
    %723 = vector.broadcast %9 : vector<1x128xf32> to vector<8x128xf32>
    %724 = arith.mulf %722, %723 : vector<8x128xf32>
    %725 = arith.mulf %724, %724 : vector<8x128xf32>
    %cst_260 = arith.constant dense<0.000000e+00> : vector<8xf32>
    %726 = vector.multi_reduction <add>, %725, %cst_260 [1] : vector<8x128xf32> to vector<8xf32>
    %727 = vector.shape_cast %726 : vector<8xf32> to vector<8x1xf32>
    %cst_261 = arith.constant 3.125000e-02 : f32
    %728 = vector.broadcast %cst_261 : f32 to vector<8x1xf32>
    %729 = arith.mulf %727, %728 : vector<8x1xf32>
    %cst_262 = arith.constant 9.99999974E-6 : f32
    %730 = vector.broadcast %cst_262 : f32 to vector<8x1xf32>
    %731 = arith.addf %729, %730 : vector<8x1xf32>
    %732 = math.rsqrt %731 : vector<8x1xf32>
    %733 = vector.broadcast %732 : vector<8x1xf32> to vector<8x128xf32>
    %734 = arith.mulf %724, %733 : vector<8x128xf32>
    %c14_263 = arith.constant 14 : index
    %c0_264 = arith.constant 0 : index
    %735 = vector.load %arg1[%c14_263, %c0_264] : memref<32x128xf32, #tpu.memory_space<vmem>>, vector<1x128xf32>
    %736 = vector.broadcast %735 : vector<1x128xf32> to vector<8x128xf32>
    %737 = arith.mulf %734, %736 : vector<8x128xf32>
    %c15_265 = arith.constant 15 : index
    %c0_266 = arith.constant 0 : index
    %738 = vector.load %arg1[%c15_265, %c0_266] : memref<32x128xf32, #tpu.memory_space<vmem>>, vector<1x128xf32>
    %739 = vector.broadcast %738 : vector<1x128xf32> to vector<8x128xf32>
    %740 = arith.addf %737, %739 : vector<8x128xf32>
    %741 = vector.broadcast %237 : vector<1x128xf32> to vector<8x128xf32>
    %742 = arith.mulf %741, %661 : vector<8x128xf32>
    %743 = arith.addf %742, %740 : vector<8x128xf32>
    %744 = vector.broadcast %239 : vector<1x128xf32> to vector<8x128xf32>
    %745 = arith.mulf %744, %664 : vector<8x128xf32>
    %746 = vector.broadcast %238 : vector<1x128xf32> to vector<8x128xf32>
    %747 = arith.addf %746, %745 : vector<8x128xf32>
    %748 = arith.cmpf oge, %743, %747 : vector<8x128xf32>
    %749 = arith.extui %748 : vector<8x128xi1> to vector<8x128xi32>
    %750 = arith.sitofp %749 : vector<8x128xi32> to vector<8x128xf32>
    %751 = arith.mulf %750, %747 : vector<8x128xf32>
    %752 = arith.subf %743, %751 : vector<8x128xf32>
    %cst_267 = arith.constant 0.899999976 : f32
    %753 = vector.broadcast %cst_267 : f32 to vector<8x128xf32>
    %754 = arith.mulf %753, %664 : vector<8x128xf32>
    %755 = arith.addf %754, %750 : vector<8x128xf32>
    %c5_268 = arith.constant 5 : index
    %c0_269 = arith.constant 0 : index
    %c0_270 = arith.constant 0 : index
    %756 = vector.load %arg2[%c5_268, %c0_269, %c0_270] : memref<11x128x128xf32, #tpu.memory_space<vmem>>, vector<1x128x128xf32>
    %757 = vector.shape_cast %756 : vector<1x128x128xf32> to vector<128x128xf32>
    %cst_271 = arith.constant dense<0.000000e+00> : vector<8x128xf32>
    %758 = tpu.matmul %750, %757, %cst_271 {dimension_numbers = #tpu.dot_dimension_numbers<[1], [0], [0], [1], [0, 0, 1, 1], [], []>} : vector<8x128xf32>, vector<128x128xf32>, vector<8x128xf32> -> vector<8x128xf32>
    %c19_272 = arith.constant 19 : index
    %c0_273 = arith.constant 0 : index
    %759 = vector.load %arg1[%c19_272, %c0_273] : memref<32x128xf32, #tpu.memory_space<vmem>>, vector<1x128xf32>
    %760 = vector.broadcast %759 : vector<1x128xf32> to vector<8x128xf32>
    %761 = arith.addf %758, %760 : vector<8x128xf32>
    %cst_274 = arith.constant dense<0.000000e+00> : vector<8xf32>
    %762 = vector.multi_reduction <add>, %761, %cst_274 [1] : vector<8x128xf32> to vector<8xf32>
    %763 = vector.shape_cast %762 : vector<8xf32> to vector<8x1xf32>
    %cst_275 = arith.constant 6.250000e-02 : f32
    %764 = vector.broadcast %cst_275 : f32 to vector<8x1xf32>
    %765 = arith.mulf %763, %764 : vector<8x1xf32>
    %766 = vector.broadcast %765 : vector<8x1xf32> to vector<8x128xf32>
    %767 = arith.subf %761, %766 : vector<8x128xf32>
    %768 = vector.broadcast %13 : vector<1x128xf32> to vector<8x128xf32>
    %769 = arith.mulf %767, %768 : vector<8x128xf32>
    %770 = arith.mulf %769, %769 : vector<8x128xf32>
    %cst_276 = arith.constant dense<0.000000e+00> : vector<8xf32>
    %771 = vector.multi_reduction <add>, %770, %cst_276 [1] : vector<8x128xf32> to vector<8xf32>
    %772 = vector.shape_cast %771 : vector<8xf32> to vector<8x1xf32>
    %cst_277 = arith.constant 6.250000e-02 : f32
    %773 = vector.broadcast %cst_277 : f32 to vector<8x1xf32>
    %774 = arith.mulf %772, %773 : vector<8x1xf32>
    %cst_278 = arith.constant 9.99999974E-6 : f32
    %775 = vector.broadcast %cst_278 : f32 to vector<8x1xf32>
    %776 = arith.addf %774, %775 : vector<8x1xf32>
    %777 = math.rsqrt %776 : vector<8x1xf32>
    %778 = vector.broadcast %777 : vector<8x1xf32> to vector<8x128xf32>
    %779 = arith.mulf %769, %778 : vector<8x128xf32>
    %c20_279 = arith.constant 20 : index
    %c0_280 = arith.constant 0 : index
    %780 = vector.load %arg1[%c20_279, %c0_280] : memref<32x128xf32, #tpu.memory_space<vmem>>, vector<1x128xf32>
    %781 = vector.broadcast %780 : vector<1x128xf32> to vector<8x128xf32>
    %782 = arith.mulf %779, %781 : vector<8x128xf32>
    %c21_281 = arith.constant 21 : index
    %c0_282 = arith.constant 0 : index
    %783 = vector.load %arg1[%c21_281, %c0_282] : memref<32x128xf32, #tpu.memory_space<vmem>>, vector<1x128xf32>
    %784 = vector.broadcast %783 : vector<1x128xf32> to vector<8x128xf32>
    %785 = arith.addf %782, %784 : vector<8x128xf32>
    %786 = arith.addf %695, %785 : vector<8x128xf32>
    %787 = vector.broadcast %234 : vector<1x128xf32> to vector<8x128xf32>
    %788 = arith.mulf %787, %707 : vector<8x128xf32>
    %789 = arith.addf %788, %233 : vector<8x128xf32>
    %790 = vector.broadcast %236 : vector<1x128xf32> to vector<8x128xf32>
    %791 = arith.mulf %790, %710 : vector<8x128xf32>
    %792 = vector.broadcast %235 : vector<1x128xf32> to vector<8x128xf32>
    %793 = arith.addf %792, %791 : vector<8x128xf32>
    %794 = arith.cmpf oge, %789, %793 : vector<8x128xf32>
    %795 = arith.extui %794 : vector<8x128xi1> to vector<8x128xi32>
    %796 = arith.sitofp %795 : vector<8x128xi32> to vector<8x128xf32>
    %797 = arith.mulf %796, %793 : vector<8x128xf32>
    %798 = arith.subf %789, %797 : vector<8x128xf32>
    %cst_283 = arith.constant 0.899999976 : f32
    %799 = vector.broadcast %cst_283 : f32 to vector<8x128xf32>
    %800 = arith.mulf %799, %710 : vector<8x128xf32>
    %801 = arith.addf %800, %796 : vector<8x128xf32>
    %c4_284 = arith.constant 4 : index
    %c0_285 = arith.constant 0 : index
    %c0_286 = arith.constant 0 : index
    %802 = vector.load %arg2[%c4_284, %c0_285, %c0_286] : memref<11x128x128xf32, #tpu.memory_space<vmem>>, vector<1x128x128xf32>
    %803 = vector.shape_cast %802 : vector<1x128x128xf32> to vector<128x128xf32>
    %cst_287 = arith.constant dense<0.000000e+00> : vector<8x128xf32>
    %804 = tpu.matmul %796, %803, %cst_287 {dimension_numbers = #tpu.dot_dimension_numbers<[1], [0], [0], [1], [0, 0, 1, 1], [], []>} : vector<8x128xf32>, vector<128x128xf32>, vector<8x128xf32> -> vector<8x128xf32>
    %c13_288 = arith.constant 13 : index
    %c0_289 = arith.constant 0 : index
    %805 = vector.load %arg1[%c13_288, %c0_289] : memref<32x128xf32, #tpu.memory_space<vmem>>, vector<1x128xf32>
    %806 = vector.broadcast %805 : vector<1x128xf32> to vector<8x128xf32>
    %807 = arith.addf %804, %806 : vector<8x128xf32>
    %cst_290 = arith.constant dense<0.000000e+00> : vector<8xf32>
    %808 = vector.multi_reduction <add>, %807, %cst_290 [1] : vector<8x128xf32> to vector<8xf32>
    %809 = vector.shape_cast %808 : vector<8xf32> to vector<8x1xf32>
    %cst_291 = arith.constant 3.125000e-02 : f32
    %810 = vector.broadcast %cst_291 : f32 to vector<8x1xf32>
    %811 = arith.mulf %809, %810 : vector<8x1xf32>
    %812 = vector.broadcast %811 : vector<8x1xf32> to vector<8x128xf32>
    %813 = arith.subf %807, %812 : vector<8x128xf32>
    %814 = vector.broadcast %9 : vector<1x128xf32> to vector<8x128xf32>
    %815 = arith.mulf %813, %814 : vector<8x128xf32>
    %816 = arith.mulf %815, %815 : vector<8x128xf32>
    %cst_292 = arith.constant dense<0.000000e+00> : vector<8xf32>
    %817 = vector.multi_reduction <add>, %816, %cst_292 [1] : vector<8x128xf32> to vector<8xf32>
    %818 = vector.shape_cast %817 : vector<8xf32> to vector<8x1xf32>
    %cst_293 = arith.constant 3.125000e-02 : f32
    %819 = vector.broadcast %cst_293 : f32 to vector<8x1xf32>
    %820 = arith.mulf %818, %819 : vector<8x1xf32>
    %cst_294 = arith.constant 9.99999974E-6 : f32
    %821 = vector.broadcast %cst_294 : f32 to vector<8x1xf32>
    %822 = arith.addf %820, %821 : vector<8x1xf32>
    %823 = math.rsqrt %822 : vector<8x1xf32>
    %824 = vector.broadcast %823 : vector<8x1xf32> to vector<8x128xf32>
    %825 = arith.mulf %815, %824 : vector<8x128xf32>
    %c14_295 = arith.constant 14 : index
    %c0_296 = arith.constant 0 : index
    %826 = vector.load %arg1[%c14_295, %c0_296] : memref<32x128xf32, #tpu.memory_space<vmem>>, vector<1x128xf32>
    %827 = vector.broadcast %826 : vector<1x128xf32> to vector<8x128xf32>
    %828 = arith.mulf %825, %827 : vector<8x128xf32>
    %c15_297 = arith.constant 15 : index
    %c0_298 = arith.constant 0 : index
    %829 = vector.load %arg1[%c15_297, %c0_298] : memref<32x128xf32, #tpu.memory_space<vmem>>, vector<1x128xf32>
    %830 = vector.broadcast %829 : vector<1x128xf32> to vector<8x128xf32>
    %831 = arith.addf %828, %830 : vector<8x128xf32>
    %832 = vector.broadcast %237 : vector<1x128xf32> to vector<8x128xf32>
    %833 = arith.mulf %832, %752 : vector<8x128xf32>
    %834 = arith.addf %833, %831 : vector<8x128xf32>
    %835 = vector.broadcast %239 : vector<1x128xf32> to vector<8x128xf32>
    %836 = arith.mulf %835, %755 : vector<8x128xf32>
    %837 = vector.broadcast %238 : vector<1x128xf32> to vector<8x128xf32>
    %838 = arith.addf %837, %836 : vector<8x128xf32>
    %839 = arith.cmpf oge, %834, %838 : vector<8x128xf32>
    %840 = arith.extui %839 : vector<8x128xi1> to vector<8x128xi32>
    %841 = arith.sitofp %840 : vector<8x128xi32> to vector<8x128xf32>
    %842 = arith.mulf %841, %838 : vector<8x128xf32>
    %843 = arith.subf %834, %842 : vector<8x128xf32>
    %cst_299 = arith.constant 0.899999976 : f32
    %844 = vector.broadcast %cst_299 : f32 to vector<8x128xf32>
    %845 = arith.mulf %844, %755 : vector<8x128xf32>
    %846 = arith.addf %845, %841 : vector<8x128xf32>
    %c5_300 = arith.constant 5 : index
    %c0_301 = arith.constant 0 : index
    %c0_302 = arith.constant 0 : index
    %847 = vector.load %arg2[%c5_300, %c0_301, %c0_302] : memref<11x128x128xf32, #tpu.memory_space<vmem>>, vector<1x128x128xf32>
    %848 = vector.shape_cast %847 : vector<1x128x128xf32> to vector<128x128xf32>
    %cst_303 = arith.constant dense<0.000000e+00> : vector<8x128xf32>
    %849 = tpu.matmul %841, %848, %cst_303 {dimension_numbers = #tpu.dot_dimension_numbers<[1], [0], [0], [1], [0, 0, 1, 1], [], []>} : vector<8x128xf32>, vector<128x128xf32>, vector<8x128xf32> -> vector<8x128xf32>
    %c19_304 = arith.constant 19 : index
    %c0_305 = arith.constant 0 : index
    %850 = vector.load %arg1[%c19_304, %c0_305] : memref<32x128xf32, #tpu.memory_space<vmem>>, vector<1x128xf32>
    %851 = vector.broadcast %850 : vector<1x128xf32> to vector<8x128xf32>
    %852 = arith.addf %849, %851 : vector<8x128xf32>
    %cst_306 = arith.constant dense<0.000000e+00> : vector<8xf32>
    %853 = vector.multi_reduction <add>, %852, %cst_306 [1] : vector<8x128xf32> to vector<8xf32>
    %854 = vector.shape_cast %853 : vector<8xf32> to vector<8x1xf32>
    %cst_307 = arith.constant 6.250000e-02 : f32
    %855 = vector.broadcast %cst_307 : f32 to vector<8x1xf32>
    %856 = arith.mulf %854, %855 : vector<8x1xf32>
    %857 = vector.broadcast %856 : vector<8x1xf32> to vector<8x128xf32>
    %858 = arith.subf %852, %857 : vector<8x128xf32>
    %859 = vector.broadcast %13 : vector<1x128xf32> to vector<8x128xf32>
    %860 = arith.mulf %858, %859 : vector<8x128xf32>
    %861 = arith.mulf %860, %860 : vector<8x128xf32>
    %cst_308 = arith.constant dense<0.000000e+00> : vector<8xf32>
    %862 = vector.multi_reduction <add>, %861, %cst_308 [1] : vector<8x128xf32> to vector<8xf32>
    %863 = vector.shape_cast %862 : vector<8xf32> to vector<8x1xf32>
    %cst_309 = arith.constant 6.250000e-02 : f32
    %864 = vector.broadcast %cst_309 : f32 to vector<8x1xf32>
    %865 = arith.mulf %863, %864 : vector<8x1xf32>
    %cst_310 = arith.constant 9.99999974E-6 : f32
    %866 = vector.broadcast %cst_310 : f32 to vector<8x1xf32>
    %867 = arith.addf %865, %866 : vector<8x1xf32>
    %868 = math.rsqrt %867 : vector<8x1xf32>
    %869 = vector.broadcast %868 : vector<8x1xf32> to vector<8x128xf32>
    %870 = arith.mulf %860, %869 : vector<8x128xf32>
    %c20_311 = arith.constant 20 : index
    %c0_312 = arith.constant 0 : index
    %871 = vector.load %arg1[%c20_311, %c0_312] : memref<32x128xf32, #tpu.memory_space<vmem>>, vector<1x128xf32>
    %872 = vector.broadcast %871 : vector<1x128xf32> to vector<8x128xf32>
    %873 = arith.mulf %870, %872 : vector<8x128xf32>
    %c21_313 = arith.constant 21 : index
    %c0_314 = arith.constant 0 : index
    %874 = vector.load %arg1[%c21_313, %c0_314] : memref<32x128xf32, #tpu.memory_space<vmem>>, vector<1x128xf32>
    %875 = vector.broadcast %874 : vector<1x128xf32> to vector<8x128xf32>
    %876 = arith.addf %873, %875 : vector<8x128xf32>
    %877 = arith.addf %786, %876 : vector<8x128xf32>
    %878 = vector.broadcast %234 : vector<1x128xf32> to vector<8x128xf32>
    %879 = arith.mulf %878, %798 : vector<8x128xf32>
    %880 = arith.addf %879, %233 : vector<8x128xf32>
    %881 = vector.broadcast %236 : vector<1x128xf32> to vector<8x128xf32>
    %882 = arith.mulf %881, %801 : vector<8x128xf32>
    %883 = vector.broadcast %235 : vector<1x128xf32> to vector<8x128xf32>
    %884 = arith.addf %883, %882 : vector<8x128xf32>
    %885 = arith.cmpf oge, %880, %884 : vector<8x128xf32>
    %886 = arith.extui %885 : vector<8x128xi1> to vector<8x128xi32>
    %887 = arith.sitofp %886 : vector<8x128xi32> to vector<8x128xf32>
    %c4_315 = arith.constant 4 : index
    %c0_316 = arith.constant 0 : index
    %c0_317 = arith.constant 0 : index
    %888 = vector.load %arg2[%c4_315, %c0_316, %c0_317] : memref<11x128x128xf32, #tpu.memory_space<vmem>>, vector<1x128x128xf32>
    %889 = vector.shape_cast %888 : vector<1x128x128xf32> to vector<128x128xf32>
    %cst_318 = arith.constant dense<0.000000e+00> : vector<8x128xf32>
    %890 = tpu.matmul %887, %889, %cst_318 {dimension_numbers = #tpu.dot_dimension_numbers<[1], [0], [0], [1], [0, 0, 1, 1], [], []>} : vector<8x128xf32>, vector<128x128xf32>, vector<8x128xf32> -> vector<8x128xf32>
    %c13_319 = arith.constant 13 : index
    %c0_320 = arith.constant 0 : index
    %891 = vector.load %arg1[%c13_319, %c0_320] : memref<32x128xf32, #tpu.memory_space<vmem>>, vector<1x128xf32>
    %892 = vector.broadcast %891 : vector<1x128xf32> to vector<8x128xf32>
    %893 = arith.addf %890, %892 : vector<8x128xf32>
    %cst_321 = arith.constant dense<0.000000e+00> : vector<8xf32>
    %894 = vector.multi_reduction <add>, %893, %cst_321 [1] : vector<8x128xf32> to vector<8xf32>
    %895 = vector.shape_cast %894 : vector<8xf32> to vector<8x1xf32>
    %cst_322 = arith.constant 3.125000e-02 : f32
    %896 = vector.broadcast %cst_322 : f32 to vector<8x1xf32>
    %897 = arith.mulf %895, %896 : vector<8x1xf32>
    %898 = vector.broadcast %897 : vector<8x1xf32> to vector<8x128xf32>
    %899 = arith.subf %893, %898 : vector<8x128xf32>
    %900 = vector.broadcast %9 : vector<1x128xf32> to vector<8x128xf32>
    %901 = arith.mulf %899, %900 : vector<8x128xf32>
    %902 = arith.mulf %901, %901 : vector<8x128xf32>
    %cst_323 = arith.constant dense<0.000000e+00> : vector<8xf32>
    %903 = vector.multi_reduction <add>, %902, %cst_323 [1] : vector<8x128xf32> to vector<8xf32>
    %904 = vector.shape_cast %903 : vector<8xf32> to vector<8x1xf32>
    %cst_324 = arith.constant 3.125000e-02 : f32
    %905 = vector.broadcast %cst_324 : f32 to vector<8x1xf32>
    %906 = arith.mulf %904, %905 : vector<8x1xf32>
    %cst_325 = arith.constant 9.99999974E-6 : f32
    %907 = vector.broadcast %cst_325 : f32 to vector<8x1xf32>
    %908 = arith.addf %906, %907 : vector<8x1xf32>
    %909 = math.rsqrt %908 : vector<8x1xf32>
    %910 = vector.broadcast %909 : vector<8x1xf32> to vector<8x128xf32>
    %911 = arith.mulf %901, %910 : vector<8x128xf32>
    %c14_326 = arith.constant 14 : index
    %c0_327 = arith.constant 0 : index
    %912 = vector.load %arg1[%c14_326, %c0_327] : memref<32x128xf32, #tpu.memory_space<vmem>>, vector<1x128xf32>
    %913 = vector.broadcast %912 : vector<1x128xf32> to vector<8x128xf32>
    %914 = arith.mulf %911, %913 : vector<8x128xf32>
    %c15_328 = arith.constant 15 : index
    %c0_329 = arith.constant 0 : index
    %915 = vector.load %arg1[%c15_328, %c0_329] : memref<32x128xf32, #tpu.memory_space<vmem>>, vector<1x128xf32>
    %916 = vector.broadcast %915 : vector<1x128xf32> to vector<8x128xf32>
    %917 = arith.addf %914, %916 : vector<8x128xf32>
    %918 = vector.broadcast %237 : vector<1x128xf32> to vector<8x128xf32>
    %919 = arith.mulf %918, %843 : vector<8x128xf32>
    %920 = arith.addf %919, %917 : vector<8x128xf32>
    %921 = vector.broadcast %239 : vector<1x128xf32> to vector<8x128xf32>
    %922 = arith.mulf %921, %846 : vector<8x128xf32>
    %923 = vector.broadcast %238 : vector<1x128xf32> to vector<8x128xf32>
    %924 = arith.addf %923, %922 : vector<8x128xf32>
    %925 = arith.cmpf oge, %920, %924 : vector<8x128xf32>
    %926 = arith.extui %925 : vector<8x128xi1> to vector<8x128xi32>
    %927 = arith.sitofp %926 : vector<8x128xi32> to vector<8x128xf32>
    %c5_330 = arith.constant 5 : index
    %c0_331 = arith.constant 0 : index
    %c0_332 = arith.constant 0 : index
    %928 = vector.load %arg2[%c5_330, %c0_331, %c0_332] : memref<11x128x128xf32, #tpu.memory_space<vmem>>, vector<1x128x128xf32>
    %929 = vector.shape_cast %928 : vector<1x128x128xf32> to vector<128x128xf32>
    %cst_333 = arith.constant dense<0.000000e+00> : vector<8x128xf32>
    %930 = tpu.matmul %927, %929, %cst_333 {dimension_numbers = #tpu.dot_dimension_numbers<[1], [0], [0], [1], [0, 0, 1, 1], [], []>} : vector<8x128xf32>, vector<128x128xf32>, vector<8x128xf32> -> vector<8x128xf32>
    %c19_334 = arith.constant 19 : index
    %c0_335 = arith.constant 0 : index
    %931 = vector.load %arg1[%c19_334, %c0_335] : memref<32x128xf32, #tpu.memory_space<vmem>>, vector<1x128xf32>
    %932 = vector.broadcast %931 : vector<1x128xf32> to vector<8x128xf32>
    %933 = arith.addf %930, %932 : vector<8x128xf32>
    %cst_336 = arith.constant dense<0.000000e+00> : vector<8xf32>
    %934 = vector.multi_reduction <add>, %933, %cst_336 [1] : vector<8x128xf32> to vector<8xf32>
    %935 = vector.shape_cast %934 : vector<8xf32> to vector<8x1xf32>
    %cst_337 = arith.constant 6.250000e-02 : f32
    %936 = vector.broadcast %cst_337 : f32 to vector<8x1xf32>
    %937 = arith.mulf %935, %936 : vector<8x1xf32>
    %938 = vector.broadcast %937 : vector<8x1xf32> to vector<8x128xf32>
    %939 = arith.subf %933, %938 : vector<8x128xf32>
    %940 = vector.broadcast %13 : vector<1x128xf32> to vector<8x128xf32>
    %941 = arith.mulf %939, %940 : vector<8x128xf32>
    %942 = arith.mulf %941, %941 : vector<8x128xf32>
    %cst_338 = arith.constant dense<0.000000e+00> : vector<8xf32>
    %943 = vector.multi_reduction <add>, %942, %cst_338 [1] : vector<8x128xf32> to vector<8xf32>
    %944 = vector.shape_cast %943 : vector<8xf32> to vector<8x1xf32>
    %cst_339 = arith.constant 6.250000e-02 : f32
    %945 = vector.broadcast %cst_339 : f32 to vector<8x1xf32>
    %946 = arith.mulf %944, %945 : vector<8x1xf32>
    %cst_340 = arith.constant 9.99999974E-6 : f32
    %947 = vector.broadcast %cst_340 : f32 to vector<8x1xf32>
    %948 = arith.addf %946, %947 : vector<8x1xf32>
    %949 = math.rsqrt %948 : vector<8x1xf32>
    %950 = vector.broadcast %949 : vector<8x1xf32> to vector<8x128xf32>
    %951 = arith.mulf %941, %950 : vector<8x128xf32>
    %c20_341 = arith.constant 20 : index
    %c0_342 = arith.constant 0 : index
    %952 = vector.load %arg1[%c20_341, %c0_342] : memref<32x128xf32, #tpu.memory_space<vmem>>, vector<1x128xf32>
    %953 = vector.broadcast %952 : vector<1x128xf32> to vector<8x128xf32>
    %954 = arith.mulf %951, %953 : vector<8x128xf32>
    %c21_343 = arith.constant 21 : index
    %c0_344 = arith.constant 0 : index
    %955 = vector.load %arg1[%c21_343, %c0_344] : memref<32x128xf32, #tpu.memory_space<vmem>>, vector<1x128xf32>
    %956 = vector.broadcast %955 : vector<1x128xf32> to vector<8x128xf32>
    %957 = arith.addf %954, %956 : vector<8x128xf32>
    %958 = arith.addf %877, %957 : vector<8x128xf32>
    %cst_345 = arith.constant 1.250000e-01 : f32
    %959 = vector.broadcast %cst_345 : f32 to vector<8x128xf32>
    %960 = arith.mulf %958, %959 : vector<8x128xf32>
    %c6_346 = arith.constant 6 : index
    %c0_347 = arith.constant 0 : index
    %c0_348 = arith.constant 0 : index
    %961 = vector.load %arg2[%c6_346, %c0_347, %c0_348] : memref<11x128x128xf32, #tpu.memory_space<vmem>>, vector<1x128x128xf32>
    %962 = vector.shape_cast %961 : vector<1x128x128xf32> to vector<128x128xf32>
    %cst_349 = arith.constant dense<0.000000e+00> : vector<8x128xf32>
    %963 = tpu.matmul %960, %962, %cst_349 {dimension_numbers = #tpu.dot_dimension_numbers<[1], [0], [0], [1], [0, 0, 1, 1], [], []>} : vector<8x128xf32>, vector<128x128xf32>, vector<8x128xf32> -> vector<8x128xf32>
    %c22 = arith.constant 22 : index
    %c0_350 = arith.constant 0 : index
    %964 = vector.load %arg1[%c22, %c0_350] : memref<32x128xf32, #tpu.memory_space<vmem>>, vector<1x128xf32>
    %965 = vector.broadcast %964 : vector<1x128xf32> to vector<8x128xf32>
    %966 = arith.addf %963, %965 : vector<8x128xf32>
    %c7_351 = arith.constant 7 : index
    %c0_352 = arith.constant 0 : index
    %c0_353 = arith.constant 0 : index
    %967 = vector.load %arg2[%c7_351, %c0_352, %c0_353] : memref<11x128x128xf32, #tpu.memory_space<vmem>>, vector<1x128x128xf32>
    %968 = vector.shape_cast %967 : vector<1x128x128xf32> to vector<128x128xf32>
    %cst_354 = arith.constant dense<0.000000e+00> : vector<8x128xf32>
    %969 = tpu.matmul %966, %968, %cst_354 {dimension_numbers = #tpu.dot_dimension_numbers<[1], [0], [0], [1], [0, 0, 1, 1], [], []>} : vector<8x128xf32>, vector<128x128xf32>, vector<8x128xf32> -> vector<8x128xf32>
    %c23 = arith.constant 23 : index
    %c0_355 = arith.constant 0 : index
    %970 = vector.load %arg1[%c23, %c0_355] : memref<32x128xf32, #tpu.memory_space<vmem>>, vector<1x128xf32>
    %971 = vector.broadcast %970 : vector<1x128xf32> to vector<8x128xf32>
    %972 = arith.addf %969, %971 : vector<8x128xf32>
    %c8_356 = arith.constant 8 : index
    %c0_357 = arith.constant 0 : index
    %c0_358 = arith.constant 0 : index
    %973 = vector.load %arg2[%c8_356, %c0_357, %c0_358] : memref<11x128x128xf32, #tpu.memory_space<vmem>>, vector<1x128x128xf32>
    %974 = vector.shape_cast %973 : vector<1x128x128xf32> to vector<128x128xf32>
    %cst_359 = arith.constant dense<0.000000e+00> : vector<8x128xf32>
    %975 = tpu.matmul %972, %974, %cst_359 {dimension_numbers = #tpu.dot_dimension_numbers<[1], [0], [0], [1], [0, 0, 1, 1], [], []>} : vector<8x128xf32>, vector<128x128xf32>, vector<8x128xf32> -> vector<8x128xf32>
    %c24 = arith.constant 24 : index
    %c0_360 = arith.constant 0 : index
    %976 = vector.load %arg1[%c24, %c0_360] : memref<32x128xf32, #tpu.memory_space<vmem>>, vector<1x128xf32>
    %977 = vector.broadcast %976 : vector<1x128xf32> to vector<8x128xf32>
    %978 = arith.addf %975, %977 : vector<8x128xf32>
    %cst_361 = arith.constant dense<0.000000e+00> : vector<8xf32>
    %979 = vector.multi_reduction <add>, %978, %cst_361 [1] : vector<8x128xf32> to vector<8xf32>
    %980 = vector.shape_cast %979 : vector<8xf32> to vector<8x1xf32>
    %cst_362 = arith.constant 1.250000e-01 : f32
    %981 = vector.broadcast %cst_362 : f32 to vector<8x1xf32>
    %982 = arith.mulf %980, %981 : vector<8x1xf32>
    %983 = vector.broadcast %982 : vector<8x1xf32> to vector<8x128xf32>
    %984 = arith.subf %978, %983 : vector<8x128xf32>
    %985 = vector.broadcast %17 : vector<1x128xf32> to vector<8x128xf32>
    %986 = arith.mulf %984, %985 : vector<8x128xf32>
    %987 = arith.mulf %986, %986 : vector<8x128xf32>
    %cst_363 = arith.constant dense<0.000000e+00> : vector<8xf32>
    %988 = vector.multi_reduction <add>, %987, %cst_363 [1] : vector<8x128xf32> to vector<8xf32>
    %989 = vector.shape_cast %988 : vector<8xf32> to vector<8x1xf32>
    %cst_364 = arith.constant 1.250000e-01 : f32
    %990 = vector.broadcast %cst_364 : f32 to vector<8x1xf32>
    %991 = arith.mulf %989, %990 : vector<8x1xf32>
    %cst_365 = arith.constant 9.99999974E-6 : f32
    %992 = vector.broadcast %cst_365 : f32 to vector<8x1xf32>
    %993 = arith.addf %991, %992 : vector<8x1xf32>
    %994 = math.rsqrt %993 : vector<8x1xf32>
    %995 = vector.broadcast %994 : vector<8x1xf32> to vector<8x128xf32>
    %996 = arith.mulf %986, %995 : vector<8x128xf32>
    %c25 = arith.constant 25 : index
    %c0_366 = arith.constant 0 : index
    %997 = vector.load %arg1[%c25, %c0_366] : memref<32x128xf32, #tpu.memory_space<vmem>>, vector<1x128xf32>
    %998 = vector.broadcast %997 : vector<1x128xf32> to vector<8x128xf32>
    %999 = arith.mulf %996, %998 : vector<8x128xf32>
    %c26 = arith.constant 26 : index
    %c0_367 = arith.constant 0 : index
    %1000 = vector.load %arg1[%c26, %c0_367] : memref<32x128xf32, #tpu.memory_space<vmem>>, vector<1x128xf32>
    %1001 = vector.broadcast %1000 : vector<1x128xf32> to vector<8x128xf32>
    %1002 = arith.addf %999, %1001 : vector<8x128xf32>
    %cst_368 = arith.constant 5.000000e-01 : f32
    %1003 = vector.broadcast %cst_368 : f32 to vector<8x128xf32>
    %1004 = arith.mulf %1003, %1002 : vector<8x128xf32>
    %cst_369 = arith.constant 1.41421354 : f32
    %1005 = vector.broadcast %cst_369 : f32 to vector<8x128xf32>
    %1006 = arith.divf %1002, %1005 : vector<8x128xf32>
    %cst_370 = arith.constant 0.000000e+00 : f32
    %1007 = vector.broadcast %cst_370 : f32 to vector<8x128xf32>
    %1008 = arith.cmpf oge, %1006, %1007 : vector<8x128xf32>
    %cst_371 = arith.constant 1.000000e+00 : f32
    %cst_372 = arith.constant -1.000000e+00 : f32
    %1009 = vector.broadcast %cst_371 : f32 to vector<8x128xf32>
    %1010 = vector.broadcast %cst_372 : f32 to vector<8x128xf32>
    %1011 = arith.select %1008, %1009, %1010 : vector<8x128xi1>, vector<8x128xf32>
    %1012 = math.absf %1006 : vector<8x128xf32>
    %cst_373 = arith.constant 0.327591091 : f32
    %1013 = vector.broadcast %cst_373 : f32 to vector<8x128xf32>
    %1014 = arith.mulf %1013, %1012 : vector<8x128xf32>
    %cst_374 = arith.constant 1.000000e+00 : f32
    %1015 = vector.broadcast %cst_374 : f32 to vector<8x128xf32>
    %1016 = arith.addf %1015, %1014 : vector<8x128xf32>
    %cst_375 = arith.constant 1.000000e+00 : f32
    %1017 = vector.broadcast %cst_375 : f32 to vector<8x128xf32>
    %1018 = arith.divf %1017, %1016 : vector<8x128xf32>
    %cst_376 = arith.constant 1.06140542 : f32
    %1019 = vector.broadcast %cst_376 : f32 to vector<8x128xf32>
    %1020 = arith.mulf %1019, %1018 : vector<8x128xf32>
    %cst_377 = arith.constant -1.45315206 : f32
    %1021 = vector.broadcast %cst_377 : f32 to vector<8x128xf32>
    %1022 = arith.addf %1020, %1021 : vector<8x128xf32>
    %1023 = arith.mulf %1022, %1018 : vector<8x128xf32>
    %cst_378 = arith.constant 1.42141378 : f32
    %1024 = vector.broadcast %cst_378 : f32 to vector<8x128xf32>
    %1025 = arith.addf %1023, %1024 : vector<8x128xf32>
    %1026 = arith.mulf %1025, %1018 : vector<8x128xf32>
    %cst_379 = arith.constant -0.284496725 : f32
    %1027 = vector.broadcast %cst_379 : f32 to vector<8x128xf32>
    %1028 = arith.addf %1026, %1027 : vector<8x128xf32>
    %1029 = arith.mulf %1028, %1018 : vector<8x128xf32>
    %cst_380 = arith.constant 0.254829586 : f32
    %1030 = vector.broadcast %cst_380 : f32 to vector<8x128xf32>
    %1031 = arith.addf %1029, %1030 : vector<8x128xf32>
    %1032 = arith.mulf %1031, %1018 : vector<8x128xf32>
    %cst_381 = arith.constant 0.000000e+00 : f32
    %1033 = vector.broadcast %cst_381 : f32 to vector<8x128xf32>
    %1034 = arith.subf %1033, %1012 : vector<8x128xf32>
    %1035 = arith.mulf %1034, %1012 : vector<8x128xf32>
    %1036 = math.exp %1035 : vector<8x128xf32>
    %1037 = arith.mulf %1032, %1036 : vector<8x128xf32>
    %cst_382 = arith.constant 1.000000e+00 : f32
    %1038 = vector.broadcast %cst_382 : f32 to vector<8x128xf32>
    %1039 = arith.subf %1038, %1037 : vector<8x128xf32>
    %1040 = arith.mulf %1011, %1039 : vector<8x128xf32>
    %cst_383 = arith.constant 1.000000e+00 : f32
    %1041 = vector.broadcast %cst_383 : f32 to vector<8x128xf32>
    %1042 = arith.addf %1041, %1040 : vector<8x128xf32>
    %1043 = arith.mulf %1004, %1042 : vector<8x128xf32>
    %c9_384 = arith.constant 9 : index
    %c0_385 = arith.constant 0 : index
    %c0_386 = arith.constant 0 : index
    %1044 = vector.load %arg2[%c9_384, %c0_385, %c0_386] : memref<11x128x128xf32, #tpu.memory_space<vmem>>, vector<1x128x128xf32>
    %1045 = vector.shape_cast %1044 : vector<1x128x128xf32> to vector<128x128xf32>
    %cst_387 = arith.constant dense<0.000000e+00> : vector<8x128xf32>
    %1046 = tpu.matmul %1043, %1045, %cst_387 {dimension_numbers = #tpu.dot_dimension_numbers<[1], [0], [0], [1], [0, 0, 1, 1], [], []>} : vector<8x128xf32>, vector<128x128xf32>, vector<8x128xf32> -> vector<8x128xf32>
    %c27 = arith.constant 27 : index
    %c0_388 = arith.constant 0 : index
    %1047 = vector.load %arg1[%c27, %c0_388] : memref<32x128xf32, #tpu.memory_space<vmem>>, vector<1x128xf32>
    %1048 = vector.broadcast %1047 : vector<1x128xf32> to vector<8x128xf32>
    %1049 = arith.addf %1046, %1048 : vector<8x128xf32>
    %c10_389 = arith.constant 10 : index
    %c0_390 = arith.constant 0 : index
    %c0_391 = arith.constant 0 : index
    %1050 = vector.load %arg2[%c10_389, %c0_390, %c0_391] : memref<11x128x128xf32, #tpu.memory_space<vmem>>, vector<1x128x128xf32>
    %1051 = vector.shape_cast %1050 : vector<1x128x128xf32> to vector<128x128xf32>
    %cst_392 = arith.constant dense<0.000000e+00> : vector<8x128xf32>
    %1052 = tpu.matmul %1049, %1051, %cst_392 {dimension_numbers = #tpu.dot_dimension_numbers<[1], [0], [0], [1], [0, 0, 1, 1], [], []>} : vector<8x128xf32>, vector<128x128xf32>, vector<8x128xf32> -> vector<8x128xf32>
    %c28 = arith.constant 28 : index
    %c0_393 = arith.constant 0 : index
    %1053 = vector.load %arg1[%c28, %c0_393] : memref<32x128xf32, #tpu.memory_space<vmem>>, vector<1x128xf32>
    %1054 = vector.broadcast %1053 : vector<1x128xf32> to vector<8x128xf32>
    %1055 = arith.addf %1052, %1054 : vector<8x128xf32>
    %c0_394 = arith.constant 0 : index
    %c0_395 = arith.constant 0 : index
    %c0_396 = arith.constant 0 : index
    %1056 = vector.load %arg3[%c0_394, %c0_395, %c0_396] : memref<3x8x128xf32, #tpu.memory_space<vmem>>, vector<1x8x128xf32>
    %1057 = vector.shape_cast %1056 : vector<1x8x128xf32> to vector<8x128xf32>
    %1058 = vector.shape_cast %960 : vector<8x128xf32> to vector<1x8x128xf32>
    tpu.vector_store %arg3[%c0_394, %c0_395, %c0_396], %1058 {strides = array<i32>} : memref<3x8x128xf32, #tpu.memory_space<vmem>>, vector<1x8x128xf32>,
    %c1_397 = arith.constant 1 : index
    %c0_398 = arith.constant 0 : index
    %c0_399 = arith.constant 0 : index
    %1059 = vector.load %arg3[%c1_397, %c0_398, %c0_399] : memref<3x8x128xf32, #tpu.memory_space<vmem>>, vector<1x8x128xf32>
    %1060 = vector.shape_cast %1059 : vector<1x8x128xf32> to vector<8x128xf32>
    %1061 = vector.shape_cast %1049 : vector<8x128xf32> to vector<1x8x128xf32>
    tpu.vector_store %arg3[%c1_397, %c0_398, %c0_399], %1061 {strides = array<i32>} : memref<3x8x128xf32, #tpu.memory_space<vmem>>, vector<1x8x128xf32>,
    %c2_400 = arith.constant 2 : index
    %c0_401 = arith.constant 0 : index
    %c0_402 = arith.constant 0 : index
    %1062 = vector.load %arg3[%c2_400, %c0_401, %c0_402] : memref<3x8x128xf32, #tpu.memory_space<vmem>>, vector<1x8x128xf32>
    %1063 = vector.shape_cast %1062 : vector<1x8x128xf32> to vector<8x128xf32>
    %1064 = vector.shape_cast %1055 : vector<8x128xf32> to vector<1x8x128xf32>
    tpu.vector_store %arg3[%c2_400, %c0_401, %c0_402], %1064 {strides = array<i32>} : memref<3x8x128xf32, #tpu.memory_space<vmem>>, vector<1x8x128xf32>,
    return
  }
}

</mosaic_0001>

<llo_original>
// kernel: snn_forward.1
$region0: #{snn_forward.1}
  #allocation0 [shape = 'u32[]', space=smem, size = 0x4, offset = 0x4, fixed_abs, tag = 'smem constant byte address 0x4 - core index']
  #allocation1 [shape = 'u32[72,128]{1,0:T(1,128)}', space=vmem, size = 0x9000, scoped, tag = 'internal scratch']
  %s0 = inlined_call_operand.vmem [shape: f32[8,128], index: 0, kind: input, shape index: {}]
  %s1 = inlined_call_operand.hbm [shape: f32[32,128], index: 1, kind: input, shape index: {}]
  %s2 = inlined_call_operand.hbm [shape: f32[11,128,128], index: 2, kind: input, shape index: {}]
  %s3 = inlined_call_operand.vmem [shape: f32[3,8,128], index: 3, kind: output, shape index: {}]
  %s4 = sld [smem:[#allocation0]]
  $region30: #{snn_forward.1} parent=0
    _
  %s6 = ssub.s32 1, %s4
  %s7 = scalar_select 0, %s6, %s4
  $region1: #{snn_forward.1} parent=0
    #allocation2 [shape = 'u8[16384]{0}', space=vmem, size = 0x4000, scoped, tag = 'input window, operand 1, single buffered']
    #allocation3 [shape = 's32[1]{0}', space=sflag, size = 0x4, scoped, tag = 'scoped memory for snn_forward.1']
    #allocation4 [shape = 'u8[720896]{0}', space=vmem, size = 0xb0000, scoped, tag = 'input window, operand 2, single buffered']
    #allocation5 [shape = 's32[1]{0}', space=sflag, size = 0x4, scoped, tag = 'scoped memory for snn_forward.1']
    %8 = vsyncpa [#allocation3], 0
    %9 = vsyncpa [#allocation5], 0
    // Predicated region
    $region2: #{snn_forward.1} parent=1 // pred_check
      _
    $region3: #{snn_forward.1} parent=1 // pred_check_branch
      %11 = sbr.rel (0) target = $region5
    $region4: #{snn_forward.1} parent=1 // pred_region
      _
    $region5: #{snn_forward.1} parent=1 // pred_fallthru
      _
    // Predicated region
    $region6: #{snn_forward.1} parent=1 // pred_check
      _
    $region7: #{snn_forward.1} parent=1 // pred_check_branch
      %13 = sbr.rel (0) target = $region9
    $region8: #{snn_forward.1} parent=1 // pred_region
      %15 = vsyncadd [#allocation3], 0
      %s16 = sshll.u32 %s1, 4
      %s17 = int_to_ptr.hbm [resolvable:$true] %s16
      %s18 = sshll.u32 [#allocation2], 4
      %s19 = int_to_ptr.vmem [resolvable:$true] %s18
      %24 = dma.hbm_to_vmem [thread:$0]  %s17, 512, %s19, [#allocation3], 128, 128, 8
    $region9: #{snn_forward.1} parent=1 // pred_fallthru
      _
    // Predicated region
    $region10: #{snn_forward.1} parent=1 // pred_check
      _
    $region11: #{snn_forward.1} parent=1 // pred_check_branch
      %26 = sbr.rel (0) target = $region13
    $region12: #{snn_forward.1} parent=1 // pred_region
      %28 = vsyncadd [#allocation5], 0
      %s29 = sshll.u32 %s2, 4
      %s30 = int_to_ptr.hbm [resolvable:$true] %s29
      %s31 = sshll.u32 [#allocation4], 4
      %s32 = int_to_ptr.vmem [resolvable:$true] %s31
      %37 = dma.hbm_to_vmem [thread:$0]  %s30, 22528, %s32, [#allocation5], 128, 128, 8
    $region13: #{snn_forward.1} parent=1 // pred_fallthru
      _
    // Predicated region
    $region14: #{snn_forward.1} parent=1 // pred_check
      _
    $region15: #{snn_forward.1} parent=1 // pred_check_branch
      %39 = sbr.rel (0) target = $region17
    $region16: #{snn_forward.1} parent=1 // pred_region
      %41 = dma.done [#allocation3], 512
    $region17: #{snn_forward.1} parent=1 // pred_fallthru
      _
    // Predicated region
    $region18: #{snn_forward.1} parent=1 // pred_check
      _
    $region19: #{snn_forward.1} parent=1 // pred_check_branch
      %43 = sbr.rel (0) target = $region21
    $region20: #{snn_forward.1} parent=1 // pred_region
      %45 = dma.done [#allocation5], 22528
    $region21: #{snn_forward.1} parent=1 // pred_fallthru
      _
    %v46 = vld [vmem:[%s0] sm:$0xff]
    %v47 = vlaneseq
    %v48 = vand.u32 %v47, 127
    %vm49 = vcmp.lt.s32.totalorder %v48, 64
    %v50 = vsel %vm49, 1, 0
    %v51 = vcvt.s32.f32 %v50
    %vm52 = vcmp.lt.s32.totalorder %v48, 32
    %v53 = vsel %vm52, 1, 0
    %v54 = vcvt.s32.f32 %v53
    %vm55 = vcmp.lt.s32.totalorder %v48, 16
    %v56 = vsel %vm55, 1, 0
    %v57 = vcvt.s32.f32 %v56
    %vm58 = vcmp.lt.s32.totalorder %v48, 8
    %v59 = vsel %vm58, 1, 0
    %v60 = vcvt.s32.f32 %v59
    %v61 = vld [vmem:[#allocation4] sm:$0xff]
    %v62 = vld [vmem:[#allocation4 + $0x8] sm:$0xff]
    %v63 = vld [vmem:[#allocation4 + $0x10] sm:$0xff]
    %v64 = vld [vmem:[#allocation4 + $0x18] sm:$0xff]
    %v65 = vld [vmem:[#allocation4 + $0x20] sm:$0xff]
    %v66 = vld [vmem:[#allocation4 + $0x28] sm:$0xff]
    %v67 = vld [vmem:[#allocation4 + $0x30] sm:$0xff]
    %v68 = vld [vmem:[#allocation4 + $0x38] sm:$0xff]
    %v69 = vld [vmem:[#allocation4 + $0x40] sm:$0xff]
    %v70 = vld [vmem:[#allocation4 + $0x48] sm:$0xff]
    %v71 = vld [vmem:[#allocation4 + $0x50] sm:$0xff]
    %v72 = vld [vmem:[#allocation4 + $0x58] sm:$0xff]
    %v73 = vld [vmem:[#allocation4 + $0x60] sm:$0xff]
    %v74 = vld [vmem:[#allocation4 + $0x68] sm:$0xff]
    %v75 = vld [vmem:[#allocation4 + $0x70] sm:$0xff]
    %v76 = vld [vmem:[#allocation4 + $0x78] sm:$0xff]
    %v77 = vld [vmem:[#allocation2] sm:$0x1]
    %v78 = vperm.slane %v77, 0
    %79 = vmatpush.msra.mxu0 %v76
    %80 = vmatpush.msra.mxu0 %v75
    %81 = vmatpush.msra.mxu0 %v74
    %82 = vmatpush.msra.mxu0 %v73
    %83 = vmatpush.msra.mxu0 %v72
    %84 = vmatpush.msra.mxu0 %v71
    %85 = vmatpush.msra.mxu0 %v70
    %86 = vmatpush.msra.mxu0 %v69
    %87 = vmatpush.msra.mxu0 %v68
    %88 = vmatpush.msra.mxu0 %v67
    %89 = vmatpush.msra.mxu0 %v66
    %90 = vmatpush.msra.mxu0 %v65
    %91 = vmatpush.msra.mxu0 %v64
    %92 = vmatpush.msra.mxu0 %v63
    %93 = vmatpush.msra.mxu0 %v62
    %94 = vmatpush.msra.mxu0 %v61
    %95 = vmatmul.f32.gmra.mxu0 %v46
    %v96 = vpop.f32.mrf.mxu0
    %v97 = vadd.f32 %v78, %v96
    %98 = vdwg.mxu0
    %99 = vadd.xlane.f32.xlu0 %v97
    %v100 = vpop.xlane.xlu0 %99
    %v101 = vmul.f32 %v100, 0.0078125
    %v102 = vsub.f32 %v97, %v101
    %v103 = vmul.f32 %v102, %v102
    %104 = vadd.xlane.f32.xlu0 %v103
    %v105 = vpop.xlane.xlu0 %104
    %v106 = vmul.f32 %v105, 0.0078125
    %v107 = vadd.f32 %v106, 1e-05
    %v108 = vrsqrt.pop %v107
    %v109 = vmul.f32 %v108, %v107
    %v110 = vmul.f32 %v109, %v108
    %v111 = vmul.f32 0.5, %v110
    %v112 = vsub.f32 1.5, %v111
    %v113 = vmul.f32 %v108, %v112
    %vm114 = vweird.f32 %v107
    %vm115 = vweird.f32 %v108
    %vm116 = vmor %vm114, %vm115
    %v117 = vsel %vm116, %v108, %v113
    %v118 = vmul.f32 %v102, %v117
    %v119 = vld [vmem:[#allocation2 + $0x1] sm:$0x1]
    %v120 = vperm.slane %v119, 0
    %v121 = vmul.f32 %v118, %v120
    %v122 = vld [vmem:[#allocation2 + $0x2] sm:$0x1]
    %v123 = vperm.slane %v122, 0
    %v124 = vadd.f32 %v121, %v123
    %v125 = vmul.f32 %v124, 0.5
    %v126 = vrcp.pop 1.4142135
    %v127 = vmul.f32 1.4142135, %v126
    %v128 = vsub.f32 1.0, %v127
    %v129 = vmul.f32 %v126, %v128
    %v130 = vadd.f32 %v126, %v129
    %vm131 = vweird.f32 %v126
    %v132 = vsel %vm131, %v126, %v130
    %v133 = vmul.f32 %v124, %v132
    %vm134 = vcmp.ge.f32.partialorder %v133, 0.0
    %v135 = vsel %vm134, 1.0, -1.0
    %v136 = vand.u32 2147483647, %v133
    %v137 = vmul.f32 %v136, 0.3275911
    %v138 = vadd.f32 %v137, 1.0
    %v139 = vrcp.pop %v138
    %v140 = vmul.f32 %v138, %v139
    %v141 = vsub.f32 1.0, %v140
    %v142 = vmul.f32 %v139, %v141
    %v143 = vadd.f32 %v139, %v142
    %vm144 = vweird.f32 %v138
    %vm145 = vweird.f32 %v139
    %vm146 = vmor %vm144, %vm145
    %v147 = vsel %vm146, %v139, %v143
    %v148 = vand.u32 2147483647, %v138
    %vm149 = vcmp.eq.f32.partialorder %v148, 8.507059e+37
    %v150 = vand.u32 %v138, 2147483648
    %v151 = vor.u32 1.1754944e-38, %v150
    %v152 = vsel %vm149, %v151, %v147
    %v153 = vmul.f32 1.0, %v152
    %v154 = vmul.f32 %v153, 1.0614054
    %v155 = vadd.f32 %v154, -1.4531521
    %v156 = vmul.f32 %v155, %v153
    %v157 = vadd.f32 %v156, 1.4214138
    %v158 = vmul.f32 %v157, %v153
    %v159 = vadd.f32 %v158, -0.28449672
    %v160 = vmul.f32 %v159, %v153
    %v161 = vadd.f32 %v160, 0.2548296
    %v162 = vmul.f32 %v161, %v153
    %v163 = vsub.f32 0.0, %v136
    %v164 = vmul.f32 %v163, %v136
    %v165 = vmul.f32 %v164, 1.442695
    %v166 = vpow.pop %v165
    %v167 = vmul.f32 %v162, %v166
    %v168 = vsub.f32 1.0, %v167
    %v169 = vmul.f32 %v135, %v168
    %v170 = vadd.f32 %v169, 1.0
    %v171 = vmul.f32 %v125, %v170
    %s172 = scalar_lea.vmem [#allocation4], 128
    %v173 = vld [vmem:[%s172] sm:$0xff]
    %v174 = vld [vmem:[%s172 + $0x8] sm:$0xff]
    %v175 = vld [vmem:[%s172 + $0x10] sm:$0xff]
    %v176 = vld [vmem:[%s172 + $0x18] sm:$0xff]
    %v177 = vld [vmem:[%s172 + $0x20] sm:$0xff]
    %v178 = vld [vmem:[%s172 + $0x28] sm:$0xff]
    %v179 = vld [vmem:[%s172 + $0x30] sm:$0xff]
    %v180 = vld [vmem:[%s172 + $0x38] sm:$0xff]
    %v181 = vld [vmem:[%s172 + $0x40] sm:$0xff]
    %v182 = vld [vmem:[%s172 + $0x48] sm:$0xff]
    %v183 = vld [vmem:[%s172 + $0x50] sm:$0xff]
    %v184 = vld [vmem:[%s172 + $0x58] sm:$0xff]
    %v185 = vld [vmem:[%s172 + $0x60] sm:$0xff]
    %v186 = vld [vmem:[%s172 + $0x68] sm:$0xff]
    %v187 = vld [vmem:[%s172 + $0x70] sm:$0xff]
    %v188 = vld [vmem:[%s172 + $0x78] sm:$0xff]
    %v189 = vld [vmem:[#allocation2 + $0x3] sm:$0x1]
    %v190 = vperm.slane %v189, 0
    %191 = vmatpush.msra.mxu0 %v188
    %192 = vmatpush.msra.mxu0 %v187
    %193 = vmatpush.msra.mxu0 %v186
    %194 = vmatpush.msra.mxu0 %v185
    %195 = vmatpush.msra.mxu0 %v184
    %196 = vmatpush.msra.mxu0 %v183
    %197 = vmatpush.msra.mxu0 %v182
    %198 = vmatpush.msra.mxu0 %v181
    %199 = vmatpush.msra.mxu0 %v180
    %200 = vmatpush.msra.mxu0 %v179
    %201 = vmatpush.msra.mxu0 %v178
    %202 = vmatpush.msra.mxu0 %v177
    %203 = vmatpush.msra.mxu0 %v176
    %204 = vmatpush.msra.mxu0 %v175
    %205 = vmatpush.msra.mxu0 %v174
    %206 = vmatpush.msra.mxu0 %v173
    %207 = vmatmul.f32.gmra.mxu0 %v171
    %v208 = vpop.f32.mrf.mxu0
    %v209 = vadd.f32 %v190, %v208
    %210 = vdwg.mxu0
    %211 = vadd.xlane.f32.xlu0 %v209
    %v212 = vpop.xlane.xlu0 %211
    %v213 = vmul.f32 %v212, 0.0078125
    %v214 = vsub.f32 %v209, %v213
    %v215 = vmul.f32 %v214, %v214
    %216 = vadd.xlane.f32.xlu0 %v215
    %v217 = vpop.xlane.xlu0 %216
    %v218 = vmul.f32 %v217, 0.0078125
    %v219 = vadd.f32 %v218, 1e-05
    %v220 = vrsqrt.pop %v219
    %v221 = vmul.f32 %v220, %v219
    %v222 = vmul.f32 %v221, %v220
    %v223 = vmul.f32 0.5, %v222
    %v224 = vsub.f32 1.5, %v223
    %v225 = vmul.f32 %v220, %v224
    %vm226 = vweird.f32 %v219
    %vm227 = vweird.f32 %v220
    %vm228 = vmor %vm226, %vm227
    %v229 = vsel %vm228, %v220, %v225
    %v230 = vmul.f32 %v214, %v229
    %v231 = vld [vmem:[#allocation2 + $0x4] sm:$0x1]
    %v232 = vperm.slane %v231, 0
    %v233 = vmul.f32 %v230, %v232
    %v234 = vld [vmem:[#allocation2 + $0x5] sm:$0x1]
    %v235 = vperm.slane %v234, 0
    %v236 = vadd.f32 %v233, %v235
    %v237 = vmul.f32 %v236, 0.5
    %v238 = vmul.f32 %v236, %v132
    %vm239 = vcmp.ge.f32.partialorder %v238, 0.0
    %v240 = vsel %vm239, 1.0, -1.0
    %v241 = vand.u32 2147483647, %v238
    %v242 = vmul.f32 %v241, 0.3275911
    %v243 = vadd.f32 %v242, 1.0
    %v244 = vrcp.pop %v243
    %v245 = vmul.f32 %v243, %v244
    %v246 = vsub.f32 1.0, %v245
    %v247 = vmul.f32 %v244, %v246
    %v248 = vadd.f32 %v244, %v247
    %vm249 = vweird.f32 %v243
    %vm250 = vweird.f32 %v244
    %vm251 = vmor %vm249, %vm250
    %v252 = vsel %vm251, %v244, %v248
    %v253 = vand.u32 2147483647, %v243
    %vm254 = vcmp.eq.f32.partialorder %v253, 8.507059e+37
    %v255 = vand.u32 %v243, 2147483648
    %v256 = vor.u32 1.1754944e-38, %v255
    %v257 = vsel %vm254, %v256, %v252
    %v258 = vmul.f32 1.0, %v257
    %v259 = vmul.f32 %v258, 1.0614054
    %v260 = vadd.f32 %v259, -1.4531521
    %v261 = vmul.f32 %v260, %v258
    %v262 = vadd.f32 %v261, 1.4214138
    %v263 = vmul.f32 %v262, %v258
    %v264 = vadd.f32 %v263, -0.28449672
    %v265 = vmul.f32 %v264, %v258
    %v266 = vadd.f32 %v265, 0.2548296
    %v267 = vmul.f32 %v266, %v258
    %v268 = vsub.f32 0.0, %v241
    %v269 = vmul.f32 %v268, %v241
    %v270 = vmul.f32 %v269, 1.442695
    %v271 = vpow.pop %v270
    %v272 = vmul.f32 %v267, %v271
    %v273 = vsub.f32 1.0, %v272
    %v274 = vmul.f32 %v240, %v273
    %v275 = vadd.f32 %v274, 1.0
    %v276 = vmul.f32 %v237, %v275
    %s277 = scalar_lea.vmem [#allocation4], 256
    %v278 = vld [vmem:[%s277] sm:$0xff]
    %v279 = vld [vmem:[%s277 + $0x8] sm:$0xff]
    %v280 = vld [vmem:[%s277 + $0x10] sm:$0xff]
    %v281 = vld [vmem:[%s277 + $0x18] sm:$0xff]
    %v282 = vld [vmem:[%s277 + $0x20] sm:$0xff]
    %v283 = vld [vmem:[%s277 + $0x28] sm:$0xff]
    %v284 = vld [vmem:[%s277 + $0x30] sm:$0xff]
    %v285 = vld [vmem:[%s277 + $0x38] sm:$0xff]
    %v286 = vld [vmem:[%s277 + $0x40] sm:$0xff]
    %v287 = vld [vmem:[%s277 + $0x48] sm:$0xff]
    %v288 = vld [vmem:[%s277 + $0x50] sm:$0xff]
    %v289 = vld [vmem:[%s277 + $0x58] sm:$0xff]
    %v290 = vld [vmem:[%s277 + $0x60] sm:$0xff]
    %v291 = vld [vmem:[%s277 + $0x68] sm:$0xff]
    %v292 = vld [vmem:[%s277 + $0x70] sm:$0xff]
    %v293 = vld [vmem:[%s277 + $0x78] sm:$0xff]
    %v294 = vld [vmem:[#allocation2 + $0x6] sm:$0x1]
    %v295 = vperm.slane %v294, 0
    %296 = vmatpush.msra.mxu0 %v293
    %297 = vmatpush.msra.mxu0 %v292
    %298 = vmatpush.msra.mxu0 %v291
    %299 = vmatpush.msra.mxu0 %v290
    %300 = vmatpush.msra.mxu0 %v289
    %301 = vmatpush.msra.mxu0 %v288
    %302 = vmatpush.msra.mxu0 %v287
    %303 = vmatpush.msra.mxu0 %v286
    %304 = vmatpush.msra.mxu0 %v285
    %305 = vmatpush.msra.mxu0 %v284
    %306 = vmatpush.msra.mxu0 %v283
    %307 = vmatpush.msra.mxu0 %v282
    %308 = vmatpush.msra.mxu0 %v281
    %309 = vmatpush.msra.mxu0 %v280
    %310 = vmatpush.msra.mxu0 %v279
    %311 = vmatpush.msra.mxu0 %v278
    %312 = vmatmul.f32.gmra.mxu0 %v276
    %v313 = vpop.f32.mrf.mxu0
    %v314 = vadd.f32 %v295, %v313
    %315 = vdwg.mxu0
    %v316 = vadd.f32 %v171, %v314
    %s317 = scalar_lea.vmem [#allocation4], 384
    %v318 = vld [vmem:[%s317] sm:$0xff]
    %v319 = vld [vmem:[%s317 + $0x8] sm:$0xff]
    %v320 = vld [vmem:[%s317 + $0x10] sm:$0xff]
    %v321 = vld [vmem:[%s317 + $0x18] sm:$0xff]
    %v322 = vld [vmem:[%s317 + $0x20] sm:$0xff]
    %v323 = vld [vmem:[%s317 + $0x28] sm:$0xff]
    %v324 = vld [vmem:[%s317 + $0x30] sm:$0xff]
    %v325 = vld [vmem:[%s317 + $0x38] sm:$0xff]
    %v326 = vld [vmem:[%s317 + $0x40] sm:$0xff]
    %v327 = vld [vmem:[%s317 + $0x48] sm:$0xff]
    %v328 = vld [vmem:[%s317 + $0x50] sm:$0xff]
    %v329 = vld [vmem:[%s317 + $0x58] sm:$0xff]
    %v330 = vld [vmem:[%s317 + $0x60] sm:$0xff]
    %v331 = vld [vmem:[%s317 + $0x68] sm:$0xff]
    %v332 = vld [vmem:[%s317 + $0x70] sm:$0xff]
    %v333 = vld [vmem:[%s317 + $0x78] sm:$0xff]
    %v334 = vld [vmem:[#allocation2 + $0x7] sm:$0x1]
    %v335 = vperm.slane %v334, 0
    %336 = vmatpush.msra.mxu0 %v333
    %337 = vmatpush.msra.mxu0 %v332
    %338 = vmatpush.msra.mxu0 %v331
    %339 = vmatpush.msra.mxu0 %v330
    %340 = vmatpush.msra.mxu0 %v329
    %341 = vmatpush.msra.mxu0 %v328
    %342 = vmatpush.msra.mxu0 %v327
    %343 = vmatpush.msra.mxu0 %v326
    %344 = vmatpush.msra.mxu0 %v325
    %345 = vmatpush.msra.mxu0 %v324
    %346 = vmatpush.msra.mxu0 %v323
    %347 = vmatpush.msra.mxu0 %v322
    %348 = vmatpush.msra.mxu0 %v321
    %349 = vmatpush.msra.mxu0 %v320
    %350 = vmatpush.msra.mxu0 %v319
    %351 = vmatpush.msra.mxu0 %v318
    %352 = vmatmul.f32.gmra.mxu0 %v316
    %v353 = vpop.f32.mrf.mxu0
    %v354 = vadd.f32 %v335, %v353
    %355 = vdwg.mxu0
    %356 = vadd.xlane.f32.xlu0 %v354
    %v357 = vpop.xlane.xlu0 %356
    %v358 = vmul.f32 %v357, 0.015625
    %v359 = vsub.f32 %v354, %v358
    %v360 = vmul.f32 %v359, %v51
    %v361 = vmul.f32 %v360, %v360
    %362 = vadd.xlane.f32.xlu0 %v361
    %v363 = vpop.xlane.xlu0 %362
    %v364 = vmul.f32 %v363, 0.015625
    %v365 = vadd.f32 %v364, 1e-05
    %v366 = vrsqrt.pop %v365
    %v367 = vmul.f32 %v366, %v365
    %v368 = vmul.f32 %v367, %v366
    %v369 = vmul.f32 0.5, %v368
    %v370 = vsub.f32 1.5, %v369
    %v371 = vmul.f32 %v366, %v370
    %vm372 = vweird.f32 %v365
    %vm373 = vweird.f32 %v366
    %vm374 = vmor %vm372, %vm373
    %v375 = vsel %vm374, %v366, %v371
    %v376 = vmul.f32 %v360, %v375
    %v377 = vld [vmem:[#allocation2 + $0x8] sm:$0x1]
    %v378 = vperm.slane %v377, 0
    %v379 = vmul.f32 %v376, %v378
    %v380 = vld [vmem:[#allocation2 + $0x9] sm:$0x1]
    %v381 = vperm.slane %v380, 0
    %v382 = vadd.f32 %v379, %v381
    %v383 = vmul.f32 %v382, 0.5
    %v384 = vmul.f32 %v382, %v132
    %vm385 = vcmp.ge.f32.partialorder %v384, 0.0
    %v386 = vsel %vm385, 1.0, -1.0
    %v387 = vand.u32 2147483647, %v384
    %v388 = vmul.f32 %v387, 0.3275911
    %v389 = vadd.f32 %v388, 1.0
    %v390 = vrcp.pop %v389
    %v391 = vmul.f32 %v389, %v390
    %v392 = vsub.f32 1.0, %v391
    %v393 = vmul.f32 %v390, %v392
    %v394 = vadd.f32 %v390, %v393
    %vm395 = vweird.f32 %v389
    %vm396 = vweird.f32 %v390
    %vm397 = vmor %vm395, %vm396
    %v398 = vsel %vm397, %v390, %v394
    %v399 = vand.u32 2147483647, %v389
    %vm400 = vcmp.eq.f32.partialorder %v399, 8.507059e+37
    %v401 = vand.u32 %v389, 2147483648
    %v402 = vor.u32 1.1754944e-38, %v401
    %v403 = vsel %vm400, %v402, %v398
    %v404 = vmul.f32 1.0, %v403
    %v405 = vmul.f32 %v404, 1.0614054
    %v406 = vadd.f32 %v405, -1.4531521
    %v407 = vmul.f32 %v406, %v404
    %v408 = vadd.f32 %v407, 1.4214138
    %v409 = vmul.f32 %v408, %v404
    %v410 = vadd.f32 %v409, -0.28449672
    %v411 = vmul.f32 %v410, %v404
    %v412 = vadd.f32 %v411, 0.2548296
    %v413 = vmul.f32 %v412, %v404
    %v414 = vsub.f32 0.0, %v387
    %v415 = vmul.f32 %v414, %v387
    %v416 = vmul.f32 %v415, 1.442695
    %v417 = vpow.pop %v416
    %v418 = vmul.f32 %v413, %v417
    %v419 = vsub.f32 1.0, %v418
    %v420 = vmul.f32 %v386, %v419
    %v421 = vadd.f32 %v420, 1.0
    %v422 = vmul.f32 %v383, %v421
    %v423 = vld [vmem:[#allocation2 + $0xa] sm:$0x1]
    %v424 = vld [vmem:[#allocation2 + $0xb] sm:$0x1]
    %v425 = vld [vmem:[#allocation2 + $0xc] sm:$0x1]
    %v426 = vld [vmem:[#allocation2 + $0x10] sm:$0x1]
    %v427 = vld [vmem:[#allocation2 + $0x11] sm:$0x1]
    %v428 = vld [vmem:[#allocation2 + $0x12] sm:$0x1]
    %v429 = vperm.slane %v423, 0
    %v430 = vmul.f32 %v429, 0.0
    %v431 = vadd.f32 %v430, %v422
    %v432 = vperm.slane %v425, 0
    %v433 = vmul.f32 %v432, 0.0
    %v434 = vperm.slane %v424, 0
    %v435 = vadd.f32 %v434, %v433
    %vm436 = vcmp.ge.f32.partialorder %v431, %v435
    %v437 = vsel %vm436, 1, 0
    %v438 = vcvt.s32.f32 %v437
    %v439 = vmul.f32 %v438, %v435
    %v440 = vsub.f32 %v431, %v439
    %v441 = vadd.f32 %v438, 0.0
    %s442 = scalar_lea.vmem [#allocation4], 512
    %v443 = vld [vmem:[%s442] sm:$0xff]
    %v444 = vld [vmem:[%s442 + $0x8] sm:$0xff]
    %v445 = vld [vmem:[%s442 + $0x10] sm:$0xff]
    %v446 = vld [vmem:[%s442 + $0x18] sm:$0xff]
    %v447 = vld [vmem:[%s442 + $0x20] sm:$0xff]
    %v448 = vld [vmem:[%s442 + $0x28] sm:$0xff]
    %v449 = vld [vmem:[%s442 + $0x30] sm:$0xff]
    %v450 = vld [vmem:[%s442 + $0x38] sm:$0xff]
    %v451 = vld [vmem:[%s442 + $0x40] sm:$0xff]
    %v452 = vld [vmem:[%s442 + $0x48] sm:$0xff]
    %v453 = vld [vmem:[%s442 + $0x50] sm:$0xff]
    %v454 = vld [vmem:[%s442 + $0x58] sm:$0xff]
    %v455 = vld [vmem:[%s442 + $0x60] sm:$0xff]
    %v456 = vld [vmem:[%s442 + $0x68] sm:$0xff]
    %v457 = vld [vmem:[%s442 + $0x70] sm:$0xff]
    %v458 = vld [vmem:[%s442 + $0x78] sm:$0xff]
    %v459 = vld [vmem:[#allocation2 + $0xd] sm:$0x1]
    %v460 = vperm.slane %v459, 0
    %461 = vmatpush.msra.mxu0 %v458
    %462 = vmatpush.msra.mxu0 %v457
    %463 = vmatpush.msra.mxu0 %v456
    %464 = vmatpush.msra.mxu0 %v455
    %465 = vmatpush.msra.mxu0 %v454
    %466 = vmatpush.msra.mxu0 %v453
    %467 = vmatpush.msra.mxu0 %v452
    %468 = vmatpush.msra.mxu0 %v451
    %469 = vmatpush.msra.mxu0 %v450
    %470 = vmatpush.msra.mxu0 %v449
    %471 = vmatpush.msra.mxu0 %v448
    %472 = vmatpush.msra.mxu0 %v447
    %473 = vmatpush.msra.mxu0 %v446
    %474 = vmatpush.msra.mxu0 %v445
    %475 = vmatpush.msra.mxu0 %v444
    %476 = vmatpush.msra.mxu0 %v443
    %477 = vmatmul.f32.gmra.mxu0 %v438
    %v478 = vpop.f32.mrf.mxu0
    %v479 = vadd.f32 %v460, %v478
    %480 = vdwg.mxu0
    %481 = vadd.xlane.f32.xlu0 %v479
    %v482 = vpop.xlane.xlu0 %481
    %v483 = vmul.f32 %v482, 0.03125
    %v484 = vsub.f32 %v479, %v483
    %v485 = vmul.f32 %v484, %v54
    %v486 = vmul.f32 %v485, %v485
    %487 = vadd.xlane.f32.xlu0 %v486
    %v488 = vpop.xlane.xlu0 %487
    %v489 = vmul.f32 %v488, 0.03125
    %v490 = vadd.f32 %v489, 1e-05
    %v491 = vrsqrt.pop %v490
    %v492 = vmul.f32 %v491, %v490
    %v493 = vmul.f32 %v492, %v491
    %v494 = vmul.f32 0.5, %v493
    %v495 = vsub.f32 1.5, %v494
    %v496 = vmul.f32 %v491, %v495
    %vm497 = vweird.f32 %v490
    %vm498 = vweird.f32 %v491
    %vm499 = vmor %vm497, %vm498
    %v500 = vsel %vm499, %v491, %v496
    %v501 = vmul.f32 %v485, %v500
    %v502 = vld [vmem:[#allocation2 + $0xe] sm:$0x1]
    %v503 = vperm.slane %v502, 0
    %v504 = vmul.f32 %v501, %v503
    %v505 = vld [vmem:[#allocation2 + $0xf] sm:$0x1]
    %v506 = vperm.slane %v505, 0
    %v507 = vadd.f32 %v504, %v506
    %v508 = vperm.slane %v426, 0
    %v509 = vmul.f32 %v508, 0.0
    %v510 = vadd.f32 %v509, %v507
    %v511 = vperm.slane %v428, 0
    %v512 = vmul.f32 %v511, 0.0
    %v513 = vperm.slane %v427, 0
    %v514 = vadd.f32 %v513, %v512
    %vm515 = vcmp.ge.f32.partialorder %v510, %v514
    %v516 = vsel %vm515, 1, 0
    %v517 = vcvt.s32.f32 %v516
    %v518 = vmul.f32 %v517, %v514
    %v519 = vsub.f32 %v510, %v518
    %v520 = vadd.f32 %v517, 0.0
    %s521 = scalar_lea.vmem [#allocation4], 640
    %v522 = vld [vmem:[%s521] sm:$0xff]
    %v523 = vld [vmem:[%s521 + $0x8] sm:$0xff]
    %v524 = vld [vmem:[%s521 + $0x10] sm:$0xff]
    %v525 = vld [vmem:[%s521 + $0x18] sm:$0xff]
    %v526 = vld [vmem:[%s521 + $0x20] sm:$0xff]
    %v527 = vld [vmem:[%s521 + $0x28] sm:$0xff]
    %v528 = vld [vmem:[%s521 + $0x30] sm:$0xff]
    %v529 = vld [vmem:[%s521 + $0x38] sm:$0xff]
    %v530 = vld [vmem:[%s521 + $0x40] sm:$0xff]
    %v531 = vld [vmem:[%s521 + $0x48] sm:$0xff]
    %v532 = vld [vmem:[%s521 + $0x50] sm:$0xff]
    %v533 = vld [vmem:[%s521 + $0x58] sm:$0xff]
    %v534 = vld [vmem:[%s521 + $0x60] sm:$0xff]
    %v535 = vld [vmem:[%s521 + $0x68] sm:$0xff]
    %v536 = vld [vmem:[%s521 + $0x70] sm:$0xff]
    %v537 = vld [vmem:[%s521 + $0x78] sm:$0xff]
    %v538 = vld [vmem:[#allocation2 + $0x13] sm:$0x1]
    %v539 = vperm.slane %v538, 0
    %540 = vmatpush.msra.mxu0 %v537
    %541 = vmatpush.msra.mxu0 %v536
    %542 = vmatpush.msra.mxu0 %v535
    %543 = vmatpush.msra.mxu0 %v534
    %544 = vmatpush.msra.mxu0 %v533
    %545 = vmatpush.msra.mxu0 %v532
    %546 = vmatpush.msra.mxu0 %v531
    %547 = vmatpush.msra.mxu0 %v530
    %548 = vmatpush.msra.mxu0 %v529
    %549 = vmatpush.msra.mxu0 %v528
    %550 = vmatpush.msra.mxu0 %v527
    %551 = vmatpush.msra.mxu0 %v526
    %552 = vmatpush.msra.mxu0 %v525
    %553 = vmatpush.msra.mxu0 %v524
    %554 = vmatpush.msra.mxu0 %v523
    %555 = vmatpush.msra.mxu0 %v522
    %556 = vmatmul.f32.gmra.mxu0 %v517
    %v557 = vpop.f32.mrf.mxu0
    %v558 = vadd.f32 %v539, %v557
    %559 = vdwg.mxu0
    %560 = vadd.xlane.f32.xlu0 %v558
    %v561 = vpop.xlane.xlu0 %560
    %v562 = vmul.f32 %v561, 0.0625
    %v563 = vsub.f32 %v558, %v562
    %v564 = vmul.f32 %v563, %v57
    %v565 = vmul.f32 %v564, %v564
    %566 = vadd.xlane.f32.xlu0 %v565
    %v567 = vpop.xlane.xlu0 %566
    %v568 = vmul.f32 %v567, 0.0625
    %v569 = vadd.f32 %v568, 1e-05
    %v570 = vrsqrt.pop %v569
    %v571 = vmul.f32 %v570, %v569
    %v572 = vmul.f32 %v571, %v570
    %v573 = vmul.f32 0.5, %v572
    %v574 = vsub.f32 1.5, %v573
    %v575 = vmul.f32 %v570, %v574
    %vm576 = vweird.f32 %v569
    %vm577 = vweird.f32 %v570
    %vm578 = vmor %vm576, %vm577
    %v579 = vsel %vm578, %v570, %v575
    %v580 = vmul.f32 %v564, %v579
    %v581 = vld [vmem:[#allocation2 + $0x14] sm:$0x1]
    %v582 = vperm.slane %v581, 0
    %v583 = vmul.f32 %v580, %v582
    %v584 = vld [vmem:[#allocation2 + $0x15] sm:$0x1]
    %v585 = vperm.slane %v584, 0
    %v586 = vadd.f32 %v583, %v585
    %v587 = vadd.f32 %v586, 0.0
    %v588 = vmul.f32 %v429, %v440
    %v589 = vadd.f32 %v588, %v422
    %v590 = vmul.f32 %v432, %v441
    %v591 = vadd.f32 %v434, %v590
    %vm592 = vcmp.ge.f32.partialorder %v589, %v591
    %v593 = vsel %vm592, 1, 0
    %v594 = vcvt.s32.f32 %v593
    %v595 = vmul.f32 %v594, %v591
    %v596 = vsub.f32 %v589, %v595
    %v597 = vmul.f32 %v441, 0.9
    %v598 = vadd.f32 %v597, %v594
    %599 = vmatpush.msra.mxu0 %v458
    %600 = vmatpush.msra.mxu0 %v457
    %601 = vmatpush.msra.mxu0 %v456
    %602 = vmatpush.msra.mxu0 %v455
    %603 = vmatpush.msra.mxu0 %v454
    %604 = vmatpush.msra.mxu0 %v453
    %605 = vmatpush.msra.mxu0 %v452
    %606 = vmatpush.msra.mxu0 %v451
    %607 = vmatpush.msra.mxu0 %v450
    %608 = vmatpush.msra.mxu0 %v449
    %609 = vmatpush.msra.mxu0 %v448
    %610 = vmatpush.msra.mxu0 %v447
    %611 = vmatpush.msra.mxu0 %v446
    %612 = vmatpush.msra.mxu0 %v445
    %613 = vmatpush.msra.mxu0 %v444
    %614 = vmatpush.msra.mxu0 %v443
    %615 = vmatmul.f32.gmra.mxu0 %v594
    %v616 = vpop.f32.mrf.mxu0
    %v617 = vadd.f32 %v460, %v616
    %618 = vdwg.mxu0
    %619 = vadd.xlane.f32.xlu0 %v617
    %v620 = vpop.xlane.xlu0 %619
    %v621 = vmul.f32 %v620, 0.03125
    %v622 = vsub.f32 %v617, %v621
    %v623 = vmul.f32 %v622, %v54
    %v624 = vmul.f32 %v623, %v623
    %625 = vadd.xlane.f32.xlu0 %v624
    %v626 = vpop.xlane.xlu0 %625
    %v627 = vmul.f32 %v626, 0.03125
    %v628 = vadd.f32 %v627, 1e-05
    %v629 = vrsqrt.pop %v628
    %v630 = vmul.f32 %v629, %v628
    %v631 = vmul.f32 %v630, %v629
    %v632 = vmul.f32 0.5, %v631
    %v633 = vsub.f32 1.5, %v632
    %v634 = vmul.f32 %v629, %v633
    %vm635 = vweird.f32 %v628
    %vm636 = vweird.f32 %v629
    %vm637 = vmor %vm635, %vm636
    %v638 = vsel %vm637, %v629, %v634
    %v639 = vmul.f32 %v623, %v638
    %v640 = vmul.f32 %v639, %v503
    %v641 = vadd.f32 %v640, %v506
    %v642 = vmul.f32 %v508, %v519
    %v643 = vadd.f32 %v642, %v641
    %v644 = vmul.f32 %v511, %v520
    %v645 = vadd.f32 %v513, %v644
    %vm646 = vcmp.ge.f32.partialorder %v643, %v645
    %v647 = vsel %vm646, 1, 0
    %v648 = vcvt.s32.f32 %v647
    %v649 = vmul.f32 %v648, %v645
    %v650 = vsub.f32 %v643, %v649
    %v651 = vmul.f32 %v520, 0.9
    %v652 = vadd.f32 %v651, %v648
    %653 = vmatpush.msra.mxu0 %v537
    %654 = vmatpush.msra.mxu0 %v536
    %655 = vmatpush.msra.mxu0 %v535
    %656 = vmatpush.msra.mxu0 %v534
    %657 = vmatpush.msra.mxu0 %v533
    %658 = vmatpush.msra.mxu0 %v532
    %659 = vmatpush.msra.mxu0 %v531
    %660 = vmatpush.msra.mxu0 %v530
    %661 = vmatpush.msra.mxu0 %v529
    %662 = vmatpush.msra.mxu0 %v528
    %663 = vmatpush.msra.mxu0 %v527
    %664 = vmatpush.msra.mxu0 %v526
    %665 = vmatpush.msra.mxu0 %v525
    %666 = vmatpush.msra.mxu0 %v524
    %667 = vmatpush.msra.mxu0 %v523
    %668 = vmatpush.msra.mxu0 %v522
    %669 = vmatmul.f32.gmra.mxu0 %v648
    %v670 = vpop.f32.mrf.mxu0
    %v671 = vadd.f32 %v539, %v670
    %672 = vdwg.mxu0
    %673 = vadd.xlane.f32.xlu0 %v671
    %v674 = vpop.xlane.xlu0 %673
    %v675 = vmul.f32 %v674, 0.0625
    %v676 = vsub.f32 %v671, %v675
    %v677 = vmul.f32 %v676, %v57
    %v678 = vmul.f32 %v677, %v677
    %679 = vadd.xlane.f32.xlu0 %v678
    %v680 = vpop.xlane.xlu0 %679
    %v681 = vmul.f32 %v680, 0.0625
    %v682 = vadd.f32 %v681, 1e-05
    %v683 = vrsqrt.pop %v682
    %v684 = vmul.f32 %v683, %v682
    %v685 = vmul.f32 %v684, %v683
    %v686 = vmul.f32 0.5, %v685
    %v687 = vsub.f32 1.5, %v686
    %v688 = vmul.f32 %v683, %v687
    %vm689 = vweird.f32 %v682
    %vm690 = vweird.f32 %v683
    %vm691 = vmor %vm689, %vm690
    %v692 = vsel %vm691, %v683, %v688
    %v693 = vmul.f32 %v677, %v692
    %v694 = vmul.f32 %v693, %v582
    %v695 = vadd.f32 %v694, %v585
    %v696 = vadd.f32 %v587, %v695
    %v697 = vmul.f32 %v429, %v596
    %v698 = vadd.f32 %v697, %v422
    %v699 = vmul.f32 %v432, %v598
    %v700 = vadd.f32 %v434, %v699
    %vm701 = vcmp.ge.f32.partialorder %v698, %v700
    %v702 = vsel %vm701, 1, 0
    %v703 = vcvt.s32.f32 %v702
    %v704 = vmul.f32 %v703, %v700
    %v705 = vsub.f32 %v698, %v704
    %v706 = vmul.f32 %v598, 0.9
    %v707 = vadd.f32 %v706, %v703
    %708 = vmatpush.msra.mxu0 %v458
    %709 = vmatpush.msra.mxu0 %v457
    %710 = vmatpush.msra.mxu0 %v456
    %711 = vmatpush.msra.mxu0 %v455
    %712 = vmatpush.msra.mxu0 %v454
    %713 = vmatpush.msra.mxu0 %v453
    %714 = vmatpush.msra.mxu0 %v452
    %715 = vmatpush.msra.mxu0 %v451
    %716 = vmatpush.msra.mxu0 %v450
    %717 = vmatpush.msra.mxu0 %v449
    %718 = vmatpush.msra.mxu0 %v448
    %719 = vmatpush.msra.mxu0 %v447
    %720 = vmatpush.msra.mxu0 %v446
    %721 = vmatpush.msra.mxu0 %v445
    %722 = vmatpush.msra.mxu0 %v444
    %723 = vmatpush.msra.mxu0 %v443
    %724 = vmatmul.f32.gmra.mxu0 %v703
    %v725 = vpop.f32.mrf.mxu0
    %v726 = vadd.f32 %v460, %v725
    %727 = vdwg.mxu0
    %728 = vadd.xlane.f32.xlu0 %v726
    %v729 = vpop.xlane.xlu0 %728
    %v730 = vmul.f32 %v729, 0.03125
    %v731 = vsub.f32 %v726, %v730
    %v732 = vmul.f32 %v731, %v54
    %v733 = vmul.f32 %v732, %v732
    %734 = vadd.xlane.f32.xlu0 %v733
    %v735 = vpop.xlane.xlu0 %734
    %v736 = vmul.f32 %v735, 0.03125
    %v737 = vadd.f32 %v736, 1e-05
    %v738 = vrsqrt.pop %v737
    %v739 = vmul.f32 %v738, %v737
    %v740 = vmul.f32 %v739, %v738
    %v741 = vmul.f32 0.5, %v740
    %v742 = vsub.f32 1.5, %v741
    %v743 = vmul.f32 %v738, %v742
    %vm744 = vweird.f32 %v737
    %vm745 = vweird.f32 %v738
    %vm746 = vmor %vm744, %vm745
    %v747 = vsel %vm746, %v738, %v743
    %v748 = vmul.f32 %v732, %v747
    %v749 = vmul.f32 %v748, %v503
    %v750 = vadd.f32 %v749, %v506
    %v751 = vmul.f32 %v508, %v650
    %v752 = vadd.f32 %v751, %v750
    %v753 = vmul.f32 %v511, %v652
    %v754 = vadd.f32 %v513, %v753
    %vm755 = vcmp.ge.f32.partialorder %v752, %v754
    %v756 = vsel %vm755, 1, 0
    %v757 = vcvt.s32.f32 %v756
    %v758 = vmul.f32 %v757, %v754
    %v759 = vsub.f32 %v752, %v758
    %v760 = vmul.f32 %v652, 0.9
    %v761 = vadd.f32 %v760, %v757
    %762 = vmatpush.msra.mxu0 %v537
    %763 = vmatpush.msra.mxu0 %v536
    %764 = vmatpush.msra.mxu0 %v535
    %765 = vmatpush.msra.mxu0 %v534
    %766 = vmatpush.msra.mxu0 %v533
    %767 = vmatpush.msra.mxu0 %v532
    %768 = vmatpush.msra.mxu0 %v531
    %769 = vmatpush.msra.mxu0 %v530
    %770 = vmatpush.msra.mxu0 %v529
    %771 = vmatpush.msra.mxu0 %v528
    %772 = vmatpush.msra.mxu0 %v527
    %773 = vmatpush.msra.mxu0 %v526
    %774 = vmatpush.msra.mxu0 %v525
    %775 = vmatpush.msra.mxu0 %v524
    %776 = vmatpush.msra.mxu0 %v523
    %777 = vmatpush.msra.mxu0 %v522
    %778 = vmatmul.f32.gmra.mxu0 %v757
    %v779 = vpop.f32.mrf.mxu0
    %v780 = vadd.f32 %v539, %v779
    %781 = vdwg.mxu0
    %782 = vadd.xlane.f32.xlu0 %v780
    %v783 = vpop.xlane.xlu0 %782
    %v784 = vmul.f32 %v783, 0.0625
    %v785 = vsub.f32 %v780, %v784
    %v786 = vmul.f32 %v785, %v57
    %v787 = vmul.f32 %v786, %v786
    %788 = vadd.xlane.f32.xlu0 %v787
    %v789 = vpop.xlane.xlu0 %788
    %v790 = vmul.f32 %v789, 0.0625
    %v791 = vadd.f32 %v790, 1e-05
    %v792 = vrsqrt.pop %v791
    %v793 = vmul.f32 %v792, %v791
    %v794 = vmul.f32 %v793, %v792
    %v795 = vmul.f32 0.5, %v794
    %v796 = vsub.f32 1.5, %v795
    %v797 = vmul.f32 %v792, %v796
    %vm798 = vweird.f32 %v791
    %vm799 = vweird.f32 %v792
    %vm800 = vmor %vm798, %vm799
    %v801 = vsel %vm800, %v792, %v797
    %v802 = vmul.f32 %v786, %v801
    %v803 = vmul.f32 %v802, %v582
    %v804 = vadd.f32 %v803, %v585
    %v805 = vadd.f32 %v696, %v804
    %v806 = vmul.f32 %v429, %v705
    %v807 = vadd.f32 %v806, %v422
    %v808 = vmul.f32 %v432, %v707
    %v809 = vadd.f32 %v434, %v808
    %vm810 = vcmp.ge.f32.partialorder %v807, %v809
    %v811 = vsel %vm810, 1, 0
    %v812 = vcvt.s32.f32 %v811
    %v813 = vmul.f32 %v812, %v809
    %v814 = vsub.f32 %v807, %v813
    %v815 = vmul.f32 %v707, 0.9
    %v816 = vadd.f32 %v815, %v812
    %817 = vmatpush.msra.mxu0 %v458
    %818 = vmatpush.msra.mxu0 %v457
    %819 = vmatpush.msra.mxu0 %v456
    %820 = vmatpush.msra.mxu0 %v455
    %821 = vmatpush.msra.mxu0 %v454
    %822 = vmatpush.msra.mxu0 %v453
    %823 = vmatpush.msra.mxu0 %v452
    %824 = vmatpush.msra.mxu0 %v451
    %825 = vmatpush.msra.mxu0 %v450
    %826 = vmatpush.msra.mxu0 %v449
    %827 = vmatpush.msra.mxu0 %v448
    %828 = vmatpush.msra.mxu0 %v447
    %829 = vmatpush.msra.mxu0 %v446
    %830 = vmatpush.msra.mxu0 %v445
    %831 = vmatpush.msra.mxu0 %v444
    %832 = vmatpush.msra.mxu0 %v443
    %833 = vmatmul.f32.gmra.mxu0 %v812
    %v834 = vpop.f32.mrf.mxu0
    %v835 = vadd.f32 %v460, %v834
    %836 = vdwg.mxu0
    %837 = vadd.xlane.f32.xlu0 %v835
    %v838 = vpop.xlane.xlu0 %837
    %v839 = vmul.f32 %v838, 0.03125
    %v840 = vsub.f32 %v835, %v839
    %v841 = vmul.f32 %v840, %v54
    %v842 = vmul.f32 %v841, %v841
    %843 = vadd.xlane.f32.xlu0 %v842
    %v844 = vpop.xlane.xlu0 %843
    %v845 = vmul.f32 %v844, 0.03125
    %v846 = vadd.f32 %v845, 1e-05
    %v847 = vrsqrt.pop %v846
    %v848 = vmul.f32 %v847, %v846
    %v849 = vmul.f32 %v848, %v847
    %v850 = vmul.f32 0.5, %v849
    %v851 = vsub.f32 1.5, %v850
    %v852 = vmul.f32 %v847, %v851
    %vm853 = vweird.f32 %v846
    %vm854 = vweird.f32 %v847
    %vm855 = vmor %vm853, %vm854
    %v856 = vsel %vm855, %v847, %v852
    %v857 = vmul.f32 %v841, %v856
    %v858 = vmul.f32 %v857, %v503
    %v859 = vadd.f32 %v858, %v506
    %v860 = vmul.f32 %v508, %v759
    %v861 = vadd.f32 %v860, %v859
    %v862 = vmul.f32 %v511, %v761
    %v863 = vadd.f32 %v513, %v862
    %vm864 = vcmp.ge.f32.partialorder %v861, %v863
    %v865 = vsel %vm864, 1, 0
    %v866 = vcvt.s32.f32 %v865
    %v867 = vmul.f32 %v866, %v863
    %v868 = vsub.f32 %v861, %v867
    %v869 = vmul.f32 %v761, 0.9
    %v870 = vadd.f32 %v869, %v866
    %871 = vmatpush.msra.mxu0 %v537
    %872 = vmatpush.msra.mxu0 %v536
    %873 = vmatpush.msra.mxu0 %v535
    %874 = vmatpush.msra.mxu0 %v534
    %875 = vmatpush.msra.mxu0 %v533
    %876 = vmatpush.msra.mxu0 %v532
    %877 = vmatpush.msra.mxu0 %v531
    %878 = vmatpush.msra.mxu0 %v530
    %879 = vmatpush.msra.mxu0 %v529
    %880 = vmatpush.msra.mxu0 %v528
    %881 = vmatpush.msra.mxu0 %v527
    %882 = vmatpush.msra.mxu0 %v526
    %883 = vmatpush.msra.mxu0 %v525
    %884 = vmatpush.msra.mxu0 %v524
    %885 = vmatpush.msra.mxu0 %v523
    %886 = vmatpush.msra.mxu0 %v522
    %887 = vmatmul.f32.gmra.mxu0 %v866
    %v888 = vpop.f32.mrf.mxu0
    %v889 = vadd.f32 %v539, %v888
    %890 = vdwg.mxu0
    %891 = vadd.xlane.f32.xlu0 %v889
    %v892 = vpop.xlane.xlu0 %891
    %v893 = vmul.f32 %v892, 0.0625
    %v894 = vsub.f32 %v889, %v893
    %v895 = vmul.f32 %v894, %v57
    %v896 = vmul.f32 %v895, %v895
    %897 = vadd.xlane.f32.xlu0 %v896
    %v898 = vpop.xlane.xlu0 %897
    %v899 = vmul.f32 %v898, 0.0625
    %v900 = vadd.f32 %v899, 1e-05
    %v901 = vrsqrt.pop %v900
    %v902 = vmul.f32 %v901, %v900
    %v903 = vmul.f32 %v902, %v901
    %v904 = vmul.f32 0.5, %v903
    %v905 = vsub.f32 1.5, %v904
    %v906 = vmul.f32 %v901, %v905
    %vm907 = vweird.f32 %v900
    %vm908 = vweird.f32 %v901
    %vm909 = vmor %vm907, %vm908
    %v910 = vsel %vm909, %v901, %v906
    %v911 = vmul.f32 %v895, %v910
    %v912 = vmul.f32 %v911, %v582
    %v913 = vadd.f32 %v912, %v585
    %v914 = vadd.f32 %v805, %v913
    %v915 = vmul.f32 %v429, %v814
    %v916 = vadd.f32 %v915, %v422
    %v917 = vmul.f32 %v432, %v816
    %v918 = vadd.f32 %v434, %v917
    %vm919 = vcmp.ge.f32.partialorder %v916, %v918
    %v920 = vsel %vm919, 1, 0
    %v921 = vcvt.s32.f32 %v920
    %v922 = vmul.f32 %v921, %v918
    %v923 = vsub.f32 %v916, %v922
    %v924 = vmul.f32 %v816, 0.9
    %v925 = vadd.f32 %v924, %v921
    %926 = vmatpush.msra.mxu0 %v458
    %927 = vmatpush.msra.mxu0 %v457
    %928 = vmatpush.msra.mxu0 %v456
    %929 = vmatpush.msra.mxu0 %v455
    %930 = vmatpush.msra.mxu0 %v454
    %931 = vmatpush.msra.mxu0 %v453
    %932 = vmatpush.msra.mxu0 %v452
    %933 = vmatpush.msra.mxu0 %v451
    %934 = vmatpush.msra.mxu0 %v450
    %935 = vmatpush.msra.mxu0 %v449
    %936 = vmatpush.msra.mxu0 %v448
    %937 = vmatpush.msra.mxu0 %v447
    %938 = vmatpush.msra.mxu0 %v446
    %939 = vmatpush.msra.mxu0 %v445
    %940 = vmatpush.msra.mxu0 %v444
    %941 = vmatpush.msra.mxu0 %v443
    %942 = vmatmul.f32.gmra.mxu0 %v921
    %v943 = vpop.f32.mrf.mxu0
    %v944 = vadd.f32 %v460, %v943
    %945 = vdwg.mxu0
    %946 = vadd.xlane.f32.xlu0 %v944
    %v947 = vpop.xlane.xlu0 %946
    %v948 = vmul.f32 %v947, 0.03125
    %v949 = vsub.f32 %v944, %v948
    %v950 = vmul.f32 %v949, %v54
    %v951 = vmul.f32 %v950, %v950
    %952 = vadd.xlane.f32.xlu0 %v951
    %v953 = vpop.xlane.xlu0 %952
    %v954 = vmul.f32 %v953, 0.03125
    %v955 = vadd.f32 %v954, 1e-05
    %v956 = vrsqrt.pop %v955
    %v957 = vmul.f32 %v956, %v955
    %v958 = vmul.f32 %v957, %v956
    %v959 = vmul.f32 0.5, %v958
    %v960 = vsub.f32 1.5, %v959
    %v961 = vmul.f32 %v956, %v960
    %vm962 = vweird.f32 %v955
    %vm963 = vweird.f32 %v956
    %vm964 = vmor %vm962, %vm963
    %v965 = vsel %vm964, %v956, %v961
    %v966 = vmul.f32 %v950, %v965
    %v967 = vmul.f32 %v966, %v503
    %v968 = vadd.f32 %v967, %v506
    %v969 = vmul.f32 %v508, %v868
    %v970 = vadd.f32 %v969, %v968
    %v971 = vmul.f32 %v511, %v870
    %v972 = vadd.f32 %v513, %v971
    %vm973 = vcmp.ge.f32.partialorder %v970, %v972
    %v974 = vsel %vm973, 1, 0
    %v975 = vcvt.s32.f32 %v974
    %v976 = vmul.f32 %v975, %v972
    %v977 = vsub.f32 %v970, %v976
    %v978 = vmul.f32 %v870, 0.9
    %v979 = vadd.f32 %v978, %v975
    %980 = vmatpush.msra.mxu0 %v537
    %981 = vmatpush.msra.mxu0 %v536
    %982 = vmatpush.msra.mxu0 %v535
    %983 = vmatpush.msra.mxu0 %v534
    %984 = vmatpush.msra.mxu0 %v533
    %985 = vmatpush.msra.mxu0 %v532
    %986 = vmatpush.msra.mxu0 %v531
    %987 = vmatpush.msra.mxu0 %v530
    %988 = vmatpush.msra.mxu0 %v529
    %989 = vmatpush.msra.mxu0 %v528
    %990 = vmatpush.msra.mxu0 %v527
    %991 = vmatpush.msra.mxu0 %v526
    %992 = vmatpush.msra.mxu0 %v525
    %993 = vmatpush.msra.mxu0 %v524
    %994 = vmatpush.msra.mxu0 %v523
    %995 = vmatpush.msra.mxu0 %v522
    %996 = vmatmul.f32.gmra.mxu0 %v975
    %v997 = vpop.f32.mrf.mxu0
    %v998 = vadd.f32 %v539, %v997
    %999 = vdwg.mxu0
    %1000 = vadd.xlane.f32.xlu0 %v998
    %v1001 = vpop.xlane.xlu0 %1000
    %v1002 = vmul.f32 %v1001, 0.0625
    %v1003 = vsub.f32 %v998, %v1002
    %v1004 = vmul.f32 %v1003, %v57
    %v1005 = vmul.f32 %v1004, %v1004
    %1006 = vadd.xlane.f32.xlu0 %v1005
    %v1007 = vpop.xlane.xlu0 %1006
    %v1008 = vmul.f32 %v1007, 0.0625
    %v1009 = vadd.f32 %v1008, 1e-05
    %v1010 = vrsqrt.pop %v1009
    %v1011 = vmul.f32 %v1010, %v1009
    %v1012 = vmul.f32 %v1011, %v1010
    %v1013 = vmul.f32 0.5, %v1012
    %v1014 = vsub.f32 1.5, %v1013
    %v1015 = vmul.f32 %v1010, %v1014
    %vm1016 = vweird.f32 %v1009
    %vm1017 = vweird.f32 %v1010
    %vm1018 = vmor %vm1016, %vm1017
    %v1019 = vsel %vm1018, %v1010, %v1015
    %v1020 = vmul.f32 %v1004, %v1019
    %v1021 = vmul.f32 %v1020, %v582
    %v1022 = vadd.f32 %v1021, %v585
    %v1023 = vadd.f32 %v914, %v1022
    %v1024 = vmul.f32 %v429, %v923
    %v1025 = vadd.f32 %v1024, %v422
    %v1026 = vmul.f32 %v432, %v925
    %v1027 = vadd.f32 %v434, %v1026
    %vm1028 = vcmp.ge.f32.partialorder %v1025, %v1027
    %v1029 = vsel %vm1028, 1, 0
    %v1030 = vcvt.s32.f32 %v1029
    %v1031 = vmul.f32 %v1030, %v1027
    %v1032 = vsub.f32 %v1025, %v1031
    %v1033 = vmul.f32 %v925, 0.9
    %v1034 = vadd.f32 %v1033, %v1030
    %1035 = vmatpush.msra.mxu0 %v458
    %1036 = vmatpush.msra.mxu0 %v457
    %1037 = vmatpush.msra.mxu0 %v456
    %1038 = vmatpush.msra.mxu0 %v455
    %1039 = vmatpush.msra.mxu0 %v454
    %1040 = vmatpush.msra.mxu0 %v453
    %1041 = vmatpush.msra.mxu0 %v452
    %1042 = vmatpush.msra.mxu0 %v451
    %1043 = vmatpush.msra.mxu0 %v450
    %1044 = vmatpush.msra.mxu0 %v449
    %1045 = vmatpush.msra.mxu0 %v448
    %1046 = vmatpush.msra.mxu0 %v447
    %1047 = vmatpush.msra.mxu0 %v446
    %1048 = vmatpush.msra.mxu0 %v445
    %1049 = vmatpush.msra.mxu0 %v444
    %1050 = vmatpush.msra.mxu0 %v443
    %1051 = vmatmul.f32.gmra.mxu0 %v1030
    %v1052 = vpop.f32.mrf.mxu0
    %v1053 = vadd.f32 %v460, %v1052
    %1054 = vdwg.mxu0
    %1055 = vadd.xlane.f32.xlu0 %v1053
    %v1056 = vpop.xlane.xlu0 %1055
    %v1057 = vmul.f32 %v1056, 0.03125
    %v1058 = vsub.f32 %v1053, %v1057
    %v1059 = vmul.f32 %v1058, %v54
    %v1060 = vmul.f32 %v1059, %v1059
    %1061 = vadd.xlane.f32.xlu0 %v1060
    %v1062 = vpop.xlane.xlu0 %1061
    %v1063 = vmul.f32 %v1062, 0.03125
    %v1064 = vadd.f32 %v1063, 1e-05
    %v1065 = vrsqrt.pop %v1064
    %v1066 = vmul.f32 %v1065, %v1064
    %v1067 = vmul.f32 %v1066, %v1065
    %v1068 = vmul.f32 0.5, %v1067
    %v1069 = vsub.f32 1.5, %v1068
    %v1070 = vmul.f32 %v1065, %v1069
    %vm1071 = vweird.f32 %v1064
    %vm1072 = vweird.f32 %v1065
    %vm1073 = vmor %vm1071, %vm1072
    %v1074 = vsel %vm1073, %v1065, %v1070
    %v1075 = vmul.f32 %v1059, %v1074
    %v1076 = vmul.f32 %v1075, %v503
    %v1077 = vadd.f32 %v1076, %v506
    %v1078 = vmul.f32 %v508, %v977
    %v1079 = vadd.f32 %v1078, %v1077
    %v1080 = vmul.f32 %v511, %v979
    %v1081 = vadd.f32 %v513, %v1080
    %vm1082 = vcmp.ge.f32.partialorder %v1079, %v1081
    %v1083 = vsel %vm1082, 1, 0
    %v1084 = vcvt.s32.f32 %v1083
    %v1085 = vmul.f32 %v1084, %v1081
    %v1086 = vsub.f32 %v1079, %v1085
    %v1087 = vmul.f32 %v979, 0.9
    %v1088 = vadd.f32 %v1087, %v1084
    %1089 = vmatpush.msra.mxu0 %v537
    %1090 = vmatpush.msra.mxu0 %v536
    %1091 = vmatpush.msra.mxu0 %v535
    %1092 = vmatpush.msra.mxu0 %v534
    %1093 = vmatpush.msra.mxu0 %v533
    %1094 = vmatpush.msra.mxu0 %v532
    %1095 = vmatpush.msra.mxu0 %v531
    %1096 = vmatpush.msra.mxu0 %v530
    %1097 = vmatpush.msra.mxu0 %v529
    %1098 = vmatpush.msra.mxu0 %v528
    %1099 = vmatpush.msra.mxu0 %v527
    %1100 = vmatpush.msra.mxu0 %v526
    %1101 = vmatpush.msra.mxu0 %v525
    %1102 = vmatpush.msra.mxu0 %v524
    %1103 = vmatpush.msra.mxu0 %v523
    %1104 = vmatpush.msra.mxu0 %v522
    %1105 = vmatmul.f32.gmra.mxu0 %v1084
    %v1106 = vpop.f32.mrf.mxu0
    %v1107 = vadd.f32 %v539, %v1106
    %1108 = vdwg.mxu0
    %1109 = vadd.xlane.f32.xlu0 %v1107
    %v1110 = vpop.xlane.xlu0 %1109
    %v1111 = vmul.f32 %v1110, 0.0625
    %v1112 = vsub.f32 %v1107, %v1111
    %v1113 = vmul.f32 %v1112, %v57
    %v1114 = vmul.f32 %v1113, %v1113
    %1115 = vadd.xlane.f32.xlu0 %v1114
    %v1116 = vpop.xlane.xlu0 %1115
    %v1117 = vmul.f32 %v1116, 0.0625
    %v1118 = vadd.f32 %v1117, 1e-05
    %v1119 = vrsqrt.pop %v1118
    %v1120 = vmul.f32 %v1119, %v1118
    %v1121 = vmul.f32 %v1120, %v1119
    %v1122 = vmul.f32 0.5, %v1121
    %v1123 = vsub.f32 1.5, %v1122
    %v1124 = vmul.f32 %v1119, %v1123
    %vm1125 = vweird.f32 %v1118
    %vm1126 = vweird.f32 %v1119
    %vm1127 = vmor %vm1125, %vm1126
    %v1128 = vsel %vm1127, %v1119, %v1124
    %v1129 = vmul.f32 %v1113, %v1128
    %v1130 = vmul.f32 %v1129, %v582
    %v1131 = vadd.f32 %v1130, %v585
    %v1132 = vadd.f32 %v1023, %v1131
    %v1133 = vmul.f32 %v429, %v1032
    %v1134 = vadd.f32 %v1133, %v422
    %v1135 = vmul.f32 %v432, %v1034
    %v1136 = vadd.f32 %v434, %v1135
    %vm1137 = vcmp.ge.f32.partialorder %v1134, %v1136
    %v1138 = vsel %vm1137, 1, 0
    %v1139 = vcvt.s32.f32 %v1138
    %v1140 = vmul.f32 %v1139, %v1136
    %v1141 = vsub.f32 %v1134, %v1140
    %v1142 = vmul.f32 %v1034, 0.9
    %v1143 = vadd.f32 %v1142, %v1139
    %1144 = vmatpush.msra.mxu0 %v458
    %1145 = vmatpush.msra.mxu0 %v457
    %1146 = vmatpush.msra.mxu0 %v456
    %1147 = vmatpush.msra.mxu0 %v455
    %1148 = vmatpush.msra.mxu0 %v454
    %1149 = vmatpush.msra.mxu0 %v453
    %1150 = vmatpush.msra.mxu0 %v452
    %1151 = vmatpush.msra.mxu0 %v451
    %1152 = vmatpush.msra.mxu0 %v450
    %1153 = vmatpush.msra.mxu0 %v449
    %1154 = vmatpush.msra.mxu0 %v448
    %1155 = vmatpush.msra.mxu0 %v447
    %1156 = vmatpush.msra.mxu0 %v446
    %1157 = vmatpush.msra.mxu0 %v445
    %1158 = vmatpush.msra.mxu0 %v444
    %1159 = vmatpush.msra.mxu0 %v443
    %1160 = vmatmul.f32.gmra.mxu0 %v1139
    %v1161 = vpop.f32.mrf.mxu0
    %v1162 = vadd.f32 %v460, %v1161
    %1163 = vdwg.mxu0
    %1164 = vadd.xlane.f32.xlu0 %v1162
    %v1165 = vpop.xlane.xlu0 %1164
    %v1166 = vmul.f32 %v1165, 0.03125
    %v1167 = vsub.f32 %v1162, %v1166
    %v1168 = vmul.f32 %v1167, %v54
    %v1169 = vmul.f32 %v1168, %v1168
    %1170 = vadd.xlane.f32.xlu0 %v1169
    %v1171 = vpop.xlane.xlu0 %1170
    %v1172 = vmul.f32 %v1171, 0.03125
    %v1173 = vadd.f32 %v1172, 1e-05
    %v1174 = vrsqrt.pop %v1173
    %v1175 = vmul.f32 %v1174, %v1173
    %v1176 = vmul.f32 %v1175, %v1174
    %v1177 = vmul.f32 0.5, %v1176
    %v1178 = vsub.f32 1.5, %v1177
    %v1179 = vmul.f32 %v1174, %v1178
    %vm1180 = vweird.f32 %v1173
    %vm1181 = vweird.f32 %v1174
    %vm1182 = vmor %vm1180, %vm1181
    %v1183 = vsel %vm1182, %v1174, %v1179
    %v1184 = vmul.f32 %v1168, %v1183
    %v1185 = vmul.f32 %v1184, %v503
    %v1186 = vadd.f32 %v1185, %v506
    %v1187 = vmul.f32 %v508, %v1086
    %v1188 = vadd.f32 %v1187, %v1186
    %v1189 = vmul.f32 %v511, %v1088
    %v1190 = vadd.f32 %v513, %v1189
    %vm1191 = vcmp.ge.f32.partialorder %v1188, %v1190
    %v1192 = vsel %vm1191, 1, 0
    %v1193 = vcvt.s32.f32 %v1192
    %v1194 = vmul.f32 %v1193, %v1190
    %v1195 = vsub.f32 %v1188, %v1194
    %v1196 = vmul.f32 %v1088, 0.9
    %v1197 = vadd.f32 %v1196, %v1193
    %1198 = vmatpush.msra.mxu0 %v537
    %1199 = vmatpush.msra.mxu0 %v536
    %1200 = vmatpush.msra.mxu0 %v535
    %1201 = vmatpush.msra.mxu0 %v534
    %1202 = vmatpush.msra.mxu0 %v533
    %1203 = vmatpush.msra.mxu0 %v532
    %1204 = vmatpush.msra.mxu0 %v531
    %1205 = vmatpush.msra.mxu0 %v530
    %1206 = vmatpush.msra.mxu0 %v529
    %1207 = vmatpush.msra.mxu0 %v528
    %1208 = vmatpush.msra.mxu0 %v527
    %1209 = vmatpush.msra.mxu0 %v526
    %1210 = vmatpush.msra.mxu0 %v525
    %1211 = vmatpush.msra.mxu0 %v524
    %1212 = vmatpush.msra.mxu0 %v523
    %1213 = vmatpush.msra.mxu0 %v522
    %1214 = vmatmul.f32.gmra.mxu0 %v1193
    %v1215 = vpop.f32.mrf.mxu0
    %v1216 = vadd.f32 %v539, %v1215
    %1217 = vdwg.mxu0
    %1218 = vadd.xlane.f32.xlu0 %v1216
    %v1219 = vpop.xlane.xlu0 %1218
    %v1220 = vmul.f32 %v1219, 0.0625
    %v1221 = vsub.f32 %v1216, %v1220
    %v1222 = vmul.f32 %v1221, %v57
    %v1223 = vmul.f32 %v1222, %v1222
    %1224 = vadd.xlane.f32.xlu0 %v1223
    %v1225 = vpop.xlane.xlu0 %1224
    %v1226 = vmul.f32 %v1225, 0.0625
    %v1227 = vadd.f32 %v1226, 1e-05
    %v1228 = vrsqrt.pop %v1227
    %v1229 = vmul.f32 %v1228, %v1227
    %v1230 = vmul.f32 %v1229, %v1228
    %v1231 = vmul.f32 0.5, %v1230
    %v1232 = vsub.f32 1.5, %v1231
    %v1233 = vmul.f32 %v1228, %v1232
    %vm1234 = vweird.f32 %v1227
    %vm1235 = vweird.f32 %v1228
    %vm1236 = vmor %vm1234, %vm1235
    %v1237 = vsel %vm1236, %v1228, %v1233
    %v1238 = vmul.f32 %v1222, %v1237
    %v1239 = vmul.f32 %v1238, %v582
    %v1240 = vadd.f32 %v1239, %v585
    %v1241 = vadd.f32 %v1132, %v1240
    %v1242 = vmul.f32 %v429, %v1141
    %v1243 = vadd.f32 %v1242, %v422
    %v1244 = vmul.f32 %v432, %v1143
    %v1245 = vadd.f32 %v434, %v1244
    %vm1246 = vcmp.ge.f32.partialorder %v1243, %v1245
    %v1247 = vsel %vm1246, 1, 0
    %v1248 = vcvt.s32.f32 %v1247
    %1249 = vmatpush.msra.mxu0 %v458
    %1250 = vmatpush.msra.mxu0 %v457
    %1251 = vmatpush.msra.mxu0 %v456
    %1252 = vmatpush.msra.mxu0 %v455
    %1253 = vmatpush.msra.mxu0 %v454
    %1254 = vmatpush.msra.mxu0 %v453
    %1255 = vmatpush.msra.mxu0 %v452
    %1256 = vmatpush.msra.mxu0 %v451
    %1257 = vmatpush.msra.mxu0 %v450
    %1258 = vmatpush.msra.mxu0 %v449
    %1259 = vmatpush.msra.mxu0 %v448
    %1260 = vmatpush.msra.mxu0 %v447
    %1261 = vmatpush.msra.mxu0 %v446
    %1262 = vmatpush.msra.mxu0 %v445
    %1263 = vmatpush.msra.mxu0 %v444
    %1264 = vmatpush.msra.mxu0 %v443
    %1265 = vmatmul.f32.gmra.mxu0 %v1248
    %v1266 = vpop.f32.mrf.mxu0
    %v1267 = vadd.f32 %v460, %v1266
    %1268 = vdwg.mxu0
    %1269 = vadd.xlane.f32.xlu0 %v1267
    %v1270 = vpop.xlane.xlu0 %1269
    %v1271 = vmul.f32 %v1270, 0.03125
    %v1272 = vsub.f32 %v1267, %v1271
    %v1273 = vmul.f32 %v1272, %v54
    %v1274 = vmul.f32 %v1273, %v1273
    %1275 = vadd.xlane.f32.xlu0 %v1274
    %v1276 = vpop.xlane.xlu0 %1275
    %v1277 = vmul.f32 %v1276, 0.03125
    %v1278 = vadd.f32 %v1277, 1e-05
    %v1279 = vrsqrt.pop %v1278
    %v1280 = vmul.f32 %v1279, %v1278
    %v1281 = vmul.f32 %v1280, %v1279
    %v1282 = vmul.f32 0.5, %v1281
    %v1283 = vsub.f32 1.5, %v1282
    %v1284 = vmul.f32 %v1279, %v1283
    %vm1285 = vweird.f32 %v1278
    %vm1286 = vweird.f32 %v1279
    %vm1287 = vmor %vm1285, %vm1286
    %v1288 = vsel %vm1287, %v1279, %v1284
    %v1289 = vmul.f32 %v1273, %v1288
    %v1290 = vmul.f32 %v1289, %v503
    %v1291 = vadd.f32 %v1290, %v506
    %v1292 = vmul.f32 %v508, %v1195
    %v1293 = vadd.f32 %v1292, %v1291
    %v1294 = vmul.f32 %v511, %v1197
    %v1295 = vadd.f32 %v513, %v1294
    %vm1296 = vcmp.ge.f32.partialorder %v1293, %v1295
    %v1297 = vsel %vm1296, 1, 0
    %v1298 = vcvt.s32.f32 %v1297
    %1299 = vmatpush.msra.mxu0 %v537
    %1300 = vmatpush.msra.mxu0 %v536
    %1301 = vmatpush.msra.mxu0 %v535
    %1302 = vmatpush.msra.mxu0 %v534
    %1303 = vmatpush.msra.mxu0 %v533
    %1304 = vmatpush.msra.mxu0 %v532
    %1305 = vmatpush.msra.mxu0 %v531
    %1306 = vmatpush.msra.mxu0 %v530
    %1307 = vmatpush.msra.mxu0 %v529
    %1308 = vmatpush.msra.mxu0 %v528
    %1309 = vmatpush.msra.mxu0 %v527
    %1310 = vmatpush.msra.mxu0 %v526
    %1311 = vmatpush.msra.mxu0 %v525
    %1312 = vmatpush.msra.mxu0 %v524
    %1313 = vmatpush.msra.mxu0 %v523
    %1314 = vmatpush.msra.mxu0 %v522
    %1315 = vmatmul.f32.gmra.mxu0 %v1298
    %v1316 = vpop.f32.mrf.mxu0
    %v1317 = vadd.f32 %v539, %v1316
    %1318 = vdwg.mxu0
    %1319 = vadd.xlane.f32.xlu0 %v1317
    %v1320 = vpop.xlane.xlu0 %1319
    %v1321 = vmul.f32 %v1320, 0.0625
    %v1322 = vsub.f32 %v1317, %v1321
    %v1323 = vmul.f32 %v1322, %v57
    %v1324 = vmul.f32 %v1323, %v1323
    %1325 = vadd.xlane.f32.xlu0 %v1324
    %v1326 = vpop.xlane.xlu0 %1325
    %v1327 = vmul.f32 %v1326, 0.0625
    %v1328 = vadd.f32 %v1327, 1e-05
    %v1329 = vrsqrt.pop %v1328
    %v1330 = vmul.f32 %v1329, %v1328
    %v1331 = vmul.f32 %v1330, %v1329
    %v1332 = vmul.f32 0.5, %v1331
    %v1333 = vsub.f32 1.5, %v1332
    %v1334 = vmul.f32 %v1329, %v1333
    %vm1335 = vweird.f32 %v1328
    %vm1336 = vweird.f32 %v1329
    %vm1337 = vmor %vm1335, %vm1336
    %v1338 = vsel %vm1337, %v1329, %v1334
    %v1339 = vmul.f32 %v1323, %v1338
    %v1340 = vmul.f32 %v1339, %v582
    %v1341 = vadd.f32 %v1340, %v585
    %v1342 = vadd.f32 %v1241, %v1341
    %v1343 = vmul.f32 %v1342, 0.125
    %s1344 = scalar_lea.vmem [#allocation4], 768
    %v1345 = vld [vmem:[%s1344] sm:$0xff]
    %v1346 = vld [vmem:[%s1344 + $0x8] sm:$0xff]
    %v1347 = vld [vmem:[%s1344 + $0x10] sm:$0xff]
    %v1348 = vld [vmem:[%s1344 + $0x18] sm:$0xff]
    %v1349 = vld [vmem:[%s1344 + $0x20] sm:$0xff]
    %v1350 = vld [vmem:[%s1344 + $0x28] sm:$0xff]
    %v1351 = vld [vmem:[%s1344 + $0x30] sm:$0xff]
    %v1352 = vld [vmem:[%s1344 + $0x38] sm:$0xff]
    %v1353 = vld [vmem:[%s1344 + $0x40] sm:$0xff]
    %v1354 = vld [vmem:[%s1344 + $0x48] sm:$0xff]
    %v1355 = vld [vmem:[%s1344 + $0x50] sm:$0xff]
    %v1356 = vld [vmem:[%s1344 + $0x58] sm:$0xff]
    %v1357 = vld [vmem:[%s1344 + $0x60] sm:$0xff]
    %v1358 = vld [vmem:[%s1344 + $0x68] sm:$0xff]
    %v1359 = vld [vmem:[%s1344 + $0x70] sm:$0xff]
    %v1360 = vld [vmem:[%s1344 + $0x78] sm:$0xff]
    %v1361 = vld [vmem:[#allocation2 + $0x16] sm:$0x1]
    %v1362 = vperm.slane %v1361, 0
    %1363 = vmatpush.msra.mxu0 %v1360
    %1364 = vmatpush.msra.mxu0 %v1359
    %1365 = vmatpush.msra.mxu0 %v1358
    %1366 = vmatpush.msra.mxu0 %v1357
    %1367 = vmatpush.msra.mxu0 %v1356
    %1368 = vmatpush.msra.mxu0 %v1355
    %1369 = vmatpush.msra.mxu0 %v1354
    %1370 = vmatpush.msra.mxu0 %v1353
    %1371 = vmatpush.msra.mxu0 %v1352
    %1372 = vmatpush.msra.mxu0 %v1351
    %1373 = vmatpush.msra.mxu0 %v1350
    %1374 = vmatpush.msra.mxu0 %v1349
    %1375 = vmatpush.msra.mxu0 %v1348
    %1376 = vmatpush.msra.mxu0 %v1347
    %1377 = vmatpush.msra.mxu0 %v1346
    %1378 = vmatpush.msra.mxu0 %v1345
    %1379 = vmatmul.f32.gmra.mxu0 %v1343
    %v1380 = vpop.f32.mrf.mxu0
    %v1381 = vadd.f32 %v1362, %v1380
    %1382 = vdwg.mxu0
    %s1383 = scalar_lea.vmem [#allocation4], 896
    %v1384 = vld [vmem:[%s1383] sm:$0xff]
    %v1385 = vld [vmem:[%s1383 + $0x8] sm:$0xff]
    %v1386 = vld [vmem:[%s1383 + $0x10] sm:$0xff]
    %v1387 = vld [vmem:[%s1383 + $0x18] sm:$0xff]
    %v1388 = vld [vmem:[%s1383 + $0x20] sm:$0xff]
    %v1389 = vld [vmem:[%s1383 + $0x28] sm:$0xff]
    %v1390 = vld [vmem:[%s1383 + $0x30] sm:$0xff]
    %v1391 = vld [vmem:[%s1383 + $0x38] sm:$0xff]
    %v1392 = vld [vmem:[%s1383 + $0x40] sm:$0xff]
    %v1393 = vld [vmem:[%s1383 + $0x48] sm:$0xff]
    %v1394 = vld [vmem:[%s1383 + $0x50] sm:$0xff]
    %v1395 = vld [vmem:[%s1383 + $0x58] sm:$0xff]
    %v1396 = vld [vmem:[%s1383 + $0x60] sm:$0xff]
    %v1397 = vld [vmem:[%s1383 + $0x68] sm:$0xff]
    %v1398 = vld [vmem:[%s1383 + $0x70] sm:$0xff]
    %v1399 = vld [vmem:[%s1383 + $0x78] sm:$0xff]
    %v1400 = vld [vmem:[#allocation2 + $0x17] sm:$0x1]
    %v1401 = vperm.slane %v1400, 0
    %1402 = vmatpush.msra.mxu0 %v1399
    %1403 = vmatpush.msra.mxu0 %v1398
    %1404 = vmatpush.msra.mxu0 %v1397
    %1405 = vmatpush.msra.mxu0 %v1396
    %1406 = vmatpush.msra.mxu0 %v1395
    %1407 = vmatpush.msra.mxu0 %v1394
    %1408 = vmatpush.msra.mxu0 %v1393
    %1409 = vmatpush.msra.mxu0 %v1392
    %1410 = vmatpush.msra.mxu0 %v1391
    %1411 = vmatpush.msra.mxu0 %v1390
    %1412 = vmatpush.msra.mxu0 %v1389
    %1413 = vmatpush.msra.mxu0 %v1388
    %1414 = vmatpush.msra.mxu0 %v1387
    %1415 = vmatpush.msra.mxu0 %v1386
    %1416 = vmatpush.msra.mxu0 %v1385
    %1417 = vmatpush.msra.mxu0 %v1384
    %1418 = vmatmul.f32.gmra.mxu0 %v1381
    %v1419 = vpop.f32.mrf.mxu0
    %v1420 = vadd.f32 %v1401, %v1419
    %1421 = vdwg.mxu0
    %s1422 = scalar_lea.vmem [#allocation4], 1024
    %v1423 = vld [vmem:[%s1422] sm:$0xff]
    %v1424 = vld [vmem:[%s1422 + $0x8] sm:$0xff]
    %v1425 = vld [vmem:[%s1422 + $0x10] sm:$0xff]
    %v1426 = vld [vmem:[%s1422 + $0x18] sm:$0xff]
    %v1427 = vld [vmem:[%s1422 + $0x20] sm:$0xff]
    %v1428 = vld [vmem:[%s1422 + $0x28] sm:$0xff]
    %v1429 = vld [vmem:[%s1422 + $0x30] sm:$0xff]
    %v1430 = vld [vmem:[%s1422 + $0x38] sm:$0xff]
    %v1431 = vld [vmem:[%s1422 + $0x40] sm:$0xff]
    %v1432 = vld [vmem:[%s1422 + $0x48] sm:$0xff]
    %v1433 = vld [vmem:[%s1422 + $0x50] sm:$0xff]
    %v1434 = vld [vmem:[%s1422 + $0x58] sm:$0xff]
    %v1435 = vld [vmem:[%s1422 + $0x60] sm:$0xff]
    %v1436 = vld [vmem:[%s1422 + $0x68] sm:$0xff]
    %v1437 = vld [vmem:[%s1422 + $0x70] sm:$0xff]
    %v1438 = vld [vmem:[%s1422 + $0x78] sm:$0xff]
    %v1439 = vld [vmem:[#allocation2 + $0x18] sm:$0x1]
    %v1440 = vperm.slane %v1439, 0
    %1441 = vmatpush.msra.mxu0 %v1438
    %1442 = vmatpush.msra.mxu0 %v1437
    %1443 = vmatpush.msra.mxu0 %v1436
    %1444 = vmatpush.msra.mxu0 %v1435
    %1445 = vmatpush.msra.mxu0 %v1434
    %1446 = vmatpush.msra.mxu0 %v1433
    %1447 = vmatpush.msra.mxu0 %v1432
    %1448 = vmatpush.msra.mxu0 %v1431
    %1449 = vmatpush.msra.mxu0 %v1430
    %1450 = vmatpush.msra.mxu0 %v1429
    %1451 = vmatpush.msra.mxu0 %v1428
    %1452 = vmatpush.msra.mxu0 %v1427
    %1453 = vmatpush.msra.mxu0 %v1426
    %1454 = vmatpush.msra.mxu0 %v1425
    %1455 = vmatpush.msra.mxu0 %v1424
    %1456 = vmatpush.msra.mxu0 %v1423
    %1457 = vmatmul.f32.gmra.mxu0 %v1420
    %v1458 = vpop.f32.mrf.mxu0
    %v1459 = vadd.f32 %v1440, %v1458
    %1460 = vdwg.mxu0
    %1461 = vadd.xlane.f32.xlu0 %v1459
    %v1462 = vpop.xlane.xlu0 %1461
    %v1463 = vmul.f32 %v1462, 0.125
    %v1464 = vsub.f32 %v1459, %v1463
    %v1465 = vmul.f32 %v1464, %v60
    %v1466 = vmul.f32 %v1465, %v1465
    %1467 = vadd.xlane.f32.xlu0 %v1466
    %v1468 = vpop.xlane.xlu0 %1467
    %v1469 = vmul.f32 %v1468, 0.125
    %v1470 = vadd.f32 %v1469, 1e-05
    %v1471 = vrsqrt.pop %v1470
    %v1472 = vmul.f32 %v1471, %v1470
    %v1473 = vmul.f32 %v1472, %v1471
    %v1474 = vmul.f32 0.5, %v1473
    %v1475 = vsub.f32 1.5, %v1474
    %v1476 = vmul.f32 %v1471, %v1475
    %vm1477 = vweird.f32 %v1470
    %vm1478 = vweird.f32 %v1471
    %vm1479 = vmor %vm1477, %vm1478
    %v1480 = vsel %vm1479, %v1471, %v1476
    %v1481 = vmul.f32 %v1465, %v1480
    %v1482 = vld [vmem:[#allocation2 + $0x19] sm:$0x1]
    %v1483 = vperm.slane %v1482, 0
    %v1484 = vmul.f32 %v1481, %v1483
    %v1485 = vld [vmem:[#allocation2 + $0x1a] sm:$0x1]
    %v1486 = vperm.slane %v1485, 0
    %v1487 = vadd.f32 %v1484, %v1486
    %v1488 = vmul.f32 %v1487, 0.5
    %v1489 = vmul.f32 %v1487, %v132
    %vm1490 = vcmp.ge.f32.partialorder %v1489, 0.0
    %v1491 = vsel %vm1490, 1.0, -1.0
    %v1492 = vand.u32 2147483647, %v1489
    %v1493 = vmul.f32 %v1492, 0.3275911
    %v1494 = vadd.f32 %v1493, 1.0
    %v1495 = vrcp.pop %v1494
    %v1496 = vmul.f32 %v1494, %v1495
    %v1497 = vsub.f32 1.0, %v1496
    %v1498 = vmul.f32 %v1495, %v1497
    %v1499 = vadd.f32 %v1495, %v1498
    %vm1500 = vweird.f32 %v1494
    %vm1501 = vweird.f32 %v1495
    %vm1502 = vmor %vm1500, %vm1501
    %v1503 = vsel %vm1502, %v1495, %v1499
    %v1504 = vand.u32 2147483647, %v1494
    %vm1505 = vcmp.eq.f32.partialorder %v1504, 8.507059e+37
    %v1506 = vand.u32 %v1494, 2147483648
    %v1507 = vor.u32 1.1754944e-38, %v1506
    %v1508 = vsel %vm1505, %v1507, %v1503
    %v1509 = vmul.f32 1.0, %v1508
    %v1510 = vmul.f32 %v1509, 1.0614054
    %v1511 = vadd.f32 %v1510, -1.4531521
    %v1512 = vmul.f32 %v1511, %v1509
    %v1513 = vadd.f32 %v1512, 1.4214138
    %v1514 = vmul.f32 %v1513, %v1509
    %v1515 = vadd.f32 %v1514, -0.28449672
    %v1516 = vmul.f32 %v1515, %v1509
    %v1517 = vadd.f32 %v1516, 0.2548296
    %v1518 = vmul.f32 %v1517, %v1509
    %v1519 = vsub.f32 0.0, %v1492
    %v1520 = vmul.f32 %v1519, %v1492
    %v1521 = vmul.f32 %v1520, 1.442695
    %v1522 = vpow.pop %v1521
    %v1523 = vmul.f32 %v1518, %v1522
    %v1524 = vsub.f32 1.0, %v1523
    %v1525 = vmul.f32 %v1491, %v1524
    %v1526 = vadd.f32 %v1525, 1.0
    %v1527 = vmul.f32 %v1488, %v1526
    %s1528 = scalar_lea.vmem [#allocation4], 1152
    %v1529 = vld [vmem:[%s1528] sm:$0xff]
    %v1530 = vld [vmem:[%s1528 + $0x8] sm:$0xff]
    %v1531 = vld [vmem:[%s1528 + $0x10] sm:$0xff]
    %v1532 = vld [vmem:[%s1528 + $0x18] sm:$0xff]
    %v1533 = vld [vmem:[%s1528 + $0x20] sm:$0xff]
    %v1534 = vld [vmem:[%s1528 + $0x28] sm:$0xff]
    %v1535 = vld [vmem:[%s1528 + $0x30] sm:$0xff]
    %v1536 = vld [vmem:[%s1528 + $0x38] sm:$0xff]
    %v1537 = vld [vmem:[%s1528 + $0x40] sm:$0xff]
    %v1538 = vld [vmem:[%s1528 + $0x48] sm:$0xff]
    %v1539 = vld [vmem:[%s1528 + $0x50] sm:$0xff]
    %v1540 = vld [vmem:[%s1528 + $0x58] sm:$0xff]
    %v1541 = vld [vmem:[%s1528 + $0x60] sm:$0xff]
    %v1542 = vld [vmem:[%s1528 + $0x68] sm:$0xff]
    %v1543 = vld [vmem:[%s1528 + $0x70] sm:$0xff]
    %v1544 = vld [vmem:[%s1528 + $0x78] sm:$0xff]
    %v1545 = vld [vmem:[#allocation2 + $0x1b] sm:$0x1]
    %v1546 = vperm.slane %v1545, 0
    %1547 = vmatpush.msra.mxu0 %v1544
    %1548 = vmatpush.msra.mxu0 %v1543
    %1549 = vmatpush.msra.mxu0 %v1542
    %1550 = vmatpush.msra.mxu0 %v1541
    %1551 = vmatpush.msra.mxu0 %v1540
    %1552 = vmatpush.msra.mxu0 %v1539
    %1553 = vmatpush.msra.mxu0 %v1538
    %1554 = vmatpush.msra.mxu0 %v1537
    %1555 = vmatpush.msra.mxu0 %v1536
    %1556 = vmatpush.msra.mxu0 %v1535
    %1557 = vmatpush.msra.mxu0 %v1534
    %1558 = vmatpush.msra.mxu0 %v1533
    %1559 = vmatpush.msra.mxu0 %v1532
    %1560 = vmatpush.msra.mxu0 %v1531
    %1561 = vmatpush.msra.mxu0 %v1530
    %1562 = vmatpush.msra.mxu0 %v1529
    %1563 = vmatmul.f32.gmra.mxu0 %v1527
    %v1564 = vpop.f32.mrf.mxu0
    %v1565 = vadd.f32 %v1546, %v1564
    %1566 = vdwg.mxu0
    %s1567 = scalar_lea.vmem [#allocation4], 1280
    %v1568 = vld [vmem:[%s1567] sm:$0xff]
    %v1569 = vld [vmem:[%s1567 + $0x8] sm:$0xff]
    %v1570 = vld [vmem:[%s1567 + $0x10] sm:$0xff]
    %v1571 = vld [vmem:[%s1567 + $0x18] sm:$0xff]
    %v1572 = vld [vmem:[%s1567 + $0x20] sm:$0xff]
    %v1573 = vld [vmem:[%s1567 + $0x28] sm:$0xff]
    %v1574 = vld [vmem:[%s1567 + $0x30] sm:$0xff]
    %v1575 = vld [vmem:[%s1567 + $0x38] sm:$0xff]
    %v1576 = vld [vmem:[%s1567 + $0x40] sm:$0xff]
    %v1577 = vld [vmem:[%s1567 + $0x48] sm:$0xff]
    %v1578 = vld [vmem:[%s1567 + $0x50] sm:$0xff]
    %v1579 = vld [vmem:[%s1567 + $0x58] sm:$0xff]
    %v1580 = vld [vmem:[%s1567 + $0x60] sm:$0xff]
    %v1581 = vld [vmem:[%s1567 + $0x68] sm:$0xff]
    %v1582 = vld [vmem:[%s1567 + $0x70] sm:$0xff]
    %v1583 = vld [vmem:[%s1567 + $0x78] sm:$0xff]
    %v1584 = vld [vmem:[#allocation2 + $0x1c] sm:$0x1]
    %v1585 = vperm.slane %v1584, 0
    %1586 = vmatpush.msra.mxu0 %v1583
    %1587 = vmatpush.msra.mxu0 %v1582
    %1588 = vmatpush.msra.mxu0 %v1581
    %1589 = vmatpush.msra.mxu0 %v1580
    %1590 = vmatpush.msra.mxu0 %v1579
    %1591 = vmatpush.msra.mxu0 %v1578
    %1592 = vmatpush.msra.mxu0 %v1577
    %1593 = vmatpush.msra.mxu0 %v1576
    %1594 = vmatpush.msra.mxu0 %v1575
    %1595 = vmatpush.msra.mxu0 %v1574
    %1596 = vmatpush.msra.mxu0 %v1573
    %1597 = vmatpush.msra.mxu0 %v1572
    %1598 = vmatpush.msra.mxu0 %v1571
    %1599 = vmatpush.msra.mxu0 %v1570
    %1600 = vmatpush.msra.mxu0 %v1569
    %1601 = vmatpush.msra.mxu0 %v1568
    %1602 = vmatmul.f32.gmra.mxu0 %v1565
    %v1603 = vpop.f32.mrf.mxu0
    %v1604 = vadd.f32 %v1585, %v1603
    %1605 = vdwg.mxu0
    %1606 = vst [vmem:[%s3] sm:$0xff] %v1343
    %s1607 = scalar_lea.vmem %s3, 8
    %1608 = vst [vmem:[%s1607] sm:$0xff] %v1565
    %s1609 = scalar_lea.vmem %s3, 16
    %1610 = vst [vmem:[%s1609] sm:$0xff] %v1604
    // Predicated region
    $region22: #{snn_forward.1} parent=1 // pred_check
      _
    $region23: #{snn_forward.1} parent=1 // pred_check_branch
      %1612 = sbr.rel (0) target = $region25
    $region24: #{snn_forward.1} parent=1 // pred_region
      _
    $region25: #{snn_forward.1} parent=1 // pred_fallthru
      _
    // Predicated region
    $region26: #{snn_forward.1} parent=1 // pred_check
      _
    $region27: #{snn_forward.1} parent=1 // pred_check_branch
      %1614 = sbr.rel (0) target = $region29
    $region28: #{snn_forward.1} parent=1 // pred_region
      _
    $region29: #{snn_forward.1} parent=1 // pred_fallthru
      _
    %1615 = vsyncpa [#allocation3], 1
    %1616 = vsyncpa [#allocation5], 1

</llo_original>
